<compile_context>
chip_gen: v7x
topology: tpu7x:2x2x1
jax: 0.10.0
libtpu: 0.0.40
codegen_flags: <defaults>
</compile_context>

<pallas_src>
import jax
import jax.numpy as jnp
from jax import lax
from jax.experimental import pallas as pl
from jax.experimental.pallas import tpu as pltpu

# --- scaled-down hyperparameters (original: vocab=len(chars), embed=384,
#     head=6, block=256, layer=6) ---
VOCAB = 65
VOCAB_PAD = 128      # lane-aligned padded vocab (zeros in the pad columns/rows)
EMBED = 32
HEAD = 4
HS = EMBED // HEAD
BLOCK = 16           # max context length (position table size)
LAYER = 2
LN_EPS = 1e-5        # torch nn.LayerNorm default


def _layernorm(x, w, b):
    mu = jnp.mean(x, axis=-1, keepdims=True)
    var = jnp.mean(jnp.square(x - mu), axis=-1, keepdims=True)
    return (x - mu) * lax.rsqrt(var + LN_EPS) * w + b


# ----------------------------- fused Pallas kernel -------------------------- #

def decoder_kernel(idx_ref, tok_ref, pos_ref,
                   ln1w_ref, ln1b_ref, wqkv_ref, wp_ref, bp_ref,
                   ln2w_ref, ln2b_ref, w1_ref, b1_ref, w2_ref, b2_ref,
                   lnfw_ref, lnfb_ref, lmw_ref, lmb_ref, o_ref):
    """Full forward for ONE sequence per grid point (grid axis = batch)."""
    f32 = jnp.float32
    bf16 = jnp.bfloat16
    T, E = pos_ref.shape
    L = ln1w_ref.shape[0]
    hs = E // HEAD
    scale = float(hs) ** -0.5

    # --- token embedding via one-hot MXU gather + position embedding ---
    idx_col = idx_ref[...]                                             # (T, 1) int32
    vocab_iota = lax.broadcasted_iota(jnp.int32, (T, tok_ref.shape[0]), 1)
    onehot = (vocab_iota == idx_col).astype(f32).astype(bf16)          # (T, Vpad)
    x = jnp.dot(onehot, tok_ref[...], preferred_element_type=f32)      # (T, E) f32
    x = x + pos_ref[...]                                               # residual in f32

    # --- hoisted causal mask (built once, reused every layer) ---
    r = lax.broadcasted_iota(jnp.int32, (T, T), 0)
    c = lax.broadcasted_iota(jnp.int32, (T, T), 1)
    mask = c <= r
    neg = jnp.float32(-1e30)

    for l in range(L):                                                 # static unroll
        # ---- multi-head causal self-attention on LN1(x) ----
        xn = _layernorm(x, ln1w_ref[l], ln1b_ref[l]).astype(bf16)
        qkv = jnp.dot(xn, wqkv_ref[l], preferred_element_type=f32)     # (T, 3E) f32
        wpl = wp_ref[l]                                                # (E, E) bf16

        proj = jnp.zeros((T, E), f32)
        for h in range(HEAD):                                          # static unroll
            base = 3 * h * hs
            slab = qkv[:, base:base + 3 * hs]                          # [q_h|k_h|v_h]
            qh = (slab[:, :hs] * scale).astype(bf16)                   # scale q, not scores
            kh = slab[:, hs:2 * hs].astype(bf16)
            vh = slab[:, 2 * hs:3 * hs].astype(bf16)
            wei = lax.dot_general(qh, kh, (((1,), (1,)), ((), ())),    # q @ k^T
                                  preferred_element_type=f32)          # (T, T) f32
            wei = jnp.where(mask, wei, neg)
            wei = wei - jnp.max(wei, axis=-1, keepdims=True)
            p = jnp.exp(wei)
            p = p * pl.reciprocal(jnp.sum(p, axis=-1, keepdims=True), approx=True)
            hout = jnp.dot(p.astype(bf16), vh, preferred_element_type=f32)  # (T, hs)
            # split-K accumulate into the output projection (no concat)
            proj = proj + jnp.dot(hout.astype(bf16), wpl[h * hs:(h + 1) * hs, :],
                                  preferred_element_type=f32)
        x = x + proj + bp_ref[l]

        # ---- feed-forward on LN2(x) ----
        xn2 = _layernorm(x, ln2w_ref[l], ln2b_ref[l]).astype(bf16)
        h1 = jnp.dot(xn2, w1_ref[l], preferred_element_type=f32) + b1_ref[l]
        h1 = jnp.maximum(h1, 0.0).astype(bf16)                         # ReLU
        x = x + jnp.dot(h1, w2_ref[l], preferred_element_type=f32) + b2_ref[l]

    # ---- final LayerNorm + LM head (lane-dense padded-vocab output) ----
    xn = _layernorm(x, lnfw_ref[0], lnfb_ref[0]).astype(bf16)
    o_ref[...] = (jnp.dot(xn, lmw_ref[...], preferred_element_type=f32)
                  + lmb_ref[0]).astype(o_ref.dtype)


# ------------------------------ wrapper ------------------------------------ #

def _rep_spec(shape):
    """Full-array block, same block for every batch grid point."""
    nd = len(shape)
    return pl.BlockSpec(shape, lambda b, _nd=nd: (0,) * _nd)


@jax.jit
def decoder_forward(idx, params):
    B, T = idx.shape
    idx3 = idx.reshape(B, T, 1).astype(jnp.int32)
    pos = params['pos_emb'][:T]                                        # (T, E) f32

    args = (idx3, params['tok_emb'], pos,
            params['ln1_w'], params['ln1_b'], params['wqkv'],
            params['wp'], params['bp'], params['ln2_w'], params['ln2_b'],
            params['w1'], params['b1'], params['w2'], params['b2'],
            params['lnf_w'], params['lnf_b'], params['lm_w'], params['lm_b'])

    in_specs = [pl.BlockSpec((None, T, 1), lambda b: (b, 0, 0))]       # idx (batch-split)
    in_specs += [_rep_spec(a.shape) for a in args[1:]]                 # weights replicated

    logits_pad = pl.pallas_call(
        decoder_kernel,
        out_shape=jax.ShapeDtypeStruct((B, T, VOCAB_PAD), jnp.float32),
        grid=(B,),
        in_specs=in_specs,
        out_specs=pl.BlockSpec((None, T, VOCAB_PAD), lambda b: (b, 0, 0)),
        compiler_params=pltpu.CompilerParams(
            dimension_semantics=("parallel",)),                        # 2 TCs on v7x
    )(*args)

    return logits_pad[:, :, :VOCAB]                                    # drop vocab pad


# --------------------------- parameter init --------------------------------- #

def init_params(key):
    keys = iter(jax.random.split(key, 16))
    bf16 = jnp.bfloat16

    def normal(shape):
        return (0.02 * jax.random.normal(next(keys), shape)).astype(jnp.float32)

    tok = jnp.zeros((VOCAB_PAD, EMBED), jnp.float32).at[:VOCAB].set(
        normal((VOCAB, EMBED)))
    lm_w = jnp.zeros((EMBED, VOCAB_PAD), jnp.float32).at[:, :VOCAB].set(
        normal((EMBED, VOCAB)))

    # head-major interleaved qkv: columns = [q_h | k_h | v_h] per head, contiguous
    wq = normal((LAYER, EMBED, HEAD, HS))
    wk = normal((LAYER, EMBED, HEAD, HS))
    wv = normal((LAYER, EMBED, HEAD, HS))
    wqkv = jnp.stack([wq, wk, wv], axis=3).reshape(LAYER, EMBED, 3 * EMBED)

    return {
        'tok_emb': tok.astype(bf16),                      # (Vpad, E), rows >= VOCAB zero
        'pos_emb': normal((BLOCK, EMBED)),                # (block, E) f32
        'ln1_w': jnp.ones((LAYER, EMBED), jnp.float32),
        'ln1_b': jnp.zeros((LAYER, EMBED), jnp.float32),
        'wqkv': wqkv.astype(bf16),                        # head-major layout, (in, out)
        'wp': normal((LAYER, EMBED, EMBED)).astype(bf16), # attn output proj, (in, out)
        'bp': jnp.zeros((LAYER, EMBED), jnp.float32),
        'ln2_w': jnp.ones((LAYER, EMBED), jnp.float32),
        'ln2_b': jnp.zeros((LAYER, EMBED), jnp.float32),
        'w1': normal((LAYER, EMBED, 4 * EMBED)).astype(bf16),
        'b1': jnp.zeros((LAYER, 4 * EMBED), jnp.float32),
        'w2': normal((LAYER, 4 * EMBED, EMBED)).astype(bf16),
        'b2': jnp.zeros((LAYER, EMBED), jnp.float32),
        'lnf_w': jnp.ones((1, EMBED), jnp.float32),
        'lnf_b': jnp.zeros((1, EMBED), jnp.float32),
        'lm_w': lm_w.astype(bf16),                        # (E, Vpad), pad cols zero
        'lm_b': jnp.zeros((1, VOCAB_PAD), jnp.float32),
    }


# ---------------------------- pure-JAX reference ---------------------------- #

def reference_forward(idx, params):
    f32 = jnp.float32
    B, T = idx.shape
    x = params['tok_emb'].astype(f32)[idx] + params['pos_emb'][:T]
    tril = jnp.tril(jnp.ones((T, T), bool))
    for l in range(LAYER):
        xn = _layernorm(x, params['ln1_w'][l], params['ln1_b'][l])
        w = params['wqkv'][l].astype(f32).reshape(EMBED, HEAD, 3, HS)
        q = jnp.einsum('bte,ehd->bhtd', xn, w[:, :, 0, :])
        k = jnp.einsum('bte,ehd->bhtd', xn, w[:, :, 1, :])
        v = jnp.einsum('bte,ehd->bhtd', xn, w[:, :, 2, :])
        wei = jnp.einsum('bhqd,bhkd->bhqk', q, k) * (HS ** -0.5)
        wei = jnp.where(tril, wei, -jnp.inf)
        wei = jax.nn.softmax(wei, axis=-1)
        out = jnp.einsum('bhqk,bhkd->bqhd', wei, v).reshape(B, T, EMBED)
        x = x + out @ params['wp'][l].astype(f32) + params['bp'][l]
        xn2 = _layernorm(x, params['ln2_w'][l], params['ln2_b'][l])
        ff = jnp.maximum(xn2 @ params['w1'][l].astype(f32) + params['b1'][l], 0.0)
        x = x + ff @ params['w2'][l].astype(f32) + params['b2'][l]
    xn = _layernorm(x, params['lnf_w'][0], params['lnf_b'][0])
    logits = xn @ params['lm_w'].astype(f32) + params['lm_b'][0]
    return logits[:, :, :VOCAB]


if __name__ == "__main__":
    key = jax.random.PRNGKey(0)
    pkey, ikey = jax.random.split(key)
    params = init_params(pkey)

    B, T = 2, 8
    idx = jax.random.randint(ikey, (B, T), 0, VOCAB, dtype=jnp.int32)

    logits = decoder_forward(idx, params)
    logits = jax.block_until_ready(logits)
    assert logits.shape == (B, T, VOCAB), logits.shape

    ref = reference_forward(idx, params)
    err = float(jnp.max(jnp.abs(logits - ref)))
    # bf16 matmul inputs (f32 accumulate) + approx reciprocal => loosened tolerance
    assert err < 2e-2, f"max abs err {err}"

    print("KERNEL_OK")
</pallas_src>

<mosaic_0001>
module attributes {stable_mosaic.version = 11 : i64} {
  func.func @decoder_kernel(%arg0: i32, %arg1: memref<1x8x1xi32, #tpu.memory_space<vmem>>, %arg2: memref<128x32xbf16, #tpu.memory_space<vmem>>, %arg3: memref<8x32xf32, #tpu.memory_space<vmem>>, %arg4: memref<2x32xf32, #tpu.memory_space<vmem>>, %arg5: memref<2x32xf32, #tpu.memory_space<vmem>>, %arg6: memref<2x32x96xbf16, #tpu.memory_space<vmem>>, %arg7: memref<2x32x32xbf16, #tpu.memory_space<vmem>>, %arg8: memref<2x32xf32, #tpu.memory_space<vmem>>, %arg9: memref<2x32xf32, #tpu.memory_space<vmem>>, %arg10: memref<2x32xf32, #tpu.memory_space<vmem>>, %arg11: memref<2x32x128xbf16, #tpu.memory_space<vmem>>, %arg12: memref<2x128xf32, #tpu.memory_space<vmem>>, %arg13: memref<2x128x32xbf16, #tpu.memory_space<vmem>>, %arg14: memref<2x32xf32, #tpu.memory_space<vmem>>, %arg15: memref<1x32xf32, #tpu.memory_space<vmem>>, %arg16: memref<1x32xf32, #tpu.memory_space<vmem>>, %arg17: memref<32x128xbf16, #tpu.memory_space<vmem>>, %arg18: memref<1x128xf32, #tpu.memory_space<vmem>>, %arg19: memref<1x8x128xf32, #tpu.memory_space<vmem>>) attributes {dimension_semantics = [#tpu.dimension_semantics<parallel>], iteration_bounds = array<i64: 2>, scalar_prefetch = 0 : i64, scratch_operands = 0 : i64, tpu.core_type = #tpu.core_type<tc>, window_params = [{transform_indices = @transform_0, window_bounds = array<i64: 1, 8, 1>}, {pipeline_mode = #tpu.pipeline_mode<synchronous>, transform_indices = @transform_1, window_bounds = array<i64: 128, 32>}, {pipeline_mode = #tpu.pipeline_mode<synchronous>, transform_indices = @transform_2, window_bounds = array<i64: 8, 32>}, {pipeline_mode = #tpu.pipeline_mode<synchronous>, transform_indices = @transform_3, window_bounds = array<i64: 2, 32>}, {pipeline_mode = #tpu.pipeline_mode<synchronous>, transform_indices = @transform_4, window_bounds = array<i64: 2, 32>}, {pipeline_mode = #tpu.pipeline_mode<synchronous>, transform_indices = @transform_5, window_bounds = array<i64: 2, 32, 96>}, {pipeline_mode = #tpu.pipeline_mode<synchronous>, transform_indices = @transform_6, window_bounds = array<i64: 2, 32, 32>}, {pipeline_mode = #tpu.pipeline_mode<synchronous>, transform_indices = @transform_7, window_bounds = array<i64: 2, 32>}, {pipeline_mode = #tpu.pipeline_mode<synchronous>, transform_indices = @transform_8, window_bounds = array<i64: 2, 32>}, {pipeline_mode = #tpu.pipeline_mode<synchronous>, transform_indices = @transform_9, window_bounds = array<i64: 2, 32>}, {pipeline_mode = #tpu.pipeline_mode<synchronous>, transform_indices = @transform_10, window_bounds = array<i64: 2, 32, 128>}, {pipeline_mode = #tpu.pipeline_mode<synchronous>, transform_indices = @transform_11, window_bounds = array<i64: 2, 128>}, {pipeline_mode = #tpu.pipeline_mode<synchronous>, transform_indices = @transform_12, window_bounds = array<i64: 2, 128, 32>}, {pipeline_mode = #tpu.pipeline_mode<synchronous>, transform_indices = @transform_13, window_bounds = array<i64: 2, 32>}, {pipeline_mode = #tpu.pipeline_mode<synchronous>, transform_indices = @transform_14, window_bounds = array<i64: 1, 32>}, {pipeline_mode = #tpu.pipeline_mode<synchronous>, transform_indices = @transform_15, window_bounds = array<i64: 1, 32>}, {pipeline_mode = #tpu.pipeline_mode<synchronous>, transform_indices = @transform_16, window_bounds = array<i64: 32, 128>}, {pipeline_mode = #tpu.pipeline_mode<synchronous>, transform_indices = @transform_17, window_bounds = array<i64: 1, 128>}, {transform_indices = @transform_18, window_bounds = array<i64: 1, 8, 128>}]} {
    %c0 = arith.constant 0 : index
    %c0_0 = arith.constant 0 : index
    %c0_1 = arith.constant 0 : index
    %0 = vector.load %arg1[%c0, %c0_0, %c0_1] : memref<1x8x1xi32, #tpu.memory_space<vmem>>, vector<1x8x1xi32>
    %1 = vector.shape_cast %0 : vector<1x8x1xi32> to vector<8x1xi32>
    %2 = tpu.iota {dimensions = array<i32: 1>} : vector<8x128xi32>
    %3 = vector.broadcast %1 : vector<8x1xi32> to vector<8x128xi32>
    %4 = arith.cmpi eq, %2, %3 : vector<8x128xi32>
    %5 = arith.extui %4 : vector<8x128xi1> to vector<8x128xi32>
    %6 = arith.sitofp %5 : vector<8x128xi32> to vector<8x128xf32>
    %7 = arith.truncf %6 : vector<8x128xf32> to vector<8x128xbf16>
    %c0_2 = arith.constant 0 : index
    %c0_3 = arith.constant 0 : index
    %8 = vector.load %arg2[%c0_2, %c0_3] : memref<128x32xbf16, #tpu.memory_space<vmem>>, vector<128x32xbf16>
    %cst = arith.constant dense<0.000000e+00> : vector<8x32xf32>
    %9 = tpu.matmul %7, %8, %cst {dimension_numbers = #tpu.dot_dimension_numbers<[1], [0], [0], [1], [0, 0, 1, 1], [], []>} : vector<8x128xbf16>, vector<128x32xbf16>, vector<8x32xf32> -> vector<8x32xf32>
    %c0_4 = arith.constant 0 : index
    %c0_5 = arith.constant 0 : index
    %10 = vector.load %arg3[%c0_4, %c0_5] : memref<8x32xf32, #tpu.memory_space<vmem>>, vector<8x32xf32>
    %11 = arith.addf %9, %10 : vector<8x32xf32>
    %12 = tpu.iota {dimensions = array<i32: 0>} : vector<8x8xi32>
    %13 = tpu.iota {dimensions = array<i32: 1>} : vector<8x8xi32>
    %14 = arith.cmpi sle, %13, %12 : vector<8x8xi32>
    %c0_6 = arith.constant 0 : index
    %c0_7 = arith.constant 0 : index
    %15 = vector.load %arg4[%c0_6, %c0_7] : memref<2x32xf32, #tpu.memory_space<vmem>>, vector<1x32xf32>
    %16 = vector.shape_cast %15 : vector<1x32xf32> to vector<32xf32>
    %c0_8 = arith.constant 0 : index
    %c0_9 = arith.constant 0 : index
    %17 = vector.load %arg5[%c0_8, %c0_9] : memref<2x32xf32, #tpu.memory_space<vmem>>, vector<1x32xf32>
    %18 = vector.shape_cast %17 : vector<1x32xf32> to vector<32xf32>
    %cst_10 = arith.constant dense<0.000000e+00> : vector<8xf32>
    %19 = vector.multi_reduction <add>, %11, %cst_10 [1] : vector<8x32xf32> to vector<8xf32>
    %20 = vector.shape_cast %19 : vector<8xf32> to vector<8x1xf32>
    %cst_11 = arith.constant 3.200000e+01 : f32
    %21 = vector.broadcast %cst_11 : f32 to vector<8x1xf32>
    %22 = arith.divf %20, %21 : vector<8x1xf32>
    %23 = vector.broadcast %22 : vector<8x1xf32> to vector<8x32xf32>
    %24 = arith.subf %11, %23 : vector<8x32xf32>
    %25 = arith.mulf %24, %24 : vector<8x32xf32>
    %cst_12 = arith.constant dense<0.000000e+00> : vector<8xf32>
    %26 = vector.multi_reduction <add>, %25, %cst_12 [1] : vector<8x32xf32> to vector<8xf32>
    %27 = vector.shape_cast %26 : vector<8xf32> to vector<8x1xf32>
    %cst_13 = arith.constant 3.200000e+01 : f32
    %28 = vector.broadcast %cst_13 : f32 to vector<8x1xf32>
    %29 = arith.divf %27, %28 : vector<8x1xf32>
    %30 = vector.broadcast %22 : vector<8x1xf32> to vector<8x32xf32>
    %31 = arith.subf %11, %30 : vector<8x32xf32>
    %cst_14 = arith.constant 9.99999974E-6 : f32
    %32 = vector.broadcast %cst_14 : f32 to vector<8x1xf32>
    %33 = arith.addf %29, %32 : vector<8x1xf32>
    %34 = math.rsqrt %33 : vector<8x1xf32>
    %35 = vector.broadcast %34 : vector<8x1xf32> to vector<8x32xf32>
    %36 = arith.mulf %31, %35 : vector<8x32xf32>
    %37 = vector.shape_cast %16 : vector<32xf32> to vector<1x32xf32>
    %38 = vector.broadcast %37 : vector<1x32xf32> to vector<8x32xf32>
    %39 = arith.mulf %36, %38 : vector<8x32xf32>
    %40 = vector.shape_cast %18 : vector<32xf32> to vector<1x32xf32>
    %41 = vector.broadcast %40 : vector<1x32xf32> to vector<8x32xf32>
    %42 = arith.addf %39, %41 : vector<8x32xf32>
    %43 = arith.truncf %42 : vector<8x32xf32> to vector<8x32xbf16>
    %c0_15 = arith.constant 0 : index
    %c0_16 = arith.constant 0 : index
    %c0_17 = arith.constant 0 : index
    %44 = vector.load %arg6[%c0_15, %c0_16, %c0_17] : memref<2x32x96xbf16, #tpu.memory_space<vmem>>, vector<1x32x96xbf16>
    %45 = vector.shape_cast %44 : vector<1x32x96xbf16> to vector<32x96xbf16>
    %cst_18 = arith.constant dense<0.000000e+00> : vector<8x96xf32>
    %46 = tpu.matmul %43, %45, %cst_18 {dimension_numbers = #tpu.dot_dimension_numbers<[1], [0], [0], [1], [0, 0, 1, 1], [], []>} : vector<8x32xbf16>, vector<32x96xbf16>, vector<8x96xf32> -> vector<8x96xf32>
    %c0_19 = arith.constant 0 : index
    %c0_20 = arith.constant 0 : index
    %c0_21 = arith.constant 0 : index
    %47 = vector.load %arg7[%c0_19, %c0_20, %c0_21] : memref<2x32x32xbf16, #tpu.memory_space<vmem>>, vector<1x32x32xbf16>
    %48 = vector.shape_cast %47 : vector<1x32x32xbf16> to vector<32x32xbf16>
    %cst_22 = arith.constant 0.000000e+00 : f32
    %49 = vector.broadcast %cst_22 : f32 to vector<8x32xf32>
    %50 = vector.extract_strided_slice %46 {offsets = [0, 0], sizes = [8, 24], strides = [1, 1]} : vector<8x96xf32> to vector<8x24xf32>
    %51 = vector.extract_strided_slice %50 {offsets = [0, 0], sizes = [8, 8], strides = [1, 1]} : vector<8x24xf32> to vector<8x8xf32>
    %cst_23 = arith.constant 0.353553385 : f32
    %52 = vector.broadcast %cst_23 : f32 to vector<8x8xf32>
    %53 = arith.mulf %51, %52 : vector<8x8xf32>
    %54 = arith.truncf %53 : vector<8x8xf32> to vector<8x8xbf16>
    %55 = vector.extract_strided_slice %50 {offsets = [0, 8], sizes = [8, 8], strides = [1, 1]} : vector<8x24xf32> to vector<8x8xf32>
    %56 = arith.truncf %55 : vector<8x8xf32> to vector<8x8xbf16>
    %57 = vector.extract_strided_slice %50 {offsets = [0, 16], sizes = [8, 8], strides = [1, 1]} : vector<8x24xf32> to vector<8x8xf32>
    %58 = arith.truncf %57 : vector<8x8xf32> to vector<8x8xbf16>
    %cst_24 = arith.constant dense<0.000000e+00> : vector<8x8xf32>
    %59 = tpu.matmul %54, %56, %cst_24 {dimension_numbers = #tpu.dot_dimension_numbers<[1], [1], [0], [0], [0, 0, 1, 0], [], []>} : vector<8x8xbf16>, vector<8x8xbf16>, vector<8x8xf32> -> vector<8x8xf32>
    %cst_25 = arith.constant -1.000000e+30 : f32
    %60 = vector.broadcast %cst_25 : f32 to vector<8x8xf32>
    %61 = arith.select %14, %59, %60 : vector<8x8xi1>, vector<8x8xf32>
    %cst_26 = arith.constant dense<0xFF800000> : vector<8xf32>
    %62 = vector.multi_reduction <maximumf>, %61, %cst_26 [1] : vector<8x8xf32> to vector<8xf32>
    %63 = vector.shape_cast %62 : vector<8xf32> to vector<8x1xf32>
    %64 = vector.broadcast %63 : vector<8x1xf32> to vector<8x8xf32>
    %65 = arith.subf %61, %64 : vector<8x8xf32>
    %66 = math.exp %65 : vector<8x8xf32>
    %cst_27 = arith.constant dense<0.000000e+00> : vector<8xf32>
    %67 = vector.multi_reduction <add>, %66, %cst_27 [1] : vector<8x8xf32> to vector<8xf32>
    %68 = vector.shape_cast %67 : vector<8xf32> to vector<8x1xf32>
    %69 = tpu.reciprocal %68 {approx = true} : vector<8x1xf32> -> vector<8x1xf32>
    %70 = vector.broadcast %69 : vector<8x1xf32> to vector<8x8xf32>
    %71 = arith.mulf %66, %70 : vector<8x8xf32>
    %72 = arith.truncf %71 : vector<8x8xf32> to vector<8x8xbf16>
    %cst_28 = arith.constant dense<0.000000e+00> : vector<8x8xf32>
    %73 = tpu.matmul %72, %58, %cst_28 {dimension_numbers = #tpu.dot_dimension_numbers<[1], [0], [0], [1], [0, 0, 1, 1], [], []>} : vector<8x8xbf16>, vector<8x8xbf16>, vector<8x8xf32> -> vector<8x8xf32>
    %74 = arith.truncf %73 : vector<8x8xf32> to vector<8x8xbf16>
    %75 = vector.extract_strided_slice %48 {offsets = [0, 0], sizes = [8, 32], strides = [1, 1]} : vector<32x32xbf16> to vector<8x32xbf16>
    %cst_29 = arith.constant dense<0.000000e+00> : vector<8x32xf32>
    %76 = tpu.matmul %74, %75, %cst_29 {dimension_numbers = #tpu.dot_dimension_numbers<[1], [0], [0], [1], [0, 0, 1, 1], [], []>} : vector<8x8xbf16>, vector<8x32xbf16>, vector<8x32xf32> -> vector<8x32xf32>
    %77 = arith.addf %49, %76 : vector<8x32xf32>
    %78 = vector.extract_strided_slice %46 {offsets = [0, 24], sizes = [8, 24], strides = [1, 1]} : vector<8x96xf32> to vector<8x24xf32>
    %79 = vector.extract_strided_slice %78 {offsets = [0, 0], sizes = [8, 8], strides = [1, 1]} : vector<8x24xf32> to vector<8x8xf32>
    %cst_30 = arith.constant 0.353553385 : f32
    %80 = vector.broadcast %cst_30 : f32 to vector<8x8xf32>
    %81 = arith.mulf %79, %80 : vector<8x8xf32>
    %82 = arith.truncf %81 : vector<8x8xf32> to vector<8x8xbf16>
    %83 = vector.extract_strided_slice %78 {offsets = [0, 8], sizes = [8, 8], strides = [1, 1]} : vector<8x24xf32> to vector<8x8xf32>
    %84 = arith.truncf %83 : vector<8x8xf32> to vector<8x8xbf16>
    %85 = vector.extract_strided_slice %78 {offsets = [0, 16], sizes = [8, 8], strides = [1, 1]} : vector<8x24xf32> to vector<8x8xf32>
    %86 = arith.truncf %85 : vector<8x8xf32> to vector<8x8xbf16>
    %cst_31 = arith.constant dense<0.000000e+00> : vector<8x8xf32>
    %87 = tpu.matmul %82, %84, %cst_31 {dimension_numbers = #tpu.dot_dimension_numbers<[1], [1], [0], [0], [0, 0, 1, 0], [], []>} : vector<8x8xbf16>, vector<8x8xbf16>, vector<8x8xf32> -> vector<8x8xf32>
    %cst_32 = arith.constant -1.000000e+30 : f32
    %88 = vector.broadcast %cst_32 : f32 to vector<8x8xf32>
    %89 = arith.select %14, %87, %88 : vector<8x8xi1>, vector<8x8xf32>
    %cst_33 = arith.constant dense<0xFF800000> : vector<8xf32>
    %90 = vector.multi_reduction <maximumf>, %89, %cst_33 [1] : vector<8x8xf32> to vector<8xf32>
    %91 = vector.shape_cast %90 : vector<8xf32> to vector<8x1xf32>
    %92 = vector.broadcast %91 : vector<8x1xf32> to vector<8x8xf32>
    %93 = arith.subf %89, %92 : vector<8x8xf32>
    %94 = math.exp %93 : vector<8x8xf32>
    %cst_34 = arith.constant dense<0.000000e+00> : vector<8xf32>
    %95 = vector.multi_reduction <add>, %94, %cst_34 [1] : vector<8x8xf32> to vector<8xf32>
    %96 = vector.shape_cast %95 : vector<8xf32> to vector<8x1xf32>
    %97 = tpu.reciprocal %96 {approx = true} : vector<8x1xf32> -> vector<8x1xf32>
    %98 = vector.broadcast %97 : vector<8x1xf32> to vector<8x8xf32>
    %99 = arith.mulf %94, %98 : vector<8x8xf32>
    %100 = arith.truncf %99 : vector<8x8xf32> to vector<8x8xbf16>
    %cst_35 = arith.constant dense<0.000000e+00> : vector<8x8xf32>
    %101 = tpu.matmul %100, %86, %cst_35 {dimension_numbers = #tpu.dot_dimension_numbers<[1], [0], [0], [1], [0, 0, 1, 1], [], []>} : vector<8x8xbf16>, vector<8x8xbf16>, vector<8x8xf32> -> vector<8x8xf32>
    %102 = arith.truncf %101 : vector<8x8xf32> to vector<8x8xbf16>
    %103 = vector.extract_strided_slice %48 {offsets = [8, 0], sizes = [8, 32], strides = [1, 1]} : vector<32x32xbf16> to vector<8x32xbf16>
    %cst_36 = arith.constant dense<0.000000e+00> : vector<8x32xf32>
    %104 = tpu.matmul %102, %103, %cst_36 {dimension_numbers = #tpu.dot_dimension_numbers<[1], [0], [0], [1], [0, 0, 1, 1], [], []>} : vector<8x8xbf16>, vector<8x32xbf16>, vector<8x32xf32> -> vector<8x32xf32>
    %105 = arith.addf %77, %104 : vector<8x32xf32>
    %106 = vector.extract_strided_slice %46 {offsets = [0, 48], sizes = [8, 24], strides = [1, 1]} : vector<8x96xf32> to vector<8x24xf32>
    %107 = vector.extract_strided_slice %106 {offsets = [0, 0], sizes = [8, 8], strides = [1, 1]} : vector<8x24xf32> to vector<8x8xf32>
    %cst_37 = arith.constant 0.353553385 : f32
    %108 = vector.broadcast %cst_37 : f32 to vector<8x8xf32>
    %109 = arith.mulf %107, %108 : vector<8x8xf32>
    %110 = arith.truncf %109 : vector<8x8xf32> to vector<8x8xbf16>
    %111 = vector.extract_strided_slice %106 {offsets = [0, 8], sizes = [8, 8], strides = [1, 1]} : vector<8x24xf32> to vector<8x8xf32>
    %112 = arith.truncf %111 : vector<8x8xf32> to vector<8x8xbf16>
    %113 = vector.extract_strided_slice %106 {offsets = [0, 16], sizes = [8, 8], strides = [1, 1]} : vector<8x24xf32> to vector<8x8xf32>
    %114 = arith.truncf %113 : vector<8x8xf32> to vector<8x8xbf16>
    %cst_38 = arith.constant dense<0.000000e+00> : vector<8x8xf32>
    %115 = tpu.matmul %110, %112, %cst_38 {dimension_numbers = #tpu.dot_dimension_numbers<[1], [1], [0], [0], [0, 0, 1, 0], [], []>} : vector<8x8xbf16>, vector<8x8xbf16>, vector<8x8xf32> -> vector<8x8xf32>
    %cst_39 = arith.constant -1.000000e+30 : f32
    %116 = vector.broadcast %cst_39 : f32 to vector<8x8xf32>
    %117 = arith.select %14, %115, %116 : vector<8x8xi1>, vector<8x8xf32>
    %cst_40 = arith.constant dense<0xFF800000> : vector<8xf32>
    %118 = vector.multi_reduction <maximumf>, %117, %cst_40 [1] : vector<8x8xf32> to vector<8xf32>
    %119 = vector.shape_cast %118 : vector<8xf32> to vector<8x1xf32>
    %120 = vector.broadcast %119 : vector<8x1xf32> to vector<8x8xf32>
    %121 = arith.subf %117, %120 : vector<8x8xf32>
    %122 = math.exp %121 : vector<8x8xf32>
    %cst_41 = arith.constant dense<0.000000e+00> : vector<8xf32>
    %123 = vector.multi_reduction <add>, %122, %cst_41 [1] : vector<8x8xf32> to vector<8xf32>
    %124 = vector.shape_cast %123 : vector<8xf32> to vector<8x1xf32>
    %125 = tpu.reciprocal %124 {approx = true} : vector<8x1xf32> -> vector<8x1xf32>
    %126 = vector.broadcast %125 : vector<8x1xf32> to vector<8x8xf32>
    %127 = arith.mulf %122, %126 : vector<8x8xf32>
    %128 = arith.truncf %127 : vector<8x8xf32> to vector<8x8xbf16>
    %cst_42 = arith.constant dense<0.000000e+00> : vector<8x8xf32>
    %129 = tpu.matmul %128, %114, %cst_42 {dimension_numbers = #tpu.dot_dimension_numbers<[1], [0], [0], [1], [0, 0, 1, 1], [], []>} : vector<8x8xbf16>, vector<8x8xbf16>, vector<8x8xf32> -> vector<8x8xf32>
    %130 = arith.truncf %129 : vector<8x8xf32> to vector<8x8xbf16>
    %131 = vector.extract_strided_slice %48 {offsets = [16, 0], sizes = [8, 32], strides = [1, 1]} : vector<32x32xbf16> to vector<8x32xbf16>
    %cst_43 = arith.constant dense<0.000000e+00> : vector<8x32xf32>
    %132 = tpu.matmul %130, %131, %cst_43 {dimension_numbers = #tpu.dot_dimension_numbers<[1], [0], [0], [1], [0, 0, 1, 1], [], []>} : vector<8x8xbf16>, vector<8x32xbf16>, vector<8x32xf32> -> vector<8x32xf32>
    %133 = arith.addf %105, %132 : vector<8x32xf32>
    %134 = vector.extract_strided_slice %46 {offsets = [0, 72], sizes = [8, 24], strides = [1, 1]} : vector<8x96xf32> to vector<8x24xf32>
    %135 = vector.extract_strided_slice %134 {offsets = [0, 0], sizes = [8, 8], strides = [1, 1]} : vector<8x24xf32> to vector<8x8xf32>
    %cst_44 = arith.constant 0.353553385 : f32
    %136 = vector.broadcast %cst_44 : f32 to vector<8x8xf32>
    %137 = arith.mulf %135, %136 : vector<8x8xf32>
    %138 = arith.truncf %137 : vector<8x8xf32> to vector<8x8xbf16>
    %139 = vector.extract_strided_slice %134 {offsets = [0, 8], sizes = [8, 8], strides = [1, 1]} : vector<8x24xf32> to vector<8x8xf32>
    %140 = arith.truncf %139 : vector<8x8xf32> to vector<8x8xbf16>
    %141 = vector.extract_strided_slice %134 {offsets = [0, 16], sizes = [8, 8], strides = [1, 1]} : vector<8x24xf32> to vector<8x8xf32>
    %142 = arith.truncf %141 : vector<8x8xf32> to vector<8x8xbf16>
    %cst_45 = arith.constant dense<0.000000e+00> : vector<8x8xf32>
    %143 = tpu.matmul %138, %140, %cst_45 {dimension_numbers = #tpu.dot_dimension_numbers<[1], [1], [0], [0], [0, 0, 1, 0], [], []>} : vector<8x8xbf16>, vector<8x8xbf16>, vector<8x8xf32> -> vector<8x8xf32>
    %cst_46 = arith.constant -1.000000e+30 : f32
    %144 = vector.broadcast %cst_46 : f32 to vector<8x8xf32>
    %145 = arith.select %14, %143, %144 : vector<8x8xi1>, vector<8x8xf32>
    %cst_47 = arith.constant dense<0xFF800000> : vector<8xf32>
    %146 = vector.multi_reduction <maximumf>, %145, %cst_47 [1] : vector<8x8xf32> to vector<8xf32>
    %147 = vector.shape_cast %146 : vector<8xf32> to vector<8x1xf32>
    %148 = vector.broadcast %147 : vector<8x1xf32> to vector<8x8xf32>
    %149 = arith.subf %145, %148 : vector<8x8xf32>
    %150 = math.exp %149 : vector<8x8xf32>
    %cst_48 = arith.constant dense<0.000000e+00> : vector<8xf32>
    %151 = vector.multi_reduction <add>, %150, %cst_48 [1] : vector<8x8xf32> to vector<8xf32>
    %152 = vector.shape_cast %151 : vector<8xf32> to vector<8x1xf32>
    %153 = tpu.reciprocal %152 {approx = true} : vector<8x1xf32> -> vector<8x1xf32>
    %154 = vector.broadcast %153 : vector<8x1xf32> to vector<8x8xf32>
    %155 = arith.mulf %150, %154 : vector<8x8xf32>
    %156 = arith.truncf %155 : vector<8x8xf32> to vector<8x8xbf16>
    %cst_49 = arith.constant dense<0.000000e+00> : vector<8x8xf32>
    %157 = tpu.matmul %156, %142, %cst_49 {dimension_numbers = #tpu.dot_dimension_numbers<[1], [0], [0], [1], [0, 0, 1, 1], [], []>} : vector<8x8xbf16>, vector<8x8xbf16>, vector<8x8xf32> -> vector<8x8xf32>
    %158 = arith.truncf %157 : vector<8x8xf32> to vector<8x8xbf16>
    %159 = vector.extract_strided_slice %48 {offsets = [24, 0], sizes = [8, 32], strides = [1, 1]} : vector<32x32xbf16> to vector<8x32xbf16>
    %cst_50 = arith.constant dense<0.000000e+00> : vector<8x32xf32>
    %160 = tpu.matmul %158, %159, %cst_50 {dimension_numbers = #tpu.dot_dimension_numbers<[1], [0], [0], [1], [0, 0, 1, 1], [], []>} : vector<8x8xbf16>, vector<8x32xbf16>, vector<8x32xf32> -> vector<8x32xf32>
    %161 = arith.addf %133, %160 : vector<8x32xf32>
    %162 = arith.addf %11, %161 : vector<8x32xf32>
    %c0_51 = arith.constant 0 : index
    %c0_52 = arith.constant 0 : index
    %163 = vector.load %arg8[%c0_51, %c0_52] : memref<2x32xf32, #tpu.memory_space<vmem>>, vector<1x32xf32>
    %164 = vector.shape_cast %163 : vector<1x32xf32> to vector<32xf32>
    %165 = vector.shape_cast %164 : vector<32xf32> to vector<1x32xf32>
    %166 = vector.broadcast %165 : vector<1x32xf32> to vector<8x32xf32>
    %167 = arith.addf %162, %166 : vector<8x32xf32>
    %c0_53 = arith.constant 0 : index
    %c0_54 = arith.constant 0 : index
    %168 = vector.load %arg9[%c0_53, %c0_54] : memref<2x32xf32, #tpu.memory_space<vmem>>, vector<1x32xf32>
    %169 = vector.shape_cast %168 : vector<1x32xf32> to vector<32xf32>
    %c0_55 = arith.constant 0 : index
    %c0_56 = arith.constant 0 : index
    %170 = vector.load %arg10[%c0_55, %c0_56] : memref<2x32xf32, #tpu.memory_space<vmem>>, vector<1x32xf32>
    %171 = vector.shape_cast %170 : vector<1x32xf32> to vector<32xf32>
    %cst_57 = arith.constant dense<0.000000e+00> : vector<8xf32>
    %172 = vector.multi_reduction <add>, %167, %cst_57 [1] : vector<8x32xf32> to vector<8xf32>
    %173 = vector.shape_cast %172 : vector<8xf32> to vector<8x1xf32>
    %cst_58 = arith.constant 3.200000e+01 : f32
    %174 = vector.broadcast %cst_58 : f32 to vector<8x1xf32>
    %175 = arith.divf %173, %174 : vector<8x1xf32>
    %176 = vector.broadcast %175 : vector<8x1xf32> to vector<8x32xf32>
    %177 = arith.subf %167, %176 : vector<8x32xf32>
    %178 = arith.mulf %177, %177 : vector<8x32xf32>
    %cst_59 = arith.constant dense<0.000000e+00> : vector<8xf32>
    %179 = vector.multi_reduction <add>, %178, %cst_59 [1] : vector<8x32xf32> to vector<8xf32>
    %180 = vector.shape_cast %179 : vector<8xf32> to vector<8x1xf32>
    %cst_60 = arith.constant 3.200000e+01 : f32
    %181 = vector.broadcast %cst_60 : f32 to vector<8x1xf32>
    %182 = arith.divf %180, %181 : vector<8x1xf32>
    %183 = vector.broadcast %175 : vector<8x1xf32> to vector<8x32xf32>
    %184 = arith.subf %167, %183 : vector<8x32xf32>
    %cst_61 = arith.constant 9.99999974E-6 : f32
    %185 = vector.broadcast %cst_61 : f32 to vector<8x1xf32>
    %186 = arith.addf %182, %185 : vector<8x1xf32>
    %187 = math.rsqrt %186 : vector<8x1xf32>
    %188 = vector.broadcast %187 : vector<8x1xf32> to vector<8x32xf32>
    %189 = arith.mulf %184, %188 : vector<8x32xf32>
    %190 = vector.shape_cast %169 : vector<32xf32> to vector<1x32xf32>
    %191 = vector.broadcast %190 : vector<1x32xf32> to vector<8x32xf32>
    %192 = arith.mulf %189, %191 : vector<8x32xf32>
    %193 = vector.shape_cast %171 : vector<32xf32> to vector<1x32xf32>
    %194 = vector.broadcast %193 : vector<1x32xf32> to vector<8x32xf32>
    %195 = arith.addf %192, %194 : vector<8x32xf32>
    %196 = arith.truncf %195 : vector<8x32xf32> to vector<8x32xbf16>
    %c0_62 = arith.constant 0 : index
    %c0_63 = arith.constant 0 : index
    %c0_64 = arith.constant 0 : index
    %197 = vector.load %arg11[%c0_62, %c0_63, %c0_64] : memref<2x32x128xbf16, #tpu.memory_space<vmem>>, vector<1x32x128xbf16>
    %198 = vector.shape_cast %197 : vector<1x32x128xbf16> to vector<32x128xbf16>
    %cst_65 = arith.constant dense<0.000000e+00> : vector<8x128xf32>
    %199 = tpu.matmul %196, %198, %cst_65 {dimension_numbers = #tpu.dot_dimension_numbers<[1], [0], [0], [1], [0, 0, 1, 1], [], []>} : vector<8x32xbf16>, vector<32x128xbf16>, vector<8x128xf32> -> vector<8x128xf32>
    %c0_66 = arith.constant 0 : index
    %c0_67 = arith.constant 0 : index
    %200 = vector.load %arg12[%c0_66, %c0_67] : memref<2x128xf32, #tpu.memory_space<vmem>>, vector<1x128xf32>
    %201 = vector.shape_cast %200 : vector<1x128xf32> to vector<128xf32>
    %202 = vector.shape_cast %201 : vector<128xf32> to vector<1x128xf32>
    %203 = vector.broadcast %202 : vector<1x128xf32> to vector<8x128xf32>
    %204 = arith.addf %199, %203 : vector<8x128xf32>
    %cst_68 = arith.constant 0.000000e+00 : f32
    %205 = vector.broadcast %cst_68 : f32 to vector<8x128xf32>
    %206 = arith.maximumf %204, %205 : vector<8x128xf32>
    %207 = arith.truncf %206 : vector<8x128xf32> to vector<8x128xbf16>
    %c0_69 = arith.constant 0 : index
    %c0_70 = arith.constant 0 : index
    %c0_71 = arith.constant 0 : index
    %208 = vector.load %arg13[%c0_69, %c0_70, %c0_71] : memref<2x128x32xbf16, #tpu.memory_space<vmem>>, vector<1x128x32xbf16>
    %209 = vector.shape_cast %208 : vector<1x128x32xbf16> to vector<128x32xbf16>
    %cst_72 = arith.constant dense<0.000000e+00> : vector<8x32xf32>
    %210 = tpu.matmul %207, %209, %cst_72 {dimension_numbers = #tpu.dot_dimension_numbers<[1], [0], [0], [1], [0, 0, 1, 1], [], []>} : vector<8x128xbf16>, vector<128x32xbf16>, vector<8x32xf32> -> vector<8x32xf32>
    %211 = arith.addf %167, %210 : vector<8x32xf32>
    %c0_73 = arith.constant 0 : index
    %c0_74 = arith.constant 0 : index
    %212 = vector.load %arg14[%c0_73, %c0_74] : memref<2x32xf32, #tpu.memory_space<vmem>>, vector<1x32xf32>
    %213 = vector.shape_cast %212 : vector<1x32xf32> to vector<32xf32>
    %214 = vector.shape_cast %213 : vector<32xf32> to vector<1x32xf32>
    %215 = vector.broadcast %214 : vector<1x32xf32> to vector<8x32xf32>
    %216 = arith.addf %211, %215 : vector<8x32xf32>
    %c1 = arith.constant 1 : index
    %c0_75 = arith.constant 0 : index
    %217 = vector.load %arg4[%c1, %c0_75] : memref<2x32xf32, #tpu.memory_space<vmem>>, vector<1x32xf32>
    %218 = vector.shape_cast %217 : vector<1x32xf32> to vector<32xf32>
    %c1_76 = arith.constant 1 : index
    %c0_77 = arith.constant 0 : index
    %219 = vector.load %arg5[%c1_76, %c0_77] : memref<2x32xf32, #tpu.memory_space<vmem>>, vector<1x32xf32>
    %220 = vector.shape_cast %219 : vector<1x32xf32> to vector<32xf32>
    %cst_78 = arith.constant dense<0.000000e+00> : vector<8xf32>
    %221 = vector.multi_reduction <add>, %216, %cst_78 [1] : vector<8x32xf32> to vector<8xf32>
    %222 = vector.shape_cast %221 : vector<8xf32> to vector<8x1xf32>
    %cst_79 = arith.constant 3.200000e+01 : f32
    %223 = vector.broadcast %cst_79 : f32 to vector<8x1xf32>
    %224 = arith.divf %222, %223 : vector<8x1xf32>
    %225 = vector.broadcast %224 : vector<8x1xf32> to vector<8x32xf32>
    %226 = arith.subf %216, %225 : vector<8x32xf32>
    %227 = arith.mulf %226, %226 : vector<8x32xf32>
    %cst_80 = arith.constant dense<0.000000e+00> : vector<8xf32>
    %228 = vector.multi_reduction <add>, %227, %cst_80 [1] : vector<8x32xf32> to vector<8xf32>
    %229 = vector.shape_cast %228 : vector<8xf32> to vector<8x1xf32>
    %cst_81 = arith.constant 3.200000e+01 : f32
    %230 = vector.broadcast %cst_81 : f32 to vector<8x1xf32>
    %231 = arith.divf %229, %230 : vector<8x1xf32>
    %232 = vector.broadcast %224 : vector<8x1xf32> to vector<8x32xf32>
    %233 = arith.subf %216, %232 : vector<8x32xf32>
    %cst_82 = arith.constant 9.99999974E-6 : f32
    %234 = vector.broadcast %cst_82 : f32 to vector<8x1xf32>
    %235 = arith.addf %231, %234 : vector<8x1xf32>
    %236 = math.rsqrt %235 : vector<8x1xf32>
    %237 = vector.broadcast %236 : vector<8x1xf32> to vector<8x32xf32>
    %238 = arith.mulf %233, %237 : vector<8x32xf32>
    %239 = vector.shape_cast %218 : vector<32xf32> to vector<1x32xf32>
    %240 = vector.broadcast %239 : vector<1x32xf32> to vector<8x32xf32>
    %241 = arith.mulf %238, %240 : vector<8x32xf32>
    %242 = vector.shape_cast %220 : vector<32xf32> to vector<1x32xf32>
    %243 = vector.broadcast %242 : vector<1x32xf32> to vector<8x32xf32>
    %244 = arith.addf %241, %243 : vector<8x32xf32>
    %245 = arith.truncf %244 : vector<8x32xf32> to vector<8x32xbf16>
    %c1_83 = arith.constant 1 : index
    %c0_84 = arith.constant 0 : index
    %c0_85 = arith.constant 0 : index
    %246 = vector.load %arg6[%c1_83, %c0_84, %c0_85] : memref<2x32x96xbf16, #tpu.memory_space<vmem>>, vector<1x32x96xbf16>
    %247 = vector.shape_cast %246 : vector<1x32x96xbf16> to vector<32x96xbf16>
    %cst_86 = arith.constant dense<0.000000e+00> : vector<8x96xf32>
    %248 = tpu.matmul %245, %247, %cst_86 {dimension_numbers = #tpu.dot_dimension_numbers<[1], [0], [0], [1], [0, 0, 1, 1], [], []>} : vector<8x32xbf16>, vector<32x96xbf16>, vector<8x96xf32> -> vector<8x96xf32>
    %c1_87 = arith.constant 1 : index
    %c0_88 = arith.constant 0 : index
    %c0_89 = arith.constant 0 : index
    %249 = vector.load %arg7[%c1_87, %c0_88, %c0_89] : memref<2x32x32xbf16, #tpu.memory_space<vmem>>, vector<1x32x32xbf16>
    %250 = vector.shape_cast %249 : vector<1x32x32xbf16> to vector<32x32xbf16>
    %cst_90 = arith.constant 0.000000e+00 : f32
    %251 = vector.broadcast %cst_90 : f32 to vector<8x32xf32>
    %252 = vector.extract_strided_slice %248 {offsets = [0, 0], sizes = [8, 24], strides = [1, 1]} : vector<8x96xf32> to vector<8x24xf32>
    %253 = vector.extract_strided_slice %252 {offsets = [0, 0], sizes = [8, 8], strides = [1, 1]} : vector<8x24xf32> to vector<8x8xf32>
    %cst_91 = arith.constant 0.353553385 : f32
    %254 = vector.broadcast %cst_91 : f32 to vector<8x8xf32>
    %255 = arith.mulf %253, %254 : vector<8x8xf32>
    %256 = arith.truncf %255 : vector<8x8xf32> to vector<8x8xbf16>
    %257 = vector.extract_strided_slice %252 {offsets = [0, 8], sizes = [8, 8], strides = [1, 1]} : vector<8x24xf32> to vector<8x8xf32>
    %258 = arith.truncf %257 : vector<8x8xf32> to vector<8x8xbf16>
    %259 = vector.extract_strided_slice %252 {offsets = [0, 16], sizes = [8, 8], strides = [1, 1]} : vector<8x24xf32> to vector<8x8xf32>
    %260 = arith.truncf %259 : vector<8x8xf32> to vector<8x8xbf16>
    %cst_92 = arith.constant dense<0.000000e+00> : vector<8x8xf32>
    %261 = tpu.matmul %256, %258, %cst_92 {dimension_numbers = #tpu.dot_dimension_numbers<[1], [1], [0], [0], [0, 0, 1, 0], [], []>} : vector<8x8xbf16>, vector<8x8xbf16>, vector<8x8xf32> -> vector<8x8xf32>
    %cst_93 = arith.constant -1.000000e+30 : f32
    %262 = vector.broadcast %cst_93 : f32 to vector<8x8xf32>
    %263 = arith.select %14, %261, %262 : vector<8x8xi1>, vector<8x8xf32>
    %cst_94 = arith.constant dense<0xFF800000> : vector<8xf32>
    %264 = vector.multi_reduction <maximumf>, %263, %cst_94 [1] : vector<8x8xf32> to vector<8xf32>
    %265 = vector.shape_cast %264 : vector<8xf32> to vector<8x1xf32>
    %266 = vector.broadcast %265 : vector<8x1xf32> to vector<8x8xf32>
    %267 = arith.subf %263, %266 : vector<8x8xf32>
    %268 = math.exp %267 : vector<8x8xf32>
    %cst_95 = arith.constant dense<0.000000e+00> : vector<8xf32>
    %269 = vector.multi_reduction <add>, %268, %cst_95 [1] : vector<8x8xf32> to vector<8xf32>
    %270 = vector.shape_cast %269 : vector<8xf32> to vector<8x1xf32>
    %271 = tpu.reciprocal %270 {approx = true} : vector<8x1xf32> -> vector<8x1xf32>
    %272 = vector.broadcast %271 : vector<8x1xf32> to vector<8x8xf32>
    %273 = arith.mulf %268, %272 : vector<8x8xf32>
    %274 = arith.truncf %273 : vector<8x8xf32> to vector<8x8xbf16>
    %cst_96 = arith.constant dense<0.000000e+00> : vector<8x8xf32>
    %275 = tpu.matmul %274, %260, %cst_96 {dimension_numbers = #tpu.dot_dimension_numbers<[1], [0], [0], [1], [0, 0, 1, 1], [], []>} : vector<8x8xbf16>, vector<8x8xbf16>, vector<8x8xf32> -> vector<8x8xf32>
    %276 = arith.truncf %275 : vector<8x8xf32> to vector<8x8xbf16>
    %277 = vector.extract_strided_slice %250 {offsets = [0, 0], sizes = [8, 32], strides = [1, 1]} : vector<32x32xbf16> to vector<8x32xbf16>
    %cst_97 = arith.constant dense<0.000000e+00> : vector<8x32xf32>
    %278 = tpu.matmul %276, %277, %cst_97 {dimension_numbers = #tpu.dot_dimension_numbers<[1], [0], [0], [1], [0, 0, 1, 1], [], []>} : vector<8x8xbf16>, vector<8x32xbf16>, vector<8x32xf32> -> vector<8x32xf32>
    %279 = arith.addf %251, %278 : vector<8x32xf32>
    %280 = vector.extract_strided_slice %248 {offsets = [0, 24], sizes = [8, 24], strides = [1, 1]} : vector<8x96xf32> to vector<8x24xf32>
    %281 = vector.extract_strided_slice %280 {offsets = [0, 0], sizes = [8, 8], strides = [1, 1]} : vector<8x24xf32> to vector<8x8xf32>
    %cst_98 = arith.constant 0.353553385 : f32
    %282 = vector.broadcast %cst_98 : f32 to vector<8x8xf32>
    %283 = arith.mulf %281, %282 : vector<8x8xf32>
    %284 = arith.truncf %283 : vector<8x8xf32> to vector<8x8xbf16>
    %285 = vector.extract_strided_slice %280 {offsets = [0, 8], sizes = [8, 8], strides = [1, 1]} : vector<8x24xf32> to vector<8x8xf32>
    %286 = arith.truncf %285 : vector<8x8xf32> to vector<8x8xbf16>
    %287 = vector.extract_strided_slice %280 {offsets = [0, 16], sizes = [8, 8], strides = [1, 1]} : vector<8x24xf32> to vector<8x8xf32>
    %288 = arith.truncf %287 : vector<8x8xf32> to vector<8x8xbf16>
    %cst_99 = arith.constant dense<0.000000e+00> : vector<8x8xf32>
    %289 = tpu.matmul %284, %286, %cst_99 {dimension_numbers = #tpu.dot_dimension_numbers<[1], [1], [0], [0], [0, 0, 1, 0], [], []>} : vector<8x8xbf16>, vector<8x8xbf16>, vector<8x8xf32> -> vector<8x8xf32>
    %cst_100 = arith.constant -1.000000e+30 : f32
    %290 = vector.broadcast %cst_100 : f32 to vector<8x8xf32>
    %291 = arith.select %14, %289, %290 : vector<8x8xi1>, vector<8x8xf32>
    %cst_101 = arith.constant dense<0xFF800000> : vector<8xf32>
    %292 = vector.multi_reduction <maximumf>, %291, %cst_101 [1] : vector<8x8xf32> to vector<8xf32>
    %293 = vector.shape_cast %292 : vector<8xf32> to vector<8x1xf32>
    %294 = vector.broadcast %293 : vector<8x1xf32> to vector<8x8xf32>
    %295 = arith.subf %291, %294 : vector<8x8xf32>
    %296 = math.exp %295 : vector<8x8xf32>
    %cst_102 = arith.constant dense<0.000000e+00> : vector<8xf32>
    %297 = vector.multi_reduction <add>, %296, %cst_102 [1] : vector<8x8xf32> to vector<8xf32>
    %298 = vector.shape_cast %297 : vector<8xf32> to vector<8x1xf32>
    %299 = tpu.reciprocal %298 {approx = true} : vector<8x1xf32> -> vector<8x1xf32>
    %300 = vector.broadcast %299 : vector<8x1xf32> to vector<8x8xf32>
    %301 = arith.mulf %296, %300 : vector<8x8xf32>
    %302 = arith.truncf %301 : vector<8x8xf32> to vector<8x8xbf16>
    %cst_103 = arith.constant dense<0.000000e+00> : vector<8x8xf32>
    %303 = tpu.matmul %302, %288, %cst_103 {dimension_numbers = #tpu.dot_dimension_numbers<[1], [0], [0], [1], [0, 0, 1, 1], [], []>} : vector<8x8xbf16>, vector<8x8xbf16>, vector<8x8xf32> -> vector<8x8xf32>
    %304 = arith.truncf %303 : vector<8x8xf32> to vector<8x8xbf16>
    %305 = vector.extract_strided_slice %250 {offsets = [8, 0], sizes = [8, 32], strides = [1, 1]} : vector<32x32xbf16> to vector<8x32xbf16>
    %cst_104 = arith.constant dense<0.000000e+00> : vector<8x32xf32>
    %306 = tpu.matmul %304, %305, %cst_104 {dimension_numbers = #tpu.dot_dimension_numbers<[1], [0], [0], [1], [0, 0, 1, 1], [], []>} : vector<8x8xbf16>, vector<8x32xbf16>, vector<8x32xf32> -> vector<8x32xf32>
    %307 = arith.addf %279, %306 : vector<8x32xf32>
    %308 = vector.extract_strided_slice %248 {offsets = [0, 48], sizes = [8, 24], strides = [1, 1]} : vector<8x96xf32> to vector<8x24xf32>
    %309 = vector.extract_strided_slice %308 {offsets = [0, 0], sizes = [8, 8], strides = [1, 1]} : vector<8x24xf32> to vector<8x8xf32>
    %cst_105 = arith.constant 0.353553385 : f32
    %310 = vector.broadcast %cst_105 : f32 to vector<8x8xf32>
    %311 = arith.mulf %309, %310 : vector<8x8xf32>
    %312 = arith.truncf %311 : vector<8x8xf32> to vector<8x8xbf16>
    %313 = vector.extract_strided_slice %308 {offsets = [0, 8], sizes = [8, 8], strides = [1, 1]} : vector<8x24xf32> to vector<8x8xf32>
    %314 = arith.truncf %313 : vector<8x8xf32> to vector<8x8xbf16>
    %315 = vector.extract_strided_slice %308 {offsets = [0, 16], sizes = [8, 8], strides = [1, 1]} : vector<8x24xf32> to vector<8x8xf32>
    %316 = arith.truncf %315 : vector<8x8xf32> to vector<8x8xbf16>
    %cst_106 = arith.constant dense<0.000000e+00> : vector<8x8xf32>
    %317 = tpu.matmul %312, %314, %cst_106 {dimension_numbers = #tpu.dot_dimension_numbers<[1], [1], [0], [0], [0, 0, 1, 0], [], []>} : vector<8x8xbf16>, vector<8x8xbf16>, vector<8x8xf32> -> vector<8x8xf32>
    %cst_107 = arith.constant -1.000000e+30 : f32
    %318 = vector.broadcast %cst_107 : f32 to vector<8x8xf32>
    %319 = arith.select %14, %317, %318 : vector<8x8xi1>, vector<8x8xf32>
    %cst_108 = arith.constant dense<0xFF800000> : vector<8xf32>
    %320 = vector.multi_reduction <maximumf>, %319, %cst_108 [1] : vector<8x8xf32> to vector<8xf32>
    %321 = vector.shape_cast %320 : vector<8xf32> to vector<8x1xf32>
    %322 = vector.broadcast %321 : vector<8x1xf32> to vector<8x8xf32>
    %323 = arith.subf %319, %322 : vector<8x8xf32>
    %324 = math.exp %323 : vector<8x8xf32>
    %cst_109 = arith.constant dense<0.000000e+00> : vector<8xf32>
    %325 = vector.multi_reduction <add>, %324, %cst_109 [1] : vector<8x8xf32> to vector<8xf32>
    %326 = vector.shape_cast %325 : vector<8xf32> to vector<8x1xf32>
    %327 = tpu.reciprocal %326 {approx = true} : vector<8x1xf32> -> vector<8x1xf32>
    %328 = vector.broadcast %327 : vector<8x1xf32> to vector<8x8xf32>
    %329 = arith.mulf %324, %328 : vector<8x8xf32>
    %330 = arith.truncf %329 : vector<8x8xf32> to vector<8x8xbf16>
    %cst_110 = arith.constant dense<0.000000e+00> : vector<8x8xf32>
    %331 = tpu.matmul %330, %316, %cst_110 {dimension_numbers = #tpu.dot_dimension_numbers<[1], [0], [0], [1], [0, 0, 1, 1], [], []>} : vector<8x8xbf16>, vector<8x8xbf16>, vector<8x8xf32> -> vector<8x8xf32>
    %332 = arith.truncf %331 : vector<8x8xf32> to vector<8x8xbf16>
    %333 = vector.extract_strided_slice %250 {offsets = [16, 0], sizes = [8, 32], strides = [1, 1]} : vector<32x32xbf16> to vector<8x32xbf16>
    %cst_111 = arith.constant dense<0.000000e+00> : vector<8x32xf32>
    %334 = tpu.matmul %332, %333, %cst_111 {dimension_numbers = #tpu.dot_dimension_numbers<[1], [0], [0], [1], [0, 0, 1, 1], [], []>} : vector<8x8xbf16>, vector<8x32xbf16>, vector<8x32xf32> -> vector<8x32xf32>
    %335 = arith.addf %307, %334 : vector<8x32xf32>
    %336 = vector.extract_strided_slice %248 {offsets = [0, 72], sizes = [8, 24], strides = [1, 1]} : vector<8x96xf32> to vector<8x24xf32>
    %337 = vector.extract_strided_slice %336 {offsets = [0, 0], sizes = [8, 8], strides = [1, 1]} : vector<8x24xf32> to vector<8x8xf32>
    %cst_112 = arith.constant 0.353553385 : f32
    %338 = vector.broadcast %cst_112 : f32 to vector<8x8xf32>
    %339 = arith.mulf %337, %338 : vector<8x8xf32>
    %340 = arith.truncf %339 : vector<8x8xf32> to vector<8x8xbf16>
    %341 = vector.extract_strided_slice %336 {offsets = [0, 8], sizes = [8, 8], strides = [1, 1]} : vector<8x24xf32> to vector<8x8xf32>
    %342 = arith.truncf %341 : vector<8x8xf32> to vector<8x8xbf16>
    %343 = vector.extract_strided_slice %336 {offsets = [0, 16], sizes = [8, 8], strides = [1, 1]} : vector<8x24xf32> to vector<8x8xf32>
    %344 = arith.truncf %343 : vector<8x8xf32> to vector<8x8xbf16>
    %cst_113 = arith.constant dense<0.000000e+00> : vector<8x8xf32>
    %345 = tpu.matmul %340, %342, %cst_113 {dimension_numbers = #tpu.dot_dimension_numbers<[1], [1], [0], [0], [0, 0, 1, 0], [], []>} : vector<8x8xbf16>, vector<8x8xbf16>, vector<8x8xf32> -> vector<8x8xf32>
    %cst_114 = arith.constant -1.000000e+30 : f32
    %346 = vector.broadcast %cst_114 : f32 to vector<8x8xf32>
    %347 = arith.select %14, %345, %346 : vector<8x8xi1>, vector<8x8xf32>
    %cst_115 = arith.constant dense<0xFF800000> : vector<8xf32>
    %348 = vector.multi_reduction <maximumf>, %347, %cst_115 [1] : vector<8x8xf32> to vector<8xf32>
    %349 = vector.shape_cast %348 : vector<8xf32> to vector<8x1xf32>
    %350 = vector.broadcast %349 : vector<8x1xf32> to vector<8x8xf32>
    %351 = arith.subf %347, %350 : vector<8x8xf32>
    %352 = math.exp %351 : vector<8x8xf32>
    %cst_116 = arith.constant dense<0.000000e+00> : vector<8xf32>
    %353 = vector.multi_reduction <add>, %352, %cst_116 [1] : vector<8x8xf32> to vector<8xf32>
    %354 = vector.shape_cast %353 : vector<8xf32> to vector<8x1xf32>
    %355 = tpu.reciprocal %354 {approx = true} : vector<8x1xf32> -> vector<8x1xf32>
    %356 = vector.broadcast %355 : vector<8x1xf32> to vector<8x8xf32>
    %357 = arith.mulf %352, %356 : vector<8x8xf32>
    %358 = arith.truncf %357 : vector<8x8xf32> to vector<8x8xbf16>
    %cst_117 = arith.constant dense<0.000000e+00> : vector<8x8xf32>
    %359 = tpu.matmul %358, %344, %cst_117 {dimension_numbers = #tpu.dot_dimension_numbers<[1], [0], [0], [1], [0, 0, 1, 1], [], []>} : vector<8x8xbf16>, vector<8x8xbf16>, vector<8x8xf32> -> vector<8x8xf32>
    %360 = arith.truncf %359 : vector<8x8xf32> to vector<8x8xbf16>
    %361 = vector.extract_strided_slice %250 {offsets = [24, 0], sizes = [8, 32], strides = [1, 1]} : vector<32x32xbf16> to vector<8x32xbf16>
    %cst_118 = arith.constant dense<0.000000e+00> : vector<8x32xf32>
    %362 = tpu.matmul %360, %361, %cst_118 {dimension_numbers = #tpu.dot_dimension_numbers<[1], [0], [0], [1], [0, 0, 1, 1], [], []>} : vector<8x8xbf16>, vector<8x32xbf16>, vector<8x32xf32> -> vector<8x32xf32>
    %363 = arith.addf %335, %362 : vector<8x32xf32>
    %364 = arith.addf %216, %363 : vector<8x32xf32>
    %c1_119 = arith.constant 1 : index
    %c0_120 = arith.constant 0 : index
    %365 = vector.load %arg8[%c1_119, %c0_120] : memref<2x32xf32, #tpu.memory_space<vmem>>, vector<1x32xf32>
    %366 = vector.shape_cast %365 : vector<1x32xf32> to vector<32xf32>
    %367 = vector.shape_cast %366 : vector<32xf32> to vector<1x32xf32>
    %368 = vector.broadcast %367 : vector<1x32xf32> to vector<8x32xf32>
    %369 = arith.addf %364, %368 : vector<8x32xf32>
    %c1_121 = arith.constant 1 : index
    %c0_122 = arith.constant 0 : index
    %370 = vector.load %arg9[%c1_121, %c0_122] : memref<2x32xf32, #tpu.memory_space<vmem>>, vector<1x32xf32>
    %371 = vector.shape_cast %370 : vector<1x32xf32> to vector<32xf32>
    %c1_123 = arith.constant 1 : index
    %c0_124 = arith.constant 0 : index
    %372 = vector.load %arg10[%c1_123, %c0_124] : memref<2x32xf32, #tpu.memory_space<vmem>>, vector<1x32xf32>
    %373 = vector.shape_cast %372 : vector<1x32xf32> to vector<32xf32>
    %cst_125 = arith.constant dense<0.000000e+00> : vector<8xf32>
    %374 = vector.multi_reduction <add>, %369, %cst_125 [1] : vector<8x32xf32> to vector<8xf32>
    %375 = vector.shape_cast %374 : vector<8xf32> to vector<8x1xf32>
    %cst_126 = arith.constant 3.200000e+01 : f32
    %376 = vector.broadcast %cst_126 : f32 to vector<8x1xf32>
    %377 = arith.divf %375, %376 : vector<8x1xf32>
    %378 = vector.broadcast %377 : vector<8x1xf32> to vector<8x32xf32>
    %379 = arith.subf %369, %378 : vector<8x32xf32>
    %380 = arith.mulf %379, %379 : vector<8x32xf32>
    %cst_127 = arith.constant dense<0.000000e+00> : vector<8xf32>
    %381 = vector.multi_reduction <add>, %380, %cst_127 [1] : vector<8x32xf32> to vector<8xf32>
    %382 = vector.shape_cast %381 : vector<8xf32> to vector<8x1xf32>
    %cst_128 = arith.constant 3.200000e+01 : f32
    %383 = vector.broadcast %cst_128 : f32 to vector<8x1xf32>
    %384 = arith.divf %382, %383 : vector<8x1xf32>
    %385 = vector.broadcast %377 : vector<8x1xf32> to vector<8x32xf32>
    %386 = arith.subf %369, %385 : vector<8x32xf32>
    %cst_129 = arith.constant 9.99999974E-6 : f32
    %387 = vector.broadcast %cst_129 : f32 to vector<8x1xf32>
    %388 = arith.addf %384, %387 : vector<8x1xf32>
    %389 = math.rsqrt %388 : vector<8x1xf32>
    %390 = vector.broadcast %389 : vector<8x1xf32> to vector<8x32xf32>
    %391 = arith.mulf %386, %390 : vector<8x32xf32>
    %392 = vector.shape_cast %371 : vector<32xf32> to vector<1x32xf32>
    %393 = vector.broadcast %392 : vector<1x32xf32> to vector<8x32xf32>
    %394 = arith.mulf %391, %393 : vector<8x32xf32>
    %395 = vector.shape_cast %373 : vector<32xf32> to vector<1x32xf32>
    %396 = vector.broadcast %395 : vector<1x32xf32> to vector<8x32xf32>
    %397 = arith.addf %394, %396 : vector<8x32xf32>
    %398 = arith.truncf %397 : vector<8x32xf32> to vector<8x32xbf16>
    %c1_130 = arith.constant 1 : index
    %c0_131 = arith.constant 0 : index
    %c0_132 = arith.constant 0 : index
    %399 = vector.load %arg11[%c1_130, %c0_131, %c0_132] : memref<2x32x128xbf16, #tpu.memory_space<vmem>>, vector<1x32x128xbf16>
    %400 = vector.shape_cast %399 : vector<1x32x128xbf16> to vector<32x128xbf16>
    %cst_133 = arith.constant dense<0.000000e+00> : vector<8x128xf32>
    %401 = tpu.matmul %398, %400, %cst_133 {dimension_numbers = #tpu.dot_dimension_numbers<[1], [0], [0], [1], [0, 0, 1, 1], [], []>} : vector<8x32xbf16>, vector<32x128xbf16>, vector<8x128xf32> -> vector<8x128xf32>
    %c1_134 = arith.constant 1 : index
    %c0_135 = arith.constant 0 : index
    %402 = vector.load %arg12[%c1_134, %c0_135] : memref<2x128xf32, #tpu.memory_space<vmem>>, vector<1x128xf32>
    %403 = vector.shape_cast %402 : vector<1x128xf32> to vector<128xf32>
    %404 = vector.shape_cast %403 : vector<128xf32> to vector<1x128xf32>
    %405 = vector.broadcast %404 : vector<1x128xf32> to vector<8x128xf32>
    %406 = arith.addf %401, %405 : vector<8x128xf32>
    %cst_136 = arith.constant 0.000000e+00 : f32
    %407 = vector.broadcast %cst_136 : f32 to vector<8x128xf32>
    %408 = arith.maximumf %406, %407 : vector<8x128xf32>
    %409 = arith.truncf %408 : vector<8x128xf32> to vector<8x128xbf16>
    %c1_137 = arith.constant 1 : index
    %c0_138 = arith.constant 0 : index
    %c0_139 = arith.constant 0 : index
    %410 = vector.load %arg13[%c1_137, %c0_138, %c0_139] : memref<2x128x32xbf16, #tpu.memory_space<vmem>>, vector<1x128x32xbf16>
    %411 = vector.shape_cast %410 : vector<1x128x32xbf16> to vector<128x32xbf16>
    %cst_140 = arith.constant dense<0.000000e+00> : vector<8x32xf32>
    %412 = tpu.matmul %409, %411, %cst_140 {dimension_numbers = #tpu.dot_dimension_numbers<[1], [0], [0], [1], [0, 0, 1, 1], [], []>} : vector<8x128xbf16>, vector<128x32xbf16>, vector<8x32xf32> -> vector<8x32xf32>
    %413 = arith.addf %369, %412 : vector<8x32xf32>
    %c1_141 = arith.constant 1 : index
    %c0_142 = arith.constant 0 : index
    %414 = vector.load %arg14[%c1_141, %c0_142] : memref<2x32xf32, #tpu.memory_space<vmem>>, vector<1x32xf32>
    %415 = vector.shape_cast %414 : vector<1x32xf32> to vector<32xf32>
    %416 = vector.shape_cast %415 : vector<32xf32> to vector<1x32xf32>
    %417 = vector.broadcast %416 : vector<1x32xf32> to vector<8x32xf32>
    %418 = arith.addf %413, %417 : vector<8x32xf32>
    %c0_143 = arith.constant 0 : index
    %c0_144 = arith.constant 0 : index
    %419 = vector.load %arg15[%c0_143, %c0_144] : memref<1x32xf32, #tpu.memory_space<vmem>>, vector<1x32xf32>
    %420 = vector.shape_cast %419 : vector<1x32xf32> to vector<32xf32>
    %c0_145 = arith.constant 0 : index
    %c0_146 = arith.constant 0 : index
    %421 = vector.load %arg16[%c0_145, %c0_146] : memref<1x32xf32, #tpu.memory_space<vmem>>, vector<1x32xf32>
    %422 = vector.shape_cast %421 : vector<1x32xf32> to vector<32xf32>
    %cst_147 = arith.constant dense<0.000000e+00> : vector<8xf32>
    %423 = vector.multi_reduction <add>, %418, %cst_147 [1] : vector<8x32xf32> to vector<8xf32>
    %424 = vector.shape_cast %423 : vector<8xf32> to vector<8x1xf32>
    %cst_148 = arith.constant 3.200000e+01 : f32
    %425 = vector.broadcast %cst_148 : f32 to vector<8x1xf32>
    %426 = arith.divf %424, %425 : vector<8x1xf32>
    %427 = vector.broadcast %426 : vector<8x1xf32> to vector<8x32xf32>
    %428 = arith.subf %418, %427 : vector<8x32xf32>
    %429 = arith.mulf %428, %428 : vector<8x32xf32>
    %cst_149 = arith.constant dense<0.000000e+00> : vector<8xf32>
    %430 = vector.multi_reduction <add>, %429, %cst_149 [1] : vector<8x32xf32> to vector<8xf32>
    %431 = vector.shape_cast %430 : vector<8xf32> to vector<8x1xf32>
    %cst_150 = arith.constant 3.200000e+01 : f32
    %432 = vector.broadcast %cst_150 : f32 to vector<8x1xf32>
    %433 = arith.divf %431, %432 : vector<8x1xf32>
    %434 = vector.broadcast %426 : vector<8x1xf32> to vector<8x32xf32>
    %435 = arith.subf %418, %434 : vector<8x32xf32>
    %cst_151 = arith.constant 9.99999974E-6 : f32
    %436 = vector.broadcast %cst_151 : f32 to vector<8x1xf32>
    %437 = arith.addf %433, %436 : vector<8x1xf32>
    %438 = math.rsqrt %437 : vector<8x1xf32>
    %439 = vector.broadcast %438 : vector<8x1xf32> to vector<8x32xf32>
    %440 = arith.mulf %435, %439 : vector<8x32xf32>
    %441 = vector.shape_cast %420 : vector<32xf32> to vector<1x32xf32>
    %442 = vector.broadcast %441 : vector<1x32xf32> to vector<8x32xf32>
    %443 = arith.mulf %440, %442 : vector<8x32xf32>
    %444 = vector.shape_cast %422 : vector<32xf32> to vector<1x32xf32>
    %445 = vector.broadcast %444 : vector<1x32xf32> to vector<8x32xf32>
    %446 = arith.addf %443, %445 : vector<8x32xf32>
    %447 = arith.truncf %446 : vector<8x32xf32> to vector<8x32xbf16>
    %c0_152 = arith.constant 0 : index
    %c0_153 = arith.constant 0 : index
    %448 = vector.load %arg17[%c0_152, %c0_153] : memref<32x128xbf16, #tpu.memory_space<vmem>>, vector<32x128xbf16>
    %cst_154 = arith.constant dense<0.000000e+00> : vector<8x128xf32>
    %449 = tpu.matmul %447, %448, %cst_154 {dimension_numbers = #tpu.dot_dimension_numbers<[1], [0], [0], [1], [0, 0, 1, 1], [], []>} : vector<8x32xbf16>, vector<32x128xbf16>, vector<8x128xf32> -> vector<8x128xf32>
    %c0_155 = arith.constant 0 : index
    %c0_156 = arith.constant 0 : index
    %450 = vector.load %arg18[%c0_155, %c0_156] : memref<1x128xf32, #tpu.memory_space<vmem>>, vector<1x128xf32>
    %451 = vector.shape_cast %450 : vector<1x128xf32> to vector<128xf32>
    %452 = vector.shape_cast %451 : vector<128xf32> to vector<1x128xf32>
    %453 = vector.broadcast %452 : vector<1x128xf32> to vector<8x128xf32>
    %454 = arith.addf %449, %453 : vector<8x128xf32>
    %c0_157 = arith.constant 0 : index
    %c0_158 = arith.constant 0 : index
    %c0_159 = arith.constant 0 : index
    %455 = vector.load %arg19[%c0_157, %c0_158, %c0_159] : memref<1x8x128xf32, #tpu.memory_space<vmem>>, vector<1x8x128xf32>
    %456 = vector.shape_cast %455 : vector<1x8x128xf32> to vector<8x128xf32>
    %457 = vector.shape_cast %454 : vector<8x128xf32> to vector<1x8x128xf32>
    tpu.vector_store %arg19[%c0_157, %c0_158, %c0_159], %457 {strides = array<i32>} : memref<1x8x128xf32, #tpu.memory_space<vmem>>, vector<1x8x128xf32>,
    return
  }
  func.func @transform_0(%arg0: i32) -> (i32, i32, i32) {
    %c0_i32 = arith.constant 0 : i32
    %c0_i32_0 = arith.constant 0 : i32
    %c0_i32_1 = arith.constant 0 : i32
    return %arg0, %c0_i32, %c0_i32_0 : i32, i32, i32
  }
  func.func @transform_1(%arg0: i32) -> (i32, i32) {
    %c0_i32 = arith.constant 0 : i32
    %c0_i32_0 = arith.constant 0 : i32
    %c0_i32_1 = arith.constant 0 : i32
    return %c0_i32, %c0_i32_0 : i32, i32
  }
  func.func @transform_2(%arg0: i32) -> (i32, i32) {
    %c0_i32 = arith.constant 0 : i32
    %c0_i32_0 = arith.constant 0 : i32
    %c0_i32_1 = arith.constant 0 : i32
    return %c0_i32, %c0_i32_0 : i32, i32
  }
  func.func @transform_3(%arg0: i32) -> (i32, i32) {
    %c0_i32 = arith.constant 0 : i32
    %c0_i32_0 = arith.constant 0 : i32
    %c0_i32_1 = arith.constant 0 : i32
    return %c0_i32, %c0_i32_0 : i32, i32
  }
  func.func @transform_4(%arg0: i32) -> (i32, i32) {
    %c0_i32 = arith.constant 0 : i32
    %c0_i32_0 = arith.constant 0 : i32
    %c0_i32_1 = arith.constant 0 : i32
    return %c0_i32, %c0_i32_0 : i32, i32
  }
  func.func @transform_5(%arg0: i32) -> (i32, i32, i32) {
    %c0_i32 = arith.constant 0 : i32
    %c0_i32_0 = arith.constant 0 : i32
    %c0_i32_1 = arith.constant 0 : i32
    %c0_i32_2 = arith.constant 0 : i32
    return %c0_i32, %c0_i32_0, %c0_i32_1 : i32, i32, i32
  }
  func.func @transform_6(%arg0: i32) -> (i32, i32, i32) {
    %c0_i32 = arith.constant 0 : i32
    %c0_i32_0 = arith.constant 0 : i32
    %c0_i32_1 = arith.constant 0 : i32
    %c0_i32_2 = arith.constant 0 : i32
    return %c0_i32, %c0_i32_0, %c0_i32_1 : i32, i32, i32
  }
  func.func @transform_7(%arg0: i32) -> (i32, i32) {
    %c0_i32 = arith.constant 0 : i32
    %c0_i32_0 = arith.constant 0 : i32
    %c0_i32_1 = arith.constant 0 : i32
    return %c0_i32, %c0_i32_0 : i32, i32
  }
  func.func @transform_8(%arg0: i32) -> (i32, i32) {
    %c0_i32 = arith.constant 0 : i32
    %c0_i32_0 = arith.constant 0 : i32
    %c0_i32_1 = arith.constant 0 : i32
    return %c0_i32, %c0_i32_0 : i32, i32
  }
  func.func @transform_9(%arg0: i32) -> (i32, i32) {
    %c0_i32 = arith.constant 0 : i32
    %c0_i32_0 = arith.constant 0 : i32
    %c0_i32_1 = arith.constant 0 : i32
    return %c0_i32, %c0_i32_0 : i32, i32
  }
  func.func @transform_10(%arg0: i32) -> (i32, i32, i32) {
    %c0_i32 = arith.constant 0 : i32
    %c0_i32_0 = arith.constant 0 : i32
    %c0_i32_1 = arith.constant 0 : i32
    %c0_i32_2 = arith.constant 0 : i32
    return %c0_i32, %c0_i32_0, %c0_i32_1 : i32, i32, i32
  }
  func.func @transform_11(%arg0: i32) -> (i32, i32) {
    %c0_i32 = arith.constant 0 : i32
    %c0_i32_0 = arith.constant 0 : i32
    %c0_i32_1 = arith.constant 0 : i32
    return %c0_i32, %c0_i32_0 : i32, i32
  }
  func.func @transform_12(%arg0: i32) -> (i32, i32, i32) {
    %c0_i32 = arith.constant 0 : i32
    %c0_i32_0 = arith.constant 0 : i32
    %c0_i32_1 = arith.constant 0 : i32
    %c0_i32_2 = arith.constant 0 : i32
    return %c0_i32, %c0_i32_0, %c0_i32_1 : i32, i32, i32
  }
  func.func @transform_13(%arg0: i32) -> (i32, i32) {
    %c0_i32 = arith.constant 0 : i32
    %c0_i32_0 = arith.constant 0 : i32
    %c0_i32_1 = arith.constant 0 : i32
    return %c0_i32, %c0_i32_0 : i32, i32
  }
  func.func @transform_14(%arg0: i32) -> (i32, i32) {
    %c0_i32 = arith.constant 0 : i32
    %c0_i32_0 = arith.constant 0 : i32
    %c0_i32_1 = arith.constant 0 : i32
    return %c0_i32, %c0_i32_0 : i32, i32
  }
  func.func @transform_15(%arg0: i32) -> (i32, i32) {
    %c0_i32 = arith.constant 0 : i32
    %c0_i32_0 = arith.constant 0 : i32
    %c0_i32_1 = arith.constant 0 : i32
    return %c0_i32, %c0_i32_0 : i32, i32
  }
  func.func @transform_16(%arg0: i32) -> (i32, i32) {
    %c0_i32 = arith.constant 0 : i32
    %c0_i32_0 = arith.constant 0 : i32
    %c0_i32_1 = arith.constant 0 : i32
    return %c0_i32, %c0_i32_0 : i32, i32
  }
  func.func @transform_17(%arg0: i32) -> (i32, i32) {
    %c0_i32 = arith.constant 0 : i32
    %c0_i32_0 = arith.constant 0 : i32
    %c0_i32_1 = arith.constant 0 : i32
    return %c0_i32, %c0_i32_0 : i32, i32
  }
  func.func @transform_18(%arg0: i32) -> (i32, i32, i32) {
    %c0_i32 = arith.constant 0 : i32
    %c0_i32_0 = arith.constant 0 : i32
    %c0_i32_1 = arith.constant 0 : i32
    return %arg0, %c0_i32, %c0_i32_0 : i32, i32, i32
  }
}

</mosaic_0001>

<llo_original>
// kernel: decoder_forward.1
$region0: #{decoder_forward.1}
  #allocation0 [shape = 'u32[]', space=smem, size = 0x4, offset = 0x4, fixed_abs, tag = 'smem constant byte address 0x4 - core index']
  #allocation1 [shape = 'u32[144,128]{1,0:T(1,128)}', space=vmem, size = 0x12000, scoped, tag = 'internal scratch']
  %s0 = inlined_call_operand.vmem [shape: s32[2,8,1], index: 0, kind: input, shape index: {}]
  %s1 = inlined_call_operand.vmem [shape: bf16[128,32], index: 1, kind: input, shape index: {}]
  %s2 = inlined_call_operand.vmem [shape: f32[8,32], index: 2, kind: input, shape index: {}]
  %s3 = inlined_call_operand.vmem [shape: f32[2,32], index: 3, kind: input, shape index: {}]
  %s4 = inlined_call_operand.vmem [shape: f32[2,32], index: 4, kind: input, shape index: {}]
  %s5 = inlined_call_operand.vmem [shape: bf16[2,32,96], index: 5, kind: input, shape index: {}]
  %s6 = inlined_call_operand.vmem [shape: bf16[2,32,32], index: 6, kind: input, shape index: {}]
  %s7 = inlined_call_operand.vmem [shape: f32[2,32], index: 7, kind: input, shape index: {}]
  %s8 = inlined_call_operand.vmem [shape: f32[2,32], index: 8, kind: input, shape index: {}]
  %s9 = inlined_call_operand.vmem [shape: f32[2,32], index: 9, kind: input, shape index: {}]
  %s10 = inlined_call_operand.vmem [shape: bf16[2,32,128], index: 10, kind: input, shape index: {}]
  %s11 = inlined_call_operand.vmem [shape: f32[2,128], index: 11, kind: input, shape index: {}]
  %s12 = inlined_call_operand.vmem [shape: bf16[2,128,32], index: 12, kind: input, shape index: {}]
  %s13 = inlined_call_operand.vmem [shape: f32[2,32], index: 13, kind: input, shape index: {}]
  %s14 = inlined_call_operand.vmem [shape: f32[1,32], index: 14, kind: input, shape index: {}]
  %s15 = inlined_call_operand.vmem [shape: f32[1,32], index: 15, kind: input, shape index: {}]
  %s16 = inlined_call_operand.vmem [shape: bf16[32,128], index: 16, kind: input, shape index: {}]
  %s17 = inlined_call_operand.vmem [shape: f32[1,128], index: 17, kind: input, shape index: {}]
  %s18 = inlined_call_operand.hbm [shape: f32[2,8,128], index: 18, kind: output, shape index: {}]
  %s19 = sld [smem:[#allocation0]]
  $region105: #{decoder_forward.1} parent=0
    _
  %s21 = ssub.s32 1, %s19
  %s22 = scalar_select 0, %s21, %s19
  $region1: #{decoder_forward.1} parent=0
    #allocation2 [shape = 'u8[8192]{0}', space=vmem, size = 0x2000, scoped, tag = 'output window, operand 0']
    #allocation3 [shape = 's32[2]{0}', space=sflag, size = 0x8, scoped, tag = 'scoped memory for decoder_forward.1']
    %23 = vsyncpa [#allocation3], 0
    %s24 = scalar_lea.sflag [#allocation3], 1
    %25 = vsyncpa %s24, 0
    loop: start=0, step=1, limit=4
    $region2: #{decoder_forward.1} parent=1 // loop_pre_header
      _
    $region3: #{decoder_forward.1} parent=1 // loop_header
      %s27 = sphi 0, %s31
      %p28 = scmp.ge.s32.totalorder %s27, 4
      %s37 = sphi 0, %s39
      %s40 = sphi 0, %s37
      %s41 = sphi 0, %s40
      %s57 = sphi 0, %s41
      %s61 = sphi 0, %s61
      %s63 = sphi 0, %s61
      %s64 = sphi 0, %s63
      %s78 = sphi 0, %s64
      %s82 = sphi 0, %s82
      %s84 = sphi 0, %s82
      %s85 = sphi 0, %s84
      %s99 = sphi 0, %s85
      %s103 = sphi 0, %s103
      %s105 = sphi 0, %s103
      %s106 = sphi 0, %s105
      %s120 = sphi 0, %s106
      %s124 = sphi 0, %s124
      %s126 = sphi 0, %s124
      %s127 = sphi 0, %s126
      %s141 = sphi 0, %s127
      %s145 = sphi 0, %s145
      %s147 = sphi 0, %s145
      %s148 = sphi 0, %s147
      %s162 = sphi 0, %s148
      %s166 = sphi 0, %s166
      %s168 = sphi 0, %s166
      %s169 = sphi 0, %s168
      %s183 = sphi 0, %s169
      %s187 = sphi 0, %s187
      %s189 = sphi 0, %s187
      %s190 = sphi 0, %s189
      %s204 = sphi 0, %s190
      %s208 = sphi 0, %s208
      %s210 = sphi 0, %s208
      %s211 = sphi 0, %s210
      %s225 = sphi 0, %s211
      %s229 = sphi 0, %s229
      %s231 = sphi 0, %s229
      %s232 = sphi 0, %s231
      %s246 = sphi 0, %s232
      %s250 = sphi 0, %s250
      %s252 = sphi 0, %s250
      %s253 = sphi 0, %s252
      %s267 = sphi 0, %s253
      %s271 = sphi 0, %s271
      %s273 = sphi 0, %s271
      %s274 = sphi 0, %s273
      %s288 = sphi 0, %s274
      %s292 = sphi 0, %s292
      %s294 = sphi 0, %s292
      %s295 = sphi 0, %s294
      %s309 = sphi 0, %s295
      %s313 = sphi 0, %s313
      %s315 = sphi 0, %s313
      %s316 = sphi 0, %s315
      %s330 = sphi 0, %s316
      %s334 = sphi 0, %s334
      %s336 = sphi 0, %s334
      %s337 = sphi 0, %s336
      %s351 = sphi 0, %s337
      %s355 = sphi 0, %s355
      %s357 = sphi 0, %s355
      %s358 = sphi 0, %s357
      %s372 = sphi 0, %s358
      %s376 = sphi 0, %s376
      %s378 = sphi 0, %s376
      %s379 = sphi 0, %s378
      %s393 = sphi 0, %s379
      %s397 = sphi 0, %s397
      %s399 = sphi 0, %s397
      %s400 = sphi 0, %s399
      %s414 = sphi 0, %s400
      %s420 = sphi 0, %s422
      %s423 = sphi 0, %s420
      %s424 = sphi 0, %s423
      %s440 = sphi 0, %s424
    $region4: #{decoder_forward.1} parent=1 // loop_header_branch
      %30 = sbr.rel (%p28) target = $region8
    $region5: #{decoder_forward.1} parent=1 // loop_body
      %s32 = ssub.s32 %s27, 1
      %s33 = ssub.s32 %s27, 2
      %s34 = sadd.s32 %s27, 1
      %s35 = ssub.s32 %s27, %s34
      %p36 = scmp.eq.s32.totalorder %s35, 0
      %s38 = sadd.s32 %s37, 1
      %s39 = scalar_select %p36, %s37, %s38
      %p42 = pneg %p36
      %p43 = scmp.eq.s32.totalorder %s27, 1
      %p44 = por %p42, %p43
      %p45 = scmp.ne.s32.totalorder %s37, %s40
      %p46 = scmp.eq.s32.totalorder %s27, 0
      %p47 = por %p45, %p46
      %p48 = scmp.ne.s32.totalorder %s37, %s40
      %p49 = scmp.eq.s32.totalorder %s32, 1
      %p50 = por %p48, %p49
      %p51 = scmp.ne.s32.totalorder %s40, %s41
      %p52 = scmp.eq.s32.totalorder %s32, 0
      %p53 = por %p51, %p52
      %p54 = scmp.ne.s32.totalorder %s40, %s41
      %p55 = scmp.eq.s32.totalorder %s33, 1
      %p56 = por %p54, %p55
      %p58 = scmp.ne.s32.totalorder %s41, %s57
      %p59 = scmp.eq.s32.totalorder %s33, 0
      %p60 = por %p58, %p59
      %s62 = sadd.s32 %s61, 1
      %p65 = scmp.eq.s32.totalorder %s27, 1
      %p66 = scmp.ne.s32.totalorder %s61, %s63
      %p67 = scmp.eq.s32.totalorder %s27, 0
      %p68 = por %p66, %p67
      %p69 = scmp.ne.s32.totalorder %s61, %s63
      %p70 = scmp.eq.s32.totalorder %s32, 1
      %p71 = por %p69, %p70
      %p72 = scmp.ne.s32.totalorder %s63, %s64
      %p73 = scmp.eq.s32.totalorder %s32, 0
      %p74 = por %p72, %p73
      %p75 = scmp.ne.s32.totalorder %s63, %s64
      %p76 = scmp.eq.s32.totalorder %s33, 1
      %p77 = por %p75, %p76
      %p79 = scmp.ne.s32.totalorder %s64, %s78
      %p80 = scmp.eq.s32.totalorder %s33, 0
      %p81 = por %p79, %p80
      %s83 = sadd.s32 %s82, 1
      %p86 = scmp.eq.s32.totalorder %s27, 1
      %p87 = scmp.ne.s32.totalorder %s82, %s84
      %p88 = scmp.eq.s32.totalorder %s27, 0
      %p89 = por %p87, %p88
      %p90 = scmp.ne.s32.totalorder %s82, %s84
      %p91 = scmp.eq.s32.totalorder %s32, 1
      %p92 = por %p90, %p91
      %p93 = scmp.ne.s32.totalorder %s84, %s85
      %p94 = scmp.eq.s32.totalorder %s32, 0
      %p95 = por %p93, %p94
      %p96 = scmp.ne.s32.totalorder %s84, %s85
      %p97 = scmp.eq.s32.totalorder %s33, 1
      %p98 = por %p96, %p97
      %p100 = scmp.ne.s32.totalorder %s85, %s99
      %p101 = scmp.eq.s32.totalorder %s33, 0
      %p102 = por %p100, %p101
      %s104 = sadd.s32 %s103, 1
      %p107 = scmp.eq.s32.totalorder %s27, 1
      %p108 = scmp.ne.s32.totalorder %s103, %s105
      %p109 = scmp.eq.s32.totalorder %s27, 0
      %p110 = por %p108, %p109
      %p111 = scmp.ne.s32.totalorder %s103, %s105
      %p112 = scmp.eq.s32.totalorder %s32, 1
      %p113 = por %p111, %p112
      %p114 = scmp.ne.s32.totalorder %s105, %s106
      %p115 = scmp.eq.s32.totalorder %s32, 0
      %p116 = por %p114, %p115
      %p117 = scmp.ne.s32.totalorder %s105, %s106
      %p118 = scmp.eq.s32.totalorder %s33, 1
      %p119 = por %p117, %p118
      %p121 = scmp.ne.s32.totalorder %s106, %s120
      %p122 = scmp.eq.s32.totalorder %s33, 0
      %p123 = por %p121, %p122
      %s125 = sadd.s32 %s124, 1
      %p128 = scmp.eq.s32.totalorder %s27, 1
      %p129 = scmp.ne.s32.totalorder %s124, %s126
      %p130 = scmp.eq.s32.totalorder %s27, 0
      %p131 = por %p129, %p130
      %p132 = scmp.ne.s32.totalorder %s124, %s126
      %p133 = scmp.eq.s32.totalorder %s32, 1
      %p134 = por %p132, %p133
      %p135 = scmp.ne.s32.totalorder %s126, %s127
      %p136 = scmp.eq.s32.totalorder %s32, 0
      %p137 = por %p135, %p136
      %p138 = scmp.ne.s32.totalorder %s126, %s127
      %p139 = scmp.eq.s32.totalorder %s33, 1
      %p140 = por %p138, %p139
      %p142 = scmp.ne.s32.totalorder %s127, %s141
      %p143 = scmp.eq.s32.totalorder %s33, 0
      %p144 = por %p142, %p143
      %s146 = sadd.s32 %s145, 1
      %p149 = scmp.eq.s32.totalorder %s27, 1
      %p150 = scmp.ne.s32.totalorder %s145, %s147
      %p151 = scmp.eq.s32.totalorder %s27, 0
      %p152 = por %p150, %p151
      %p153 = scmp.ne.s32.totalorder %s145, %s147
      %p154 = scmp.eq.s32.totalorder %s32, 1
      %p155 = por %p153, %p154
      %p156 = scmp.ne.s32.totalorder %s147, %s148
      %p157 = scmp.eq.s32.totalorder %s32, 0
      %p158 = por %p156, %p157
      %p159 = scmp.ne.s32.totalorder %s147, %s148
      %p160 = scmp.eq.s32.totalorder %s33, 1
      %p161 = por %p159, %p160
      %p163 = scmp.ne.s32.totalorder %s148, %s162
      %p164 = scmp.eq.s32.totalorder %s33, 0
      %p165 = por %p163, %p164
      %s167 = sadd.s32 %s166, 1
      %p170 = scmp.eq.s32.totalorder %s27, 1
      %p171 = scmp.ne.s32.totalorder %s166, %s168
      %p172 = scmp.eq.s32.totalorder %s27, 0
      %p173 = por %p171, %p172
      %p174 = scmp.ne.s32.totalorder %s166, %s168
      %p175 = scmp.eq.s32.totalorder %s32, 1
      %p176 = por %p174, %p175
      %p177 = scmp.ne.s32.totalorder %s168, %s169
      %p178 = scmp.eq.s32.totalorder %s32, 0
      %p179 = por %p177, %p178
      %p180 = scmp.ne.s32.totalorder %s168, %s169
      %p181 = scmp.eq.s32.totalorder %s33, 1
      %p182 = por %p180, %p181
      %p184 = scmp.ne.s32.totalorder %s169, %s183
      %p185 = scmp.eq.s32.totalorder %s33, 0
      %p186 = por %p184, %p185
      %s188 = sadd.s32 %s187, 1
      %p191 = scmp.eq.s32.totalorder %s27, 1
      %p192 = scmp.ne.s32.totalorder %s187, %s189
      %p193 = scmp.eq.s32.totalorder %s27, 0
      %p194 = por %p192, %p193
      %p195 = scmp.ne.s32.totalorder %s187, %s189
      %p196 = scmp.eq.s32.totalorder %s32, 1
      %p197 = por %p195, %p196
      %p198 = scmp.ne.s32.totalorder %s189, %s190
      %p199 = scmp.eq.s32.totalorder %s32, 0
      %p200 = por %p198, %p199
      %p201 = scmp.ne.s32.totalorder %s189, %s190
      %p202 = scmp.eq.s32.totalorder %s33, 1
      %p203 = por %p201, %p202
      %p205 = scmp.ne.s32.totalorder %s190, %s204
      %p206 = scmp.eq.s32.totalorder %s33, 0
      %p207 = por %p205, %p206
      %s209 = sadd.s32 %s208, 1
      %p212 = scmp.eq.s32.totalorder %s27, 1
      %p213 = scmp.ne.s32.totalorder %s208, %s210
      %p214 = scmp.eq.s32.totalorder %s27, 0
      %p215 = por %p213, %p214
      %p216 = scmp.ne.s32.totalorder %s208, %s210
      %p217 = scmp.eq.s32.totalorder %s32, 1
      %p218 = por %p216, %p217
      %p219 = scmp.ne.s32.totalorder %s210, %s211
      %p220 = scmp.eq.s32.totalorder %s32, 0
      %p221 = por %p219, %p220
      %p222 = scmp.ne.s32.totalorder %s210, %s211
      %p223 = scmp.eq.s32.totalorder %s33, 1
      %p224 = por %p222, %p223
      %p226 = scmp.ne.s32.totalorder %s211, %s225
      %p227 = scmp.eq.s32.totalorder %s33, 0
      %p228 = por %p226, %p227
      %s230 = sadd.s32 %s229, 1
      %p233 = scmp.eq.s32.totalorder %s27, 1
      %p234 = scmp.ne.s32.totalorder %s229, %s231
      %p235 = scmp.eq.s32.totalorder %s27, 0
      %p236 = por %p234, %p235
      %p237 = scmp.ne.s32.totalorder %s229, %s231
      %p238 = scmp.eq.s32.totalorder %s32, 1
      %p239 = por %p237, %p238
      %p240 = scmp.ne.s32.totalorder %s231, %s232
      %p241 = scmp.eq.s32.totalorder %s32, 0
      %p242 = por %p240, %p241
      %p243 = scmp.ne.s32.totalorder %s231, %s232
      %p244 = scmp.eq.s32.totalorder %s33, 1
      %p245 = por %p243, %p244
      %p247 = scmp.ne.s32.totalorder %s232, %s246
      %p248 = scmp.eq.s32.totalorder %s33, 0
      %p249 = por %p247, %p248
      %s251 = sadd.s32 %s250, 1
      %p254 = scmp.eq.s32.totalorder %s27, 1
      %p255 = scmp.ne.s32.totalorder %s250, %s252
      %p256 = scmp.eq.s32.totalorder %s27, 0
      %p257 = por %p255, %p256
      %p258 = scmp.ne.s32.totalorder %s250, %s252
      %p259 = scmp.eq.s32.totalorder %s32, 1
      %p260 = por %p258, %p259
      %p261 = scmp.ne.s32.totalorder %s252, %s253
      %p262 = scmp.eq.s32.totalorder %s32, 0
      %p263 = por %p261, %p262
      %p264 = scmp.ne.s32.totalorder %s252, %s253
      %p265 = scmp.eq.s32.totalorder %s33, 1
      %p266 = por %p264, %p265
      %p268 = scmp.ne.s32.totalorder %s253, %s267
      %p269 = scmp.eq.s32.totalorder %s33, 0
      %p270 = por %p268, %p269
      %s272 = sadd.s32 %s271, 1
      %p275 = scmp.eq.s32.totalorder %s27, 1
      %p276 = scmp.ne.s32.totalorder %s271, %s273
      %p277 = scmp.eq.s32.totalorder %s27, 0
      %p278 = por %p276, %p277
      %p279 = scmp.ne.s32.totalorder %s271, %s273
      %p280 = scmp.eq.s32.totalorder %s32, 1
      %p281 = por %p279, %p280
      %p282 = scmp.ne.s32.totalorder %s273, %s274
      %p283 = scmp.eq.s32.totalorder %s32, 0
      %p284 = por %p282, %p283
      %p285 = scmp.ne.s32.totalorder %s273, %s274
      %p286 = scmp.eq.s32.totalorder %s33, 1
      %p287 = por %p285, %p286
      %p289 = scmp.ne.s32.totalorder %s274, %s288
      %p290 = scmp.eq.s32.totalorder %s33, 0
      %p291 = por %p289, %p290
      %s293 = sadd.s32 %s292, 1
      %p296 = scmp.eq.s32.totalorder %s27, 1
      %p297 = scmp.ne.s32.totalorder %s292, %s294
      %p298 = scmp.eq.s32.totalorder %s27, 0
      %p299 = por %p297, %p298
      %p300 = scmp.ne.s32.totalorder %s292, %s294
      %p301 = scmp.eq.s32.totalorder %s32, 1
      %p302 = por %p300, %p301
      %p303 = scmp.ne.s32.totalorder %s294, %s295
      %p304 = scmp.eq.s32.totalorder %s32, 0
      %p305 = por %p303, %p304
      %p306 = scmp.ne.s32.totalorder %s294, %s295
      %p307 = scmp.eq.s32.totalorder %s33, 1
      %p308 = por %p306, %p307
      %p310 = scmp.ne.s32.totalorder %s295, %s309
      %p311 = scmp.eq.s32.totalorder %s33, 0
      %p312 = por %p310, %p311
      %s314 = sadd.s32 %s313, 1
      %p317 = scmp.eq.s32.totalorder %s27, 1
      %p318 = scmp.ne.s32.totalorder %s313, %s315
      %p319 = scmp.eq.s32.totalorder %s27, 0
      %p320 = por %p318, %p319
      %p321 = scmp.ne.s32.totalorder %s313, %s315
      %p322 = scmp.eq.s32.totalorder %s32, 1
      %p323 = por %p321, %p322
      %p324 = scmp.ne.s32.totalorder %s315, %s316
      %p325 = scmp.eq.s32.totalorder %s32, 0
      %p326 = por %p324, %p325
      %p327 = scmp.ne.s32.totalorder %s315, %s316
      %p328 = scmp.eq.s32.totalorder %s33, 1
      %p329 = por %p327, %p328
      %p331 = scmp.ne.s32.totalorder %s316, %s330
      %p332 = scmp.eq.s32.totalorder %s33, 0
      %p333 = por %p331, %p332
      %s335 = sadd.s32 %s334, 1
      %p338 = scmp.eq.s32.totalorder %s27, 1
      %p339 = scmp.ne.s32.totalorder %s334, %s336
      %p340 = scmp.eq.s32.totalorder %s27, 0
      %p341 = por %p339, %p340
      %p342 = scmp.ne.s32.totalorder %s334, %s336
      %p343 = scmp.eq.s32.totalorder %s32, 1
      %p344 = por %p342, %p343
      %p345 = scmp.ne.s32.totalorder %s336, %s337
      %p346 = scmp.eq.s32.totalorder %s32, 0
      %p347 = por %p345, %p346
      %p348 = scmp.ne.s32.totalorder %s336, %s337
      %p349 = scmp.eq.s32.totalorder %s33, 1
      %p350 = por %p348, %p349
      %p352 = scmp.ne.s32.totalorder %s337, %s351
      %p353 = scmp.eq.s32.totalorder %s33, 0
      %p354 = por %p352, %p353
      %s356 = sadd.s32 %s355, 1
      %p359 = scmp.eq.s32.totalorder %s27, 1
      %p360 = scmp.ne.s32.totalorder %s355, %s357
      %p361 = scmp.eq.s32.totalorder %s27, 0
      %p362 = por %p360, %p361
      %p363 = scmp.ne.s32.totalorder %s355, %s357
      %p364 = scmp.eq.s32.totalorder %s32, 1
      %p365 = por %p363, %p364
      %p366 = scmp.ne.s32.totalorder %s357, %s358
      %p367 = scmp.eq.s32.totalorder %s32, 0
      %p368 = por %p366, %p367
      %p369 = scmp.ne.s32.totalorder %s357, %s358
      %p370 = scmp.eq.s32.totalorder %s33, 1
      %p371 = por %p369, %p370
      %p373 = scmp.ne.s32.totalorder %s358, %s372
      %p374 = scmp.eq.s32.totalorder %s33, 0
      %p375 = por %p373, %p374
      %s377 = sadd.s32 %s376, 1
      %p380 = scmp.eq.s32.totalorder %s27, 1
      %p381 = scmp.ne.s32.totalorder %s376, %s378
      %p382 = scmp.eq.s32.totalorder %s27, 0
      %p383 = por %p381, %p382
      %p384 = scmp.ne.s32.totalorder %s376, %s378
      %p385 = scmp.eq.s32.totalorder %s32, 1
      %p386 = por %p384, %p385
      %p387 = scmp.ne.s32.totalorder %s378, %s379
      %p388 = scmp.eq.s32.totalorder %s32, 0
      %p389 = por %p387, %p388
      %p390 = scmp.ne.s32.totalorder %s378, %s379
      %p391 = scmp.eq.s32.totalorder %s33, 1
      %p392 = por %p390, %p391
      %p394 = scmp.ne.s32.totalorder %s379, %s393
      %p395 = scmp.eq.s32.totalorder %s33, 0
      %p396 = por %p394, %p395
      %s398 = sadd.s32 %s397, 1
      %p401 = scmp.eq.s32.totalorder %s27, 1
      %p402 = scmp.ne.s32.totalorder %s397, %s399
      %p403 = scmp.eq.s32.totalorder %s27, 0
      %p404 = por %p402, %p403
      %p405 = scmp.ne.s32.totalorder %s397, %s399
      %p406 = scmp.eq.s32.totalorder %s32, 1
      %p407 = por %p405, %p406
      %p408 = scmp.ne.s32.totalorder %s399, %s400
      %p409 = scmp.eq.s32.totalorder %s32, 0
      %p410 = por %p408, %p409
      %p411 = scmp.ne.s32.totalorder %s399, %s400
      %p412 = scmp.eq.s32.totalorder %s33, 1
      %p413 = por %p411, %p412
      %p415 = scmp.ne.s32.totalorder %s400, %s414
      %p416 = scmp.eq.s32.totalorder %s33, 0
      %p417 = por %p415, %p416
      %s418 = ssub.s32 %s27, %s34
      %p419 = scmp.eq.s32.totalorder %s418, 0
      %s421 = sadd.s32 %s420, 1
      %s422 = scalar_select %p419, %s420, %s421
      %p425 = pneg %p419
      %p426 = scmp.eq.s32.totalorder %s27, 1
      %p427 = por %p425, %p426
      %p428 = scmp.ne.s32.totalorder %s420, %s423
      %p429 = scmp.eq.s32.totalorder %s27, 0
      %p430 = por %p428, %p429
      %p431 = scmp.ne.s32.totalorder %s420, %s423
      %p432 = scmp.eq.s32.totalorder %s32, 1
      %p433 = por %p431, %p432
      %p434 = scmp.ne.s32.totalorder %s423, %s424
      %p435 = scmp.eq.s32.totalorder %s32, 0
      %p436 = por %p434, %p435
      %p437 = scmp.ne.s32.totalorder %s423, %s424
      %p438 = scmp.eq.s32.totalorder %s33, 1
      %p439 = por %p437, %p438
      %p441 = scmp.ne.s32.totalorder %s424, %s440
      %p442 = scmp.eq.s32.totalorder %s33, 0
      %p443 = por %p441, %p442
      %p444 = scmp.le.s32.totalorder 1, %s27
      %p445 = scmp.lt.s32.totalorder %s27, 3
      %p446 = pnand %p444, %p445
      %p447 = pneg %p446
      // Predicated region
      $region9: #{decoder_forward.1} parent=5 // pred_check
        _
      $region10: #{decoder_forward.1} parent=5 // pred_check_branch
        %449 = sbr.rel (%p446) target = $region12
      $region11: #{decoder_forward.1} parent=5 // pred_region
        %s450 = ssub.s32 %s27, 1
        // Predicated region
        $region13: #{decoder_forward.1} parent=11 // pred_check
          %p451 = pneg %p74
        $region14: #{decoder_forward.1} parent=11 // pred_check_branch
          %453 = sbr.rel (%p451) target = $region16
        $region15: #{decoder_forward.1} parent=11 // pred_region
          _
        $region16: #{decoder_forward.1} parent=11 // pred_fallthru
          _
        // Predicated region
        $region17: #{decoder_forward.1} parent=11 // pred_check
          %p454 = pneg %p95
        $region18: #{decoder_forward.1} parent=11 // pred_check_branch
          %456 = sbr.rel (%p454) target = $region20
        $region19: #{decoder_forward.1} parent=11 // pred_region
          _
        $region20: #{decoder_forward.1} parent=11 // pred_fallthru
          _
        // Predicated region
        $region21: #{decoder_forward.1} parent=11 // pred_check
          %p457 = pneg %p116
        $region22: #{decoder_forward.1} parent=11 // pred_check_branch
          %459 = sbr.rel (%p457) target = $region24
        $region23: #{decoder_forward.1} parent=11 // pred_region
          _
        $region24: #{decoder_forward.1} parent=11 // pred_fallthru
          _
        // Predicated region
        $region25: #{decoder_forward.1} parent=11 // pred_check
          %p460 = pneg %p137
        $region26: #{decoder_forward.1} parent=11 // pred_check_branch
          %462 = sbr.rel (%p460) target = $region28
        $region27: #{decoder_forward.1} parent=11 // pred_region
          _
        $region28: #{decoder_forward.1} parent=11 // pred_fallthru
          _
        // Predicated region
        $region29: #{decoder_forward.1} parent=11 // pred_check
          %p463 = pneg %p158
        $region30: #{decoder_forward.1} parent=11 // pred_check_branch
          %465 = sbr.rel (%p463) target = $region32
        $region31: #{decoder_forward.1} parent=11 // pred_region
          _
        $region32: #{decoder_forward.1} parent=11 // pred_fallthru
          _
        // Predicated region
        $region33: #{decoder_forward.1} parent=11 // pred_check
          %p466 = pneg %p179
        $region34: #{decoder_forward.1} parent=11 // pred_check_branch
          %468 = sbr.rel (%p466) target = $region36
        $region35: #{decoder_forward.1} parent=11 // pred_region
          _
        $region36: #{decoder_forward.1} parent=11 // pred_fallthru
          _
        // Predicated region
        $region37: #{decoder_forward.1} parent=11 // pred_check
          %p469 = pneg %p200
        $region38: #{decoder_forward.1} parent=11 // pred_check_branch
          %471 = sbr.rel (%p469) target = $region40
        $region39: #{decoder_forward.1} parent=11 // pred_region
          _
        $region40: #{decoder_forward.1} parent=11 // pred_fallthru
          _
        // Predicated region
        $region41: #{decoder_forward.1} parent=11 // pred_check
          %p472 = pneg %p221
        $region42: #{decoder_forward.1} parent=11 // pred_check_branch
          %474 = sbr.rel (%p472) target = $region44
        $region43: #{decoder_forward.1} parent=11 // pred_region
          _
        $region44: #{decoder_forward.1} parent=11 // pred_fallthru
          _
        // Predicated region
        $region45: #{decoder_forward.1} parent=11 // pred_check
          %p475 = pneg %p242
        $region46: #{decoder_forward.1} parent=11 // pred_check_branch
          %477 = sbr.rel (%p475) target = $region48
        $region47: #{decoder_forward.1} parent=11 // pred_region
          _
        $region48: #{decoder_forward.1} parent=11 // pred_fallthru
          _
        // Predicated region
        $region49: #{decoder_forward.1} parent=11 // pred_check
          %p478 = pneg %p263
        $region50: #{decoder_forward.1} parent=11 // pred_check_branch
          %480 = sbr.rel (%p478) target = $region52
        $region51: #{decoder_forward.1} parent=11 // pred_region
          _
        $region52: #{decoder_forward.1} parent=11 // pred_fallthru
          _
        // Predicated region
        $region53: #{decoder_forward.1} parent=11 // pred_check
          %p481 = pneg %p284
        $region54: #{decoder_forward.1} parent=11 // pred_check_branch
          %483 = sbr.rel (%p481) target = $region56
        $region55: #{decoder_forward.1} parent=11 // pred_region
          _
        $region56: #{decoder_forward.1} parent=11 // pred_fallthru
          _
        // Predicated region
        $region57: #{decoder_forward.1} parent=11 // pred_check
          %p484 = pneg %p305
        $region58: #{decoder_forward.1} parent=11 // pred_check_branch
          %486 = sbr.rel (%p484) target = $region60
        $region59: #{decoder_forward.1} parent=11 // pred_region
          _
        $region60: #{decoder_forward.1} parent=11 // pred_fallthru
          _
        // Predicated region
        $region61: #{decoder_forward.1} parent=11 // pred_check
          %p487 = pneg %p326
        $region62: #{decoder_forward.1} parent=11 // pred_check_branch
          %489 = sbr.rel (%p487) target = $region64
        $region63: #{decoder_forward.1} parent=11 // pred_region
          _
        $region64: #{decoder_forward.1} parent=11 // pred_fallthru
          _
        // Predicated region
        $region65: #{decoder_forward.1} parent=11 // pred_check
          %p490 = pneg %p347
        $region66: #{decoder_forward.1} parent=11 // pred_check_branch
          %492 = sbr.rel (%p490) target = $region68
        $region67: #{decoder_forward.1} parent=11 // pred_region
          _
        $region68: #{decoder_forward.1} parent=11 // pred_fallthru
          _
        // Predicated region
        $region69: #{decoder_forward.1} parent=11 // pred_check
          %p493 = pneg %p368
        $region70: #{decoder_forward.1} parent=11 // pred_check_branch
          %495 = sbr.rel (%p493) target = $region72
        $region71: #{decoder_forward.1} parent=11 // pred_region
          _
        $region72: #{decoder_forward.1} parent=11 // pred_fallthru
          _
        // Predicated region
        $region73: #{decoder_forward.1} parent=11 // pred_check
          %p496 = pneg %p389
        $region74: #{decoder_forward.1} parent=11 // pred_check_branch
          %498 = sbr.rel (%p496) target = $region76
        $region75: #{decoder_forward.1} parent=11 // pred_region
          _
        $region76: #{decoder_forward.1} parent=11 // pred_fallthru
          _
        // Predicated region
        $region77: #{decoder_forward.1} parent=11 // pred_check
          %p499 = pneg %p410
        $region78: #{decoder_forward.1} parent=11 // pred_check_branch
          %501 = sbr.rel (%p499) target = $region80
        $region79: #{decoder_forward.1} parent=11 // pred_region
          _
        $region80: #{decoder_forward.1} parent=11 // pred_fallthru
          _
      $region12: #{decoder_forward.1} parent=5 // pred_fallthru
        _
      %p502 = scmp.lt.s32.totalorder %s27, 2
      // Predicated region
      $region81: #{decoder_forward.1} parent=5 // pred_check
        %p503 = pneg %p502
      $region82: #{decoder_forward.1} parent=5 // pred_check_branch
        %505 = sbr.rel (%p503) target = $region84
      $region83: #{decoder_forward.1} parent=5 // pred_region
        // Predicated region
        $region85: #{decoder_forward.1} parent=83 // pred_check
          %p506 = pneg %p47
        $region86: #{decoder_forward.1} parent=83 // pred_check_branch
          %508 = sbr.rel (%p506) target = $region88
        $region87: #{decoder_forward.1} parent=83 // pred_region
          %p509 = scmp.lt.s32.totalorder %s27, 1
          %s510 = scalar_select %p509, %s27, 1
          %s511 = smul.addr %s510, 8
          %s512 = scalar_lea.vmem %s0, %s511
        $region88: #{decoder_forward.1} parent=83 // pred_fallthru
          _
      $region84: #{decoder_forward.1} parent=5 // pred_fallthru
        _
      %p513 = scmp.le.s32.totalorder 1, %s27
      %p514 = scmp.lt.s32.totalorder %s27, 3
      %p515 = pnand %p513, %p514
      %p516 = pneg %p515
      // Predicated region
      $region89: #{decoder_forward.1} parent=5 // pred_check
        _
      $region90: #{decoder_forward.1} parent=5 // pred_check_branch
        %518 = sbr.rel (%p515) target = $region92
      $region91: #{decoder_forward.1} parent=5 // pred_region
        %s519 = ssub.s32 %s27, 1
        %p520 = scmp.lt.s32.totalorder %s32, 1
        %s521 = scalar_select %p520, %s32, 1
        %s522 = smul.addr %s521, 8
        %s523 = scalar_lea.vmem %s0, %s522
        %p524 = pneg %p53
        %p525 = pneg %p50
        %p526 = pneg %p74
        %p527 = pneg %p71
        %p528 = pneg %p95
        %p529 = pneg %p92
        %p530 = pneg %p116
        %p531 = pneg %p113
        %p532 = pneg %p137
        %p533 = pneg %p134
        %p534 = pneg %p158
        %p535 = pneg %p155
        %p536 = pneg %p179
        %p537 = pneg %p176
        %p538 = pneg %p200
        %p539 = pneg %p197
        %p540 = pneg %p221
        %p541 = pneg %p218
        %p542 = pneg %p242
        %p543 = pneg %p239
        %p544 = pneg %p263
        %p545 = pneg %p260
        %p546 = pneg %p284
        %p547 = pneg %p281
        %p548 = pneg %p305
        %p549 = pneg %p302
        %p550 = pneg %p326
        %p551 = pneg %p323
        %p552 = pneg %p347
        %p553 = pneg %p344
        %p554 = pneg %p368
        %p555 = pneg %p365
        %p556 = pneg %p389
        %p557 = pneg %p386
        %p558 = pneg %p410
        %p559 = pneg %p407
        %p560 = pneg %p436
        %p561 = pneg %p433
        %s562 = sand.u32 %s423, 1
        %s563 = scalar_lea.sflag [#allocation3], %s562
        %s564 = sand.u32 %s423, 1
        %s565 = smul.addr %s564, 8
        %s566 = scalar_lea.vmem [#allocation2], %s565
        %p567 = scmp.lt.s32.totalorder %s32, 1
        %s568 = scalar_select %p567, %s32, 1
        %s569 = smul.addr %s568, 8
        %s570 = scalar_lea.vmem %s0, %s569
        %v572 = vld [vmem:[%s570] sm:$0xff]
        %v573 = vlaneseq
        %v574 = vand.u32 %v573, 127
        %575 = vset.pattern.permute.xlu0 0
        %576 = vperm.xlu0 %575, %v572
        %v577 = vpop.permute.xlu0 %576
        %vm578 = vcmp.eq.s32.totalorder %v574, %v577
        %v579 = vsel %vm578, 1, 0
        %v580 = vcvt.s32.f32 %v579
        %v581 = vpack.c.bf16 %v580, %v580
        %v582 = vld [vmem:[%s1] sm:$0xf]
        %v583 = vld [vmem:[%s1 + $0x4] sm:$0xf]
        %v584 = vld [vmem:[%s1 + $0x8] sm:$0xf]
        %v585 = vld [vmem:[%s1 + $0xc] sm:$0xf]
        %v586 = vld [vmem:[%s1 + $0x10] sm:$0xf]
        %v587 = vld [vmem:[%s1 + $0x14] sm:$0xf]
        %v588 = vld [vmem:[%s1 + $0x18] sm:$0xf]
        %v589 = vld [vmem:[%s1 + $0x1c] sm:$0xf]
        %v590 = vld [vmem:[%s1 + $0x20] sm:$0xf]
        %v591 = vld [vmem:[%s1 + $0x24] sm:$0xf]
        %v592 = vld [vmem:[%s1 + $0x28] sm:$0xf]
        %v593 = vld [vmem:[%s1 + $0x2c] sm:$0xf]
        %v594 = vld [vmem:[%s1 + $0x30] sm:$0xf]
        %v595 = vld [vmem:[%s1 + $0x34] sm:$0xf]
        %v596 = vld [vmem:[%s1 + $0x38] sm:$0xf]
        %v597 = vld [vmem:[%s1 + $0x3c] sm:$0xf]
        %v598 = vld [vmem:[%s2] sm:$0xff]
        %v615 = vunpack.c.l.b16 %v582
        %v616 = vunpack.c.l.b16 %v583
        %v617 = vunpack.c.l.b16 %v584
        %v618 = vunpack.c.l.b16 %v585
        %v619 = vunpack.c.l.b16 %v586
        %v620 = vunpack.c.l.b16 %v587
        %v621 = vunpack.c.l.b16 %v588
        %v622 = vunpack.c.l.b16 %v589
        %v623 = vunpack.c.l.b16 %v590
        %v624 = vunpack.c.l.b16 %v591
        %v625 = vunpack.c.l.b16 %v592
        %v626 = vunpack.c.l.b16 %v593
        %v627 = vunpack.c.l.b16 %v594
        %v628 = vunpack.c.l.b16 %v595
        %v629 = vunpack.c.l.b16 %v596
        %v630 = vunpack.c.l.b16 %v597
        %v631 = vpack.c.b16 %v616, %v615
        %v632 = vpack.c.b16 %v618, %v617
        %v633 = vpack.c.b16 %v620, %v619
        %v634 = vpack.c.b16 %v622, %v621
        %v635 = vpack.c.b16 %v624, %v623
        %v636 = vpack.c.b16 %v626, %v625
        %v637 = vpack.c.b16 %v628, %v627
        %v638 = vpack.c.b16 %v630, %v629
        %647 = vmatprep.subr.bf16.mxu0 0
        %648 = vmatpush1.bf16.msra.mxu0 %v631
        %649 = vmatprep.subr.bf16.mxu0 0
        %650 = vmatpush1.bf16.msra.mxu0 %v632
        %651 = vmatprep.subr.bf16.mxu0 0
        %652 = vmatpush1.bf16.msra.mxu0 %v633
        %653 = vmatprep.subr.bf16.mxu0 0
        %654 = vmatpush1.bf16.msra.mxu0 %v634
        %655 = vmatprep.subr.bf16.mxu0 0
        %656 = vmatpush1.bf16.msra.mxu0 %v635
        %657 = vmatprep.subr.bf16.mxu0 0
        %658 = vmatpush1.bf16.msra.mxu0 %v636
        %659 = vmatprep.subr.bf16.mxu0 0
        %660 = vmatpush1.bf16.msra.mxu0 %v637
        %661 = vmatprep.subr.bf16.mxu0 0
        %662 = vmatpush1.bf16.msra.mxu0 %v638
        %663 = vmatprep.subr.bf16.mxu0 0
        %664 = vmatpush1.bf16.msra.mxu0 0
        %665 = vmatprep.subr.bf16.mxu0 0
        %666 = vmatpush1.bf16.msra.mxu0 0
        %667 = vmatprep.subr.bf16.mxu0 0
        %668 = vmatpush1.bf16.msra.mxu0 0
        %669 = vmatprep.subr.bf16.mxu0 0
        %670 = vmatpush1.bf16.msra.mxu0 0
        %671 = vmatprep.subr.bf16.mxu0 0
        %672 = vmatpush1.bf16.msra.mxu0 0
        %673 = vmatprep.subr.bf16.mxu0 0
        %674 = vmatpush1.bf16.msra.mxu0 0
        %675 = vmatprep.subr.bf16.mxu0 0
        %676 = vmatpush1.bf16.msra.mxu0 0
        %677 = vmatprep.subr.bf16.mxu0 0
        %678 = vmatpush1.bf16.msra.mxu0 0
        %679 = vmatprep.mubr.bf16.mxu0 0
        %680 = vmatmul.mubr.bf16.gmra.mrb[0].mxu0 %v581
        %v681 = vpop.f32.mrb[0].mxu0
        %v682 = vadd.f32 %v598, %v681
        %v683 = vpop.f32.mrb[0].mxu0
        %v684 = vpop.f32.mrb[0].mxu0
        %v685 = vpop.f32.mrb[0].mxu0
        %686 = vdwg.mxu0
        %v687 = vlaneseq
        %v688 = vshrl.u32 %v687, 7
        %vm689 = vcmp.le.s32.totalorder %v574, %v688
        %v690 = vld [vmem:[%s3] sm:$0x1]
        %v691 = vld [vmem:[%s4] sm:$0x1]
        %vm692 = vcmask 261120
        %v693 = vsel %vm692, %v682, 0.0
        %694 = vadd.xlane.f32.xlu0 %v693
        %v695 = vpop.xlane.xlu0 %694
        %v696 = vrcp.pop 32.0
        %v697 = vmul.f32 %v695, %v696
        %v698 = vsub.f32 %v682, %v697
        %v699 = vmul.f32 %v698, %v698
        %v700 = vsel %vm692, %v699, 0.0
        %701 = vadd.xlane.f32.xlu0 %v700
        %v702 = vpop.xlane.xlu0 %701
        %v703 = vmul.f32 %v702, %v696
        %v704 = vadd.f32 %v703, 1e-05
        %v705 = vrsqrt.pop %v704
        %v706 = vmul.f32 %v698, %v705
        %v707 = vlaneseq
        %v708 = vshrl.u32 %v707, 7
        %v709 = vsub.s32 0, %v708
        %v710 = vrot.slane %v690, %v709
        %v711 = vmul.f32 %v706, %v710
        %v712 = vlaneseq
        %v713 = vshrl.u32 %v712, 7
        %v714 = vsub.s32 0, %v713
        %v715 = vrot.slane %v691, %v714
        %v716 = vadd.f32 %v711, %v715
        %v717 = vpack.c.bf16 %v716, %v716
        %v718 = vld [vmem:[%s5] sm:$0xf]
        %v719 = vld [vmem:[%s5 + $0x4] sm:$0xf]
        %v720 = vld [vmem:[%s5 + $0x8] sm:$0xf]
        %v721 = vld [vmem:[%s5 + $0xc] sm:$0xf]
        %v726 = vunpack.c.l.b16 %v718
        %v727 = vunpack.c.l.b16 %v719
        %v728 = vunpack.c.l.b16 %v720
        %v729 = vunpack.c.l.b16 %v721
        %v730 = vpack.c.b16 %v727, %v726
        %v731 = vpack.c.b16 %v729, %v728
        %v735 = vsel %vm692, %v717, 0
        %737 = vmatprep.subr.bf16.mxu0 0
        %738 = vmatpush1.bf16.msra.mxu0 %v730
        %739 = vmatprep.subr.bf16.mxu0 0
        %740 = vmatpush1.bf16.msra.mxu0 %v731
        %741 = vmatprep.subr.bf16.mxu0 0
        %742 = vmatpush1.bf16.msra.mxu0 0
        %743 = vmatprep.subr.bf16.mxu0 0
        %744 = vmatpush1.bf16.msra.mxu0 0
        %745 = vmatprep.subr.bf16.mxu0 0
        %746 = vmatpush1.bf16.msra.mxu0 0
        %747 = vmatprep.subr.bf16.mxu0 0
        %748 = vmatpush1.bf16.msra.mxu0 0
        %749 = vmatprep.subr.bf16.mxu0 0
        %750 = vmatpush1.bf16.msra.mxu0 0
        %751 = vmatprep.subr.bf16.mxu0 0
        %752 = vmatpush1.bf16.msra.mxu0 0
        %753 = vmatprep.subr.bf16.mxu0 0
        %754 = vmatpush1.bf16.msra.mxu0 0
        %755 = vmatprep.subr.bf16.mxu0 0
        %756 = vmatpush1.bf16.msra.mxu0 0
        %757 = vmatprep.subr.bf16.mxu0 0
        %758 = vmatpush1.bf16.msra.mxu0 0
        %759 = vmatprep.subr.bf16.mxu0 0
        %760 = vmatpush1.bf16.msra.mxu0 0
        %761 = vmatprep.subr.bf16.mxu0 0
        %762 = vmatpush1.bf16.msra.mxu0 0
        %763 = vmatprep.subr.bf16.mxu0 0
        %764 = vmatpush1.bf16.msra.mxu0 0
        %765 = vmatprep.subr.bf16.mxu0 0
        %766 = vmatpush1.bf16.msra.mxu0 0
        %767 = vmatprep.subr.bf16.mxu0 0
        %768 = vmatpush1.bf16.msra.mxu0 0
        %769 = vmatprep.mubr.bf16.mxu0 0
        %770 = vmatmul.mubr.bf16.gmra.mrb[0].mxu0 %v735
        %v771 = vpop.f32.mrb[0].mxu0
        %v772 = vadd.f32 0.0, %v771
        %v773 = vpop.f32.mrb[0].mxu0
        %v774 = vpop.f32.mrb[0].mxu0
        %v775 = vpop.f32.mrb[0].mxu0
        %776 = vdwg.mxu0
        %v777 = vld [vmem:[%s6] sm:$0xf]
        %v778 = vld [vmem:[%s6 + $0x4] sm:$0xf]
        %v779 = vld [vmem:[%s6 + $0x8] sm:$0xf]
        %v780 = vld [vmem:[%s6 + $0xc] sm:$0xf]
        %v781 = vmul.f32 %v772, 0.35355338
        %v782 = vpack.c.bf16 %v781, %v781
        %v783 = vpack.c.bf16 %v772, %v772
        %785 = vrot.lane.b32.xlu0 %v783, 120
        %v786 = vpop.permute.xlu0 %785
        %vm787 = vcmask 64512
        %v789 = vsel %vm787, %v782, 0
        %v792 = vsel %vm787, %v786, 0
        %794 = vmatprep.subr.bf16.mxu0 0
        %795 = vmatpush1.bf16.xpose.msra.mxu0 %v792
        %796 = vmatprep.subr.bf16.mxu0 0
        %797 = vmatpush1.bf16.xpose.msra.mxu0 0
        %798 = vmatprep.subr.bf16.mxu0 0
        %799 = vmatpush1.bf16.xpose.msra.mxu0 0
        %800 = vmatprep.subr.bf16.mxu0 0
        %801 = vmatpush1.bf16.xpose.msra.mxu0 0
        %802 = vmatprep.subr.bf16.mxu0 0
        %803 = vmatpush1.bf16.xpose.msra.mxu0 0
        %804 = vmatprep.subr.bf16.mxu0 0
        %805 = vmatpush1.bf16.xpose.msra.mxu0 0
        %806 = vmatprep.subr.bf16.mxu0 0
        %807 = vmatpush1.bf16.xpose.msra.mxu0 0
        %808 = vmatprep.subr.bf16.mxu0 0
        %809 = vmatpush1.bf16.xpose.msra.mxu0 0
        %810 = vmatprep.subr.bf16.mxu0 0
        %811 = vmatpush1.bf16.xpose.msra.mxu0 0
        %812 = vmatprep.subr.bf16.mxu0 0
        %813 = vmatpush1.bf16.xpose.msra.mxu0 0
        %814 = vmatprep.subr.bf16.mxu0 0
        %815 = vmatpush1.bf16.xpose.msra.mxu0 0
        %816 = vmatprep.subr.bf16.mxu0 0
        %817 = vmatpush1.bf16.xpose.msra.mxu0 0
        %818 = vmatprep.subr.bf16.mxu0 0
        %819 = vmatpush1.bf16.xpose.msra.mxu0 0
        %820 = vmatprep.subr.bf16.mxu0 0
        %821 = vmatpush1.bf16.xpose.msra.mxu0 0
        %822 = vmatprep.subr.bf16.mxu0 0
        %823 = vmatpush1.bf16.xpose.msra.mxu0 0
        %824 = vmatprep.subr.bf16.mxu0 0
        %825 = vmatpush1.bf16.xpose.msra.mxu0 0
        %826 = vmatprep.mubr.bf16.mxu0 0
        %827 = vmatmul.mubr.bf16.gmra.mrb[0].mxu0 %v789
        %v828 = vpop.f32.mrb[0].mxu0
        %v829 = vadd.f32 0.0, %v828
        %v830 = vpop.f32.mrb[0].mxu0
        %v831 = vpop.f32.mrb[0].mxu0
        %v832 = vpop.f32.mrb[0].mxu0
        %833 = vdwg.mxu0
        %v834 = vsel %vm689, %v829, -1e+30
        %v835 = vsel %vm787, %v834, -inf
        %836 = vmax.xlane.f32.xlu0 %v835
        %v837 = vpop.xlane.xlu0 %836
        %v838 = vsub.f32 %v834, %v837
        %v839 = vmul.f32 %v838, 1.442695
        %v840 = vpow.pop %v839
        %v841 = vsel %vm787, %v840, 0.0
        %842 = vadd.xlane.f32.xlu0 %v841
        %v843 = vpop.xlane.xlu0 %842
        %v844 = vrcp.pop %v843
        %v845 = vmul.f32 %v840, %v844
        %v846 = vpack.c.bf16 %v845, %v845
        %847 = vrot.lane.b32.xlu0 %v783, 112
        %v848 = vpop.permute.xlu0 %847
        %v850 = vsel %vm787, %v846, 0
        %vm852 = vcmask 1043456
        %v854 = vsel %vm852, %v848, 0
        %856 = vmatprep.subr.bf16.mxu0 0
        %857 = vmatpush1.bf16.msra.mxu0 %v854
        %858 = vmatprep.subr.bf16.mxu0 0
        %859 = vmatpush1.bf16.msra.mxu0 0
        %860 = vmatprep.subr.bf16.mxu0 0
        %861 = vmatpush1.bf16.msra.mxu0 0
        %862 = vmatprep.subr.bf16.mxu0 0
        %863 = vmatpush1.bf16.msra.mxu0 0
        %864 = vmatprep.subr.bf16.mxu0 0
        %865 = vmatpush1.bf16.msra.mxu0 0
        %866 = vmatprep.subr.bf16.mxu0 0
        %867 = vmatpush1.bf16.msra.mxu0 0
        %868 = vmatprep.subr.bf16.mxu0 0
        %869 = vmatpush1.bf16.msra.mxu0 0
        %870 = vmatprep.subr.bf16.mxu0 0
        %871 = vmatpush1.bf16.msra.mxu0 0
        %872 = vmatprep.subr.bf16.mxu0 0
        %873 = vmatpush1.bf16.msra.mxu0 0
        %874 = vmatprep.subr.bf16.mxu0 0
        %875 = vmatpush1.bf16.msra.mxu0 0
        %876 = vmatprep.subr.bf16.mxu0 0
        %877 = vmatpush1.bf16.msra.mxu0 0
        %878 = vmatprep.subr.bf16.mxu0 0
        %879 = vmatpush1.bf16.msra.mxu0 0
        %880 = vmatprep.subr.bf16.mxu0 0
        %881 = vmatpush1.bf16.msra.mxu0 0
        %882 = vmatprep.subr.bf16.mxu0 0
        %883 = vmatpush1.bf16.msra.mxu0 0
        %884 = vmatprep.subr.bf16.mxu0 0
        %885 = vmatpush1.bf16.msra.mxu0 0
        %886 = vmatprep.subr.bf16.mxu0 0
        %887 = vmatpush1.bf16.msra.mxu0 0
        %888 = vmatprep.mubr.bf16.mxu0 0
        %889 = vmatmul.mubr.bf16.gmra.mrb[0].mxu0 %v850
        %v890 = vpop.f32.mrb[0].mxu0
        %v891 = vadd.f32 0.0, %v890
        %v892 = vpop.f32.mrb[0].mxu0
        %v893 = vpop.f32.mrb[0].mxu0
        %v894 = vpop.f32.mrb[0].mxu0
        %895 = vdwg.mxu0
        %v896 = vpack.c.bf16 %v891, %v891
        %898 = vrot.lane.b32.xlu0 %v782, 104
        %v899 = vpop.permute.xlu0 %898
        %900 = vrot.lane.b32.xlu0 %v783, 96
        %v901 = vpop.permute.xlu0 %900
        %v903 = vsel %vm787, %v899, 0
        %v906 = vsel %vm787, %v901, 0
        %908 = vmatprep.subr.bf16.mxu0 0
        %909 = vmatpush1.bf16.xpose.msra.mxu0 %v906
        %910 = vmatprep.subr.bf16.mxu0 0
        %911 = vmatpush1.bf16.xpose.msra.mxu0 0
        %912 = vmatprep.subr.bf16.mxu0 0
        %913 = vmatpush1.bf16.xpose.msra.mxu0 0
        %914 = vmatprep.subr.bf16.mxu0 0
        %915 = vmatpush1.bf16.xpose.msra.mxu0 0
        %916 = vmatprep.subr.bf16.mxu0 0
        %917 = vmatpush1.bf16.xpose.msra.mxu0 0
        %918 = vmatprep.subr.bf16.mxu0 0
        %919 = vmatpush1.bf16.xpose.msra.mxu0 0
        %920 = vmatprep.subr.bf16.mxu0 0
        %921 = vmatpush1.bf16.xpose.msra.mxu0 0
        %922 = vmatprep.subr.bf16.mxu0 0
        %923 = vmatpush1.bf16.xpose.msra.mxu0 0
        %924 = vmatprep.subr.bf16.mxu0 0
        %925 = vmatpush1.bf16.xpose.msra.mxu0 0
        %926 = vmatprep.subr.bf16.mxu0 0
        %927 = vmatpush1.bf16.xpose.msra.mxu0 0
        %928 = vmatprep.subr.bf16.mxu0 0
        %929 = vmatpush1.bf16.xpose.msra.mxu0 0
        %930 = vmatprep.subr.bf16.mxu0 0
        %931 = vmatpush1.bf16.xpose.msra.mxu0 0
        %932 = vmatprep.subr.bf16.mxu0 0
        %933 = vmatpush1.bf16.xpose.msra.mxu0 0
        %934 = vmatprep.subr.bf16.mxu0 0
        %935 = vmatpush1.bf16.xpose.msra.mxu0 0
        %936 = vmatprep.subr.bf16.mxu0 0
        %937 = vmatpush1.bf16.xpose.msra.mxu0 0
        %938 = vmatprep.subr.bf16.mxu0 0
        %939 = vmatpush1.bf16.xpose.msra.mxu0 0
        %940 = vmatprep.mubr.bf16.mxu0 0
        %941 = vmatmul.mubr.bf16.gmra.mrb[0].mxu0 %v903
        %v942 = vpop.f32.mrb[0].mxu0
        %v943 = vadd.f32 0.0, %v942
        %v944 = vpop.f32.mrb[0].mxu0
        %v945 = vpop.f32.mrb[0].mxu0
        %v946 = vpop.f32.mrb[0].mxu0
        %947 = vdwg.mxu0
        %v948 = vsel %vm689, %v943, -1e+30
        %v949 = vsel %vm787, %v948, -inf
        %950 = vmax.xlane.f32.xlu0 %v949
        %v951 = vpop.xlane.xlu0 %950
        %v952 = vsub.f32 %v948, %v951
        %v953 = vmul.f32 %v952, 1.442695
        %v954 = vpow.pop %v953
        %v955 = vsel %vm787, %v954, 0.0
        %956 = vadd.xlane.f32.xlu0 %v955
        %v957 = vpop.xlane.xlu0 %956
        %v958 = vrcp.pop %v957
        %v959 = vmul.f32 %v954, %v958
        %v960 = vpack.c.bf16 %v959, %v959
        %961 = vrot.lane.b32.xlu0 %v783, 88
        %v962 = vpop.permute.xlu0 %961
        %v964 = vsel %vm787, %v960, 0
        %v967 = vsel %vm852, %v962, 0
        %969 = vmatprep.subr.bf16.mxu0 0
        %970 = vmatpush1.bf16.msra.mxu0 %v967
        %971 = vmatprep.subr.bf16.mxu0 0
        %972 = vmatpush1.bf16.msra.mxu0 0
        %973 = vmatprep.subr.bf16.mxu0 0
        %974 = vmatpush1.bf16.msra.mxu0 0
        %975 = vmatprep.subr.bf16.mxu0 0
        %976 = vmatpush1.bf16.msra.mxu0 0
        %977 = vmatprep.subr.bf16.mxu0 0
        %978 = vmatpush1.bf16.msra.mxu0 0
        %979 = vmatprep.subr.bf16.mxu0 0
        %980 = vmatpush1.bf16.msra.mxu0 0
        %981 = vmatprep.subr.bf16.mxu0 0
        %982 = vmatpush1.bf16.msra.mxu0 0
        %983 = vmatprep.subr.bf16.mxu0 0
        %984 = vmatpush1.bf16.msra.mxu0 0
        %985 = vmatprep.subr.bf16.mxu0 0
        %986 = vmatpush1.bf16.msra.mxu0 0
        %987 = vmatprep.subr.bf16.mxu0 0
        %988 = vmatpush1.bf16.msra.mxu0 0
        %989 = vmatprep.subr.bf16.mxu0 0
        %990 = vmatpush1.bf16.msra.mxu0 0
        %991 = vmatprep.subr.bf16.mxu0 0
        %992 = vmatpush1.bf16.msra.mxu0 0
        %993 = vmatprep.subr.bf16.mxu0 0
        %994 = vmatpush1.bf16.msra.mxu0 0
        %995 = vmatprep.subr.bf16.mxu0 0
        %996 = vmatpush1.bf16.msra.mxu0 0
        %997 = vmatprep.subr.bf16.mxu0 0
        %998 = vmatpush1.bf16.msra.mxu0 0
        %999 = vmatprep.subr.bf16.mxu0 0
        %1000 = vmatpush1.bf16.msra.mxu0 0
        %1001 = vmatprep.mubr.bf16.mxu0 0
        %1002 = vmatmul.mubr.bf16.gmra.mrb[0].mxu0 %v964
        %v1003 = vpop.f32.mrb[0].mxu0
        %v1004 = vadd.f32 0.0, %v1003
        %v1005 = vpop.f32.mrb[0].mxu0
        %v1006 = vpop.f32.mrb[0].mxu0
        %v1007 = vpop.f32.mrb[0].mxu0
        %1008 = vdwg.mxu0
        %v1009 = vpack.c.bf16 %v1004, %v1004
        %v1011 = vsel %vm787, %v1009, 0
        %v1014 = vsel %vm852, %v778, 0
        %1016 = vmatprep.subr.bf16.mxu0 0
        %1017 = vmatpush1.bf16.msra.mxu0 %v1014
        %1018 = vmatprep.subr.bf16.mxu0 0
        %1019 = vmatpush1.bf16.msra.mxu0 0
        %1020 = vmatprep.subr.bf16.mxu0 0
        %1021 = vmatpush1.bf16.msra.mxu0 0
        %1022 = vmatprep.subr.bf16.mxu0 0
        %1023 = vmatpush1.bf16.msra.mxu0 0
        %1024 = vmatprep.subr.bf16.mxu0 0
        %1025 = vmatpush1.bf16.msra.mxu0 0
        %1026 = vmatprep.subr.bf16.mxu0 0
        %1027 = vmatpush1.bf16.msra.mxu0 0
        %1028 = vmatprep.subr.bf16.mxu0 0
        %1029 = vmatpush1.bf16.msra.mxu0 0
        %1030 = vmatprep.subr.bf16.mxu0 0
        %1031 = vmatpush1.bf16.msra.mxu0 0
        %1032 = vmatprep.subr.bf16.mxu0 0
        %1033 = vmatpush1.bf16.msra.mxu0 0
        %1034 = vmatprep.subr.bf16.mxu0 0
        %1035 = vmatpush1.bf16.msra.mxu0 0
        %1036 = vmatprep.subr.bf16.mxu0 0
        %1037 = vmatpush1.bf16.msra.mxu0 0
        %1038 = vmatprep.subr.bf16.mxu0 0
        %1039 = vmatpush1.bf16.msra.mxu0 0
        %1040 = vmatprep.subr.bf16.mxu0 0
        %1041 = vmatpush1.bf16.msra.mxu0 0
        %1042 = vmatprep.subr.bf16.mxu0 0
        %1043 = vmatpush1.bf16.msra.mxu0 0
        %1044 = vmatprep.subr.bf16.mxu0 0
        %1045 = vmatpush1.bf16.msra.mxu0 0
        %1046 = vmatprep.subr.bf16.mxu0 0
        %1047 = vmatpush1.bf16.msra.mxu0 0
        %1048 = vmatprep.mubr.bf16.mxu0 0
        %1049 = vmatmul.mubr.bf16.gmra.mrb[0].mxu0 %v1011
        %v1050 = vpop.f32.mrb[0].mxu0
        %v1051 = vadd.f32 0.0, %v1050
        %v1052 = vpop.f32.mrb[0].mxu0
        %v1053 = vpop.f32.mrb[0].mxu0
        %v1054 = vpop.f32.mrb[0].mxu0
        %1055 = vdwg.mxu0
        %v1057 = vsel %vm787, %v896, 0
        %v1060 = vsel %vm852, %v777, 0
        %1062 = vmatprep.subr.bf16.mxu0 0
        %1063 = vmatpush1.bf16.msra.mxu0 %v1060
        %1064 = vmatprep.subr.bf16.mxu0 0
        %1065 = vmatpush1.bf16.msra.mxu0 0
        %1066 = vmatprep.subr.bf16.mxu0 0
        %1067 = vmatpush1.bf16.msra.mxu0 0
        %1068 = vmatprep.subr.bf16.mxu0 0
        %1069 = vmatpush1.bf16.msra.mxu0 0
        %1070 = vmatprep.subr.bf16.mxu0 0
        %1071 = vmatpush1.bf16.msra.mxu0 0
        %1072 = vmatprep.subr.bf16.mxu0 0
        %1073 = vmatpush1.bf16.msra.mxu0 0
        %1074 = vmatprep.subr.bf16.mxu0 0
        %1075 = vmatpush1.bf16.msra.mxu0 0
        %1076 = vmatprep.subr.bf16.mxu0 0
        %1077 = vmatpush1.bf16.msra.mxu0 0
        %1078 = vmatprep.subr.bf16.mxu0 0
        %1079 = vmatpush1.bf16.msra.mxu0 0
        %1080 = vmatprep.subr.bf16.mxu0 0
        %1081 = vmatpush1.bf16.msra.mxu0 0
        %1082 = vmatprep.subr.bf16.mxu0 0
        %1083 = vmatpush1.bf16.msra.mxu0 0
        %1084 = vmatprep.subr.bf16.mxu0 0
        %1085 = vmatpush1.bf16.msra.mxu0 0
        %1086 = vmatprep.subr.bf16.mxu0 0
        %1087 = vmatpush1.bf16.msra.mxu0 0
        %1088 = vmatprep.subr.bf16.mxu0 0
        %1089 = vmatpush1.bf16.msra.mxu0 0
        %1090 = vmatprep.subr.bf16.mxu0 0
        %1091 = vmatpush1.bf16.msra.mxu0 0
        %1092 = vmatprep.subr.bf16.mxu0 0
        %1093 = vmatpush1.bf16.msra.mxu0 0
        %1094 = vmatprep.mubr.bf16.mxu0 0
        %1095 = vmatmul.mubr.bf16.gmra.mrb[0].mxu0 %v1057
        %v1096 = vpop.f32.mrb[0].mxu0
        %v1097 = vadd.f32 %v1051, %v1096
        %v1098 = vpop.f32.mrb[0].mxu0
        %v1099 = vpop.f32.mrb[0].mxu0
        %v1100 = vpop.f32.mrb[0].mxu0
        %1101 = vdwg.mxu0
        %1102 = vrot.lane.b32.xlu0 %v782, 80
        %v1103 = vpop.permute.xlu0 %1102
        %1104 = vrot.lane.b32.xlu0 %v783, 72
        %v1105 = vpop.permute.xlu0 %1104
        %v1107 = vsel %vm787, %v1103, 0
        %v1110 = vsel %vm787, %v1105, 0
        %1112 = vmatprep.subr.bf16.mxu0 0
        %1113 = vmatpush1.bf16.xpose.msra.mxu0 %v1110
        %1114 = vmatprep.subr.bf16.mxu0 0
        %1115 = vmatpush1.bf16.xpose.msra.mxu0 0
        %1116 = vmatprep.subr.bf16.mxu0 0
        %1117 = vmatpush1.bf16.xpose.msra.mxu0 0
        %1118 = vmatprep.subr.bf16.mxu0 0
        %1119 = vmatpush1.bf16.xpose.msra.mxu0 0
        %1120 = vmatprep.subr.bf16.mxu0 0
        %1121 = vmatpush1.bf16.xpose.msra.mxu0 0
        %1122 = vmatprep.subr.bf16.mxu0 0
        %1123 = vmatpush1.bf16.xpose.msra.mxu0 0
        %1124 = vmatprep.subr.bf16.mxu0 0
        %1125 = vmatpush1.bf16.xpose.msra.mxu0 0
        %1126 = vmatprep.subr.bf16.mxu0 0
        %1127 = vmatpush1.bf16.xpose.msra.mxu0 0
        %1128 = vmatprep.subr.bf16.mxu0 0
        %1129 = vmatpush1.bf16.xpose.msra.mxu0 0
        %1130 = vmatprep.subr.bf16.mxu0 0
        %1131 = vmatpush1.bf16.xpose.msra.mxu0 0
        %1132 = vmatprep.subr.bf16.mxu0 0
        %1133 = vmatpush1.bf16.xpose.msra.mxu0 0
        %1134 = vmatprep.subr.bf16.mxu0 0
        %1135 = vmatpush1.bf16.xpose.msra.mxu0 0
        %1136 = vmatprep.subr.bf16.mxu0 0
        %1137 = vmatpush1.bf16.xpose.msra.mxu0 0
        %1138 = vmatprep.subr.bf16.mxu0 0
        %1139 = vmatpush1.bf16.xpose.msra.mxu0 0
        %1140 = vmatprep.subr.bf16.mxu0 0
        %1141 = vmatpush1.bf16.xpose.msra.mxu0 0
        %1142 = vmatprep.subr.bf16.mxu0 0
        %1143 = vmatpush1.bf16.xpose.msra.mxu0 0
        %1144 = vmatprep.mubr.bf16.mxu0 0
        %1145 = vmatmul.mubr.bf16.gmra.mrb[0].mxu0 %v1107
        %v1146 = vpop.f32.mrb[0].mxu0
        %v1147 = vadd.f32 0.0, %v1146
        %v1148 = vpop.f32.mrb[0].mxu0
        %v1149 = vpop.f32.mrb[0].mxu0
        %v1150 = vpop.f32.mrb[0].mxu0
        %1151 = vdwg.mxu0
        %v1152 = vsel %vm689, %v1147, -1e+30
        %v1153 = vsel %vm787, %v1152, -inf
        %1154 = vmax.xlane.f32.xlu0 %v1153
        %v1155 = vpop.xlane.xlu0 %1154
        %v1156 = vsub.f32 %v1152, %v1155
        %v1157 = vmul.f32 %v1156, 1.442695
        %v1158 = vpow.pop %v1157
        %v1159 = vsel %vm787, %v1158, 0.0
        %1160 = vadd.xlane.f32.xlu0 %v1159
        %v1161 = vpop.xlane.xlu0 %1160
        %v1162 = vrcp.pop %v1161
        %v1163 = vmul.f32 %v1158, %v1162
        %v1164 = vpack.c.bf16 %v1163, %v1163
        %1165 = vrot.lane.b32.xlu0 %v783, 64
        %v1166 = vpop.permute.xlu0 %1165
        %v1168 = vsel %vm787, %v1164, 0
        %v1171 = vsel %vm852, %v1166, 0
        %1173 = vmatprep.subr.bf16.mxu0 0
        %1174 = vmatpush1.bf16.msra.mxu0 %v1171
        %1175 = vmatprep.subr.bf16.mxu0 0
        %1176 = vmatpush1.bf16.msra.mxu0 0
        %1177 = vmatprep.subr.bf16.mxu0 0
        %1178 = vmatpush1.bf16.msra.mxu0 0
        %1179 = vmatprep.subr.bf16.mxu0 0
        %1180 = vmatpush1.bf16.msra.mxu0 0
        %1181 = vmatprep.subr.bf16.mxu0 0
        %1182 = vmatpush1.bf16.msra.mxu0 0
        %1183 = vmatprep.subr.bf16.mxu0 0
        %1184 = vmatpush1.bf16.msra.mxu0 0
        %1185 = vmatprep.subr.bf16.mxu0 0
        %1186 = vmatpush1.bf16.msra.mxu0 0
        %1187 = vmatprep.subr.bf16.mxu0 0
        %1188 = vmatpush1.bf16.msra.mxu0 0
        %1189 = vmatprep.subr.bf16.mxu0 0
        %1190 = vmatpush1.bf16.msra.mxu0 0
        %1191 = vmatprep.subr.bf16.mxu0 0
        %1192 = vmatpush1.bf16.msra.mxu0 0
        %1193 = vmatprep.subr.bf16.mxu0 0
        %1194 = vmatpush1.bf16.msra.mxu0 0
        %1195 = vmatprep.subr.bf16.mxu0 0
        %1196 = vmatpush1.bf16.msra.mxu0 0
        %1197 = vmatprep.subr.bf16.mxu0 0
        %1198 = vmatpush1.bf16.msra.mxu0 0
        %1199 = vmatprep.subr.bf16.mxu0 0
        %1200 = vmatpush1.bf16.msra.mxu0 0
        %1201 = vmatprep.subr.bf16.mxu0 0
        %1202 = vmatpush1.bf16.msra.mxu0 0
        %1203 = vmatprep.subr.bf16.mxu0 0
        %1204 = vmatpush1.bf16.msra.mxu0 0
        %1205 = vmatprep.mubr.bf16.mxu0 0
        %1206 = vmatmul.mubr.bf16.gmra.mrb[0].mxu0 %v1168
        %v1207 = vpop.f32.mrb[0].mxu0
        %v1208 = vadd.f32 0.0, %v1207
        %v1209 = vpop.f32.mrb[0].mxu0
        %v1210 = vpop.f32.mrb[0].mxu0
        %v1211 = vpop.f32.mrb[0].mxu0
        %1212 = vdwg.mxu0
        %v1213 = vpack.c.bf16 %v1208, %v1208
        %v1215 = vsel %vm787, %v1213, 0
        %v1218 = vsel %vm852, %v779, 0
        %1220 = vmatprep.subr.bf16.mxu0 0
        %1221 = vmatpush1.bf16.msra.mxu0 %v1218
        %1222 = vmatprep.subr.bf16.mxu0 0
        %1223 = vmatpush1.bf16.msra.mxu0 0
        %1224 = vmatprep.subr.bf16.mxu0 0
        %1225 = vmatpush1.bf16.msra.mxu0 0
        %1226 = vmatprep.subr.bf16.mxu0 0
        %1227 = vmatpush1.bf16.msra.mxu0 0
        %1228 = vmatprep.subr.bf16.mxu0 0
        %1229 = vmatpush1.bf16.msra.mxu0 0
        %1230 = vmatprep.subr.bf16.mxu0 0
        %1231 = vmatpush1.bf16.msra.mxu0 0
        %1232 = vmatprep.subr.bf16.mxu0 0
        %1233 = vmatpush1.bf16.msra.mxu0 0
        %1234 = vmatprep.subr.bf16.mxu0 0
        %1235 = vmatpush1.bf16.msra.mxu0 0
        %1236 = vmatprep.subr.bf16.mxu0 0
        %1237 = vmatpush1.bf16.msra.mxu0 0
        %1238 = vmatprep.subr.bf16.mxu0 0
        %1239 = vmatpush1.bf16.msra.mxu0 0
        %1240 = vmatprep.subr.bf16.mxu0 0
        %1241 = vmatpush1.bf16.msra.mxu0 0
        %1242 = vmatprep.subr.bf16.mxu0 0
        %1243 = vmatpush1.bf16.msra.mxu0 0
        %1244 = vmatprep.subr.bf16.mxu0 0
        %1245 = vmatpush1.bf16.msra.mxu0 0
        %1246 = vmatprep.subr.bf16.mxu0 0
        %1247 = vmatpush1.bf16.msra.mxu0 0
        %1248 = vmatprep.subr.bf16.mxu0 0
        %1249 = vmatpush1.bf16.msra.mxu0 0
        %1250 = vmatprep.subr.bf16.mxu0 0
        %1251 = vmatpush1.bf16.msra.mxu0 0
        %1252 = vmatprep.mubr.bf16.mxu0 0
        %1253 = vmatmul.mubr.bf16.gmra.mrb[0].mxu0 %v1215
        %v1254 = vpop.f32.mrb[0].mxu0
        %v1255 = vadd.f32 0.0, %v1254
        %v1256 = vpop.f32.mrb[0].mxu0
        %v1257 = vpop.f32.mrb[0].mxu0
        %v1258 = vpop.f32.mrb[0].mxu0
        %1259 = vdwg.mxu0
        %v1260 = vadd.f32 %v1097, %v1255
        %1261 = vrot.lane.b32.xlu0 %v782, 56
        %v1262 = vpop.permute.xlu0 %1261
        %1263 = vrot.lane.b32.xlu0 %v783, 48
        %v1264 = vpop.permute.xlu0 %1263
        %v1266 = vsel %vm787, %v1262, 0
        %v1269 = vsel %vm787, %v1264, 0
        %1271 = vmatprep.subr.bf16.mxu0 0
        %1272 = vmatpush1.bf16.xpose.msra.mxu0 %v1269
        %1273 = vmatprep.subr.bf16.mxu0 0
        %1274 = vmatpush1.bf16.xpose.msra.mxu0 0
        %1275 = vmatprep.subr.bf16.mxu0 0
        %1276 = vmatpush1.bf16.xpose.msra.mxu0 0
        %1277 = vmatprep.subr.bf16.mxu0 0
        %1278 = vmatpush1.bf16.xpose.msra.mxu0 0
        %1279 = vmatprep.subr.bf16.mxu0 0
        %1280 = vmatpush1.bf16.xpose.msra.mxu0 0
        %1281 = vmatprep.subr.bf16.mxu0 0
        %1282 = vmatpush1.bf16.xpose.msra.mxu0 0
        %1283 = vmatprep.subr.bf16.mxu0 0
        %1284 = vmatpush1.bf16.xpose.msra.mxu0 0
        %1285 = vmatprep.subr.bf16.mxu0 0
        %1286 = vmatpush1.bf16.xpose.msra.mxu0 0
        %1287 = vmatprep.subr.bf16.mxu0 0
        %1288 = vmatpush1.bf16.xpose.msra.mxu0 0
        %1289 = vmatprep.subr.bf16.mxu0 0
        %1290 = vmatpush1.bf16.xpose.msra.mxu0 0
        %1291 = vmatprep.subr.bf16.mxu0 0
        %1292 = vmatpush1.bf16.xpose.msra.mxu0 0
        %1293 = vmatprep.subr.bf16.mxu0 0
        %1294 = vmatpush1.bf16.xpose.msra.mxu0 0
        %1295 = vmatprep.subr.bf16.mxu0 0
        %1296 = vmatpush1.bf16.xpose.msra.mxu0 0
        %1297 = vmatprep.subr.bf16.mxu0 0
        %1298 = vmatpush1.bf16.xpose.msra.mxu0 0
        %1299 = vmatprep.subr.bf16.mxu0 0
        %1300 = vmatpush1.bf16.xpose.msra.mxu0 0
        %1301 = vmatprep.subr.bf16.mxu0 0
        %1302 = vmatpush1.bf16.xpose.msra.mxu0 0
        %1303 = vmatprep.mubr.bf16.mxu0 0
        %1304 = vmatmul.mubr.bf16.gmra.mrb[0].mxu0 %v1266
        %v1305 = vpop.f32.mrb[0].mxu0
        %v1306 = vadd.f32 0.0, %v1305
        %v1307 = vpop.f32.mrb[0].mxu0
        %v1308 = vpop.f32.mrb[0].mxu0
        %v1309 = vpop.f32.mrb[0].mxu0
        %1310 = vdwg.mxu0
        %v1311 = vsel %vm689, %v1306, -1e+30
        %v1312 = vsel %vm787, %v1311, -inf
        %1313 = vmax.xlane.f32.xlu0 %v1312
        %v1314 = vpop.xlane.xlu0 %1313
        %v1315 = vsub.f32 %v1311, %v1314
        %v1316 = vmul.f32 %v1315, 1.442695
        %v1317 = vpow.pop %v1316
        %v1318 = vsel %vm787, %v1317, 0.0
        %1319 = vadd.xlane.f32.xlu0 %v1318
        %v1320 = vpop.xlane.xlu0 %1319
        %v1321 = vrcp.pop %v1320
        %v1322 = vmul.f32 %v1317, %v1321
        %v1323 = vpack.c.bf16 %v1322, %v1322
        %1324 = vrot.lane.b32.xlu0 %v783, 40
        %v1325 = vpop.permute.xlu0 %1324
        %v1327 = vsel %vm787, %v1323, 0
        %v1330 = vsel %vm852, %v1325, 0
        %1332 = vmatprep.subr.bf16.mxu0 0
        %1333 = vmatpush1.bf16.msra.mxu0 %v1330
        %1334 = vmatprep.subr.bf16.mxu0 0
        %1335 = vmatpush1.bf16.msra.mxu0 0
        %1336 = vmatprep.subr.bf16.mxu0 0
        %1337 = vmatpush1.bf16.msra.mxu0 0
        %1338 = vmatprep.subr.bf16.mxu0 0
        %1339 = vmatpush1.bf16.msra.mxu0 0
        %1340 = vmatprep.subr.bf16.mxu0 0
        %1341 = vmatpush1.bf16.msra.mxu0 0
        %1342 = vmatprep.subr.bf16.mxu0 0
        %1343 = vmatpush1.bf16.msra.mxu0 0
        %1344 = vmatprep.subr.bf16.mxu0 0
        %1345 = vmatpush1.bf16.msra.mxu0 0
        %1346 = vmatprep.subr.bf16.mxu0 0
        %1347 = vmatpush1.bf16.msra.mxu0 0
        %1348 = vmatprep.subr.bf16.mxu0 0
        %1349 = vmatpush1.bf16.msra.mxu0 0
        %1350 = vmatprep.subr.bf16.mxu0 0
        %1351 = vmatpush1.bf16.msra.mxu0 0
        %1352 = vmatprep.subr.bf16.mxu0 0
        %1353 = vmatpush1.bf16.msra.mxu0 0
        %1354 = vmatprep.subr.bf16.mxu0 0
        %1355 = vmatpush1.bf16.msra.mxu0 0
        %1356 = vmatprep.subr.bf16.mxu0 0
        %1357 = vmatpush1.bf16.msra.mxu0 0
        %1358 = vmatprep.subr.bf16.mxu0 0
        %1359 = vmatpush1.bf16.msra.mxu0 0
        %1360 = vmatprep.subr.bf16.mxu0 0
        %1361 = vmatpush1.bf16.msra.mxu0 0
        %1362 = vmatprep.subr.bf16.mxu0 0
        %1363 = vmatpush1.bf16.msra.mxu0 0
        %1364 = vmatprep.mubr.bf16.mxu0 0
        %1365 = vmatmul.mubr.bf16.gmra.mrb[0].mxu0 %v1327
        %v1366 = vpop.f32.mrb[0].mxu0
        %v1367 = vadd.f32 0.0, %v1366
        %v1368 = vpop.f32.mrb[0].mxu0
        %v1369 = vpop.f32.mrb[0].mxu0
        %v1370 = vpop.f32.mrb[0].mxu0
        %1371 = vdwg.mxu0
        %v1372 = vpack.c.bf16 %v1367, %v1367
        %v1374 = vsel %vm787, %v1372, 0
        %v1377 = vsel %vm852, %v780, 0
        %1379 = vmatprep.subr.bf16.mxu0 0
        %1380 = vmatpush1.bf16.msra.mxu0 %v1377
        %1381 = vmatprep.subr.bf16.mxu0 0
        %1382 = vmatpush1.bf16.msra.mxu0 0
        %1383 = vmatprep.subr.bf16.mxu0 0
        %1384 = vmatpush1.bf16.msra.mxu0 0
        %1385 = vmatprep.subr.bf16.mxu0 0
        %1386 = vmatpush1.bf16.msra.mxu0 0
        %1387 = vmatprep.subr.bf16.mxu0 0
        %1388 = vmatpush1.bf16.msra.mxu0 0
        %1389 = vmatprep.subr.bf16.mxu0 0
        %1390 = vmatpush1.bf16.msra.mxu0 0
        %1391 = vmatprep.subr.bf16.mxu0 0
        %1392 = vmatpush1.bf16.msra.mxu0 0
        %1393 = vmatprep.subr.bf16.mxu0 0
        %1394 = vmatpush1.bf16.msra.mxu0 0
        %1395 = vmatprep.subr.bf16.mxu0 0
        %1396 = vmatpush1.bf16.msra.mxu0 0
        %1397 = vmatprep.subr.bf16.mxu0 0
        %1398 = vmatpush1.bf16.msra.mxu0 0
        %1399 = vmatprep.subr.bf16.mxu0 0
        %1400 = vmatpush1.bf16.msra.mxu0 0
        %1401 = vmatprep.subr.bf16.mxu0 0
        %1402 = vmatpush1.bf16.msra.mxu0 0
        %1403 = vmatprep.subr.bf16.mxu0 0
        %1404 = vmatpush1.bf16.msra.mxu0 0
        %1405 = vmatprep.subr.bf16.mxu0 0
        %1406 = vmatpush1.bf16.msra.mxu0 0
        %1407 = vmatprep.subr.bf16.mxu0 0
        %1408 = vmatpush1.bf16.msra.mxu0 0
        %1409 = vmatprep.subr.bf16.mxu0 0
        %1410 = vmatpush1.bf16.msra.mxu0 0
        %1411 = vmatprep.mubr.bf16.mxu0 0
        %1412 = vmatmul.mubr.bf16.gmra.mrb[0].mxu0 %v1374
        %v1413 = vpop.f32.mrb[0].mxu0
        %v1414 = vadd.f32 0.0, %v1413
        %v1415 = vpop.f32.mrb[0].mxu0
        %v1416 = vpop.f32.mrb[0].mxu0
        %v1417 = vpop.f32.mrb[0].mxu0
        %1418 = vdwg.mxu0
        %v1419 = vadd.f32 %v1260, %v1414
        %v1420 = vadd.f32 %v682, %v1419
        %v1421 = vld [vmem:[%s7] sm:$0x1]
        %v1422 = vlaneseq
        %v1423 = vshrl.u32 %v1422, 7
        %v1424 = vsub.s32 0, %v1423
        %v1425 = vrot.slane %v1421, %v1424
        %v1426 = vadd.f32 %v1420, %v1425
        %v1427 = vld [vmem:[%s8] sm:$0x1]
        %v1428 = vld [vmem:[%s9] sm:$0x1]
        %v1429 = vsel %vm692, %v1426, 0.0
        %1430 = vadd.xlane.f32.xlu0 %v1429
        %v1431 = vpop.xlane.xlu0 %1430
        %v1432 = vmul.f32 %v1431, %v696
        %v1433 = vsub.f32 %v1426, %v1432
        %v1434 = vmul.f32 %v1433, %v1433
        %v1435 = vsel %vm692, %v1434, 0.0
        %1436 = vadd.xlane.f32.xlu0 %v1435
        %v1437 = vpop.xlane.xlu0 %1436
        %v1438 = vmul.f32 %v1437, %v696
        %v1439 = vadd.f32 %v1438, 1e-05
        %v1440 = vrsqrt.pop %v1439
        %v1441 = vmul.f32 %v1433, %v1440
        %v1442 = vlaneseq
        %v1443 = vshrl.u32 %v1442, 7
        %v1444 = vsub.s32 0, %v1443
        %v1445 = vrot.slane %v1427, %v1444
        %v1446 = vmul.f32 %v1441, %v1445
        %v1447 = vlaneseq
        %v1448 = vshrl.u32 %v1447, 7
        %v1449 = vsub.s32 0, %v1448
        %v1450 = vrot.slane %v1428, %v1449
        %v1451 = vadd.f32 %v1446, %v1450
        %v1452 = vpack.c.bf16 %v1451, %v1451
        %v1453 = vld [vmem:[%s10] sm:$0xf]
        %v1454 = vld [vmem:[%s10 + $0x4] sm:$0xf]
        %v1455 = vld [vmem:[%s10 + $0x8] sm:$0xf]
        %v1456 = vld [vmem:[%s10 + $0xc] sm:$0xf]
        %v1457 = vld [vmem:[%s11] sm:$0x1]
        %v1458 = vlaneseq
        %v1459 = vshrl.u32 %v1458, 7
        %v1460 = vsub.s32 0, %v1459
        %v1461 = vrot.slane %v1457, %v1460
        %v1466 = vunpack.c.l.b16 %v1453
        %v1467 = vunpack.c.l.b16 %v1454
        %v1468 = vunpack.c.l.b16 %v1455
        %v1469 = vunpack.c.l.b16 %v1456
        %v1470 = vpack.c.b16 %v1467, %v1466
        %v1471 = vpack.c.b16 %v1469, %v1468
        %v1475 = vsel %vm692, %v1452, 0
        %1477 = vmatprep.subr.bf16.mxu0 0
        %1478 = vmatpush1.bf16.msra.mxu0 %v1470
        %1479 = vmatprep.subr.bf16.mxu0 0
        %1480 = vmatpush1.bf16.msra.mxu0 %v1471
        %1481 = vmatprep.subr.bf16.mxu0 0
        %1482 = vmatpush1.bf16.msra.mxu0 0
        %1483 = vmatprep.subr.bf16.mxu0 0
        %1484 = vmatpush1.bf16.msra.mxu0 0
        %1485 = vmatprep.subr.bf16.mxu0 0
        %1486 = vmatpush1.bf16.msra.mxu0 0
        %1487 = vmatprep.subr.bf16.mxu0 0
        %1488 = vmatpush1.bf16.msra.mxu0 0
        %1489 = vmatprep.subr.bf16.mxu0 0
        %1490 = vmatpush1.bf16.msra.mxu0 0
        %1491 = vmatprep.subr.bf16.mxu0 0
        %1492 = vmatpush1.bf16.msra.mxu0 0
        %1493 = vmatprep.subr.bf16.mxu0 0
        %1494 = vmatpush1.bf16.msra.mxu0 0
        %1495 = vmatprep.subr.bf16.mxu0 0
        %1496 = vmatpush1.bf16.msra.mxu0 0
        %1497 = vmatprep.subr.bf16.mxu0 0
        %1498 = vmatpush1.bf16.msra.mxu0 0
        %1499 = vmatprep.subr.bf16.mxu0 0
        %1500 = vmatpush1.bf16.msra.mxu0 0
        %1501 = vmatprep.subr.bf16.mxu0 0
        %1502 = vmatpush1.bf16.msra.mxu0 0
        %1503 = vmatprep.subr.bf16.mxu0 0
        %1504 = vmatpush1.bf16.msra.mxu0 0
        %1505 = vmatprep.subr.bf16.mxu0 0
        %1506 = vmatpush1.bf16.msra.mxu0 0
        %1507 = vmatprep.subr.bf16.mxu0 0
        %1508 = vmatpush1.bf16.msra.mxu0 0
        %1509 = vmatprep.mubr.bf16.mxu0 0
        %1510 = vmatmul.mubr.bf16.gmra.mrb[0].mxu0 %v1475
        %v1511 = vpop.f32.mrb[0].mxu0
        %v1512 = vadd.f32 %v1461, %v1511
        %v1513 = vpop.f32.mrb[0].mxu0
        %v1514 = vpop.f32.mrb[0].mxu0
        %v1515 = vpop.f32.mrb[0].mxu0
        %1516 = vdwg.mxu0
        %v1517 = vmax.f32 %v1512, 0.0
        %v1518 = vpack.c.bf16 %v1517, %v1517
        %v1519 = vld [vmem:[%s12] sm:$0xf]
        %v1520 = vld [vmem:[%s12 + $0x4] sm:$0xf]
        %v1521 = vld [vmem:[%s12 + $0x8] sm:$0xf]
        %v1522 = vld [vmem:[%s12 + $0xc] sm:$0xf]
        %v1523 = vld [vmem:[%s12 + $0x10] sm:$0xf]
        %v1524 = vld [vmem:[%s12 + $0x14] sm:$0xf]
        %v1525 = vld [vmem:[%s12 + $0x18] sm:$0xf]
        %v1526 = vld [vmem:[%s12 + $0x1c] sm:$0xf]
        %v1527 = vld [vmem:[%s12 + $0x20] sm:$0xf]
        %v1528 = vld [vmem:[%s12 + $0x24] sm:$0xf]
        %v1529 = vld [vmem:[%s12 + $0x28] sm:$0xf]
        %v1530 = vld [vmem:[%s12 + $0x2c] sm:$0xf]
        %v1531 = vld [vmem:[%s12 + $0x30] sm:$0xf]
        %v1532 = vld [vmem:[%s12 + $0x34] sm:$0xf]
        %v1533 = vld [vmem:[%s12 + $0x38] sm:$0xf]
        %v1534 = vld [vmem:[%s12 + $0x3c] sm:$0xf]
        %v1551 = vunpack.c.l.b16 %v1519
        %v1552 = vunpack.c.l.b16 %v1520
        %v1553 = vunpack.c.l.b16 %v1521
        %v1554 = vunpack.c.l.b16 %v1522
        %v1555 = vunpack.c.l.b16 %v1523
        %v1556 = vunpack.c.l.b16 %v1524
        %v1557 = vunpack.c.l.b16 %v1525
        %v1558 = vunpack.c.l.b16 %v1526
        %v1559 = vunpack.c.l.b16 %v1527
        %v1560 = vunpack.c.l.b16 %v1528
        %v1561 = vunpack.c.l.b16 %v1529
        %v1562 = vunpack.c.l.b16 %v1530
        %v1563 = vunpack.c.l.b16 %v1531
        %v1564 = vunpack.c.l.b16 %v1532
        %v1565 = vunpack.c.l.b16 %v1533
        %v1566 = vunpack.c.l.b16 %v1534
        %v1567 = vpack.c.b16 %v1552, %v1551
        %v1568 = vpack.c.b16 %v1554, %v1553
        %v1569 = vpack.c.b16 %v1556, %v1555
        %v1570 = vpack.c.b16 %v1558, %v1557
        %v1571 = vpack.c.b16 %v1560, %v1559
        %v1572 = vpack.c.b16 %v1562, %v1561
        %v1573 = vpack.c.b16 %v1564, %v1563
        %v1574 = vpack.c.b16 %v1566, %v1565
        %1583 = vmatprep.subr.bf16.mxu0 0
        %1584 = vmatpush1.bf16.msra.mxu0 %v1567
        %1585 = vmatprep.subr.bf16.mxu0 0
        %1586 = vmatpush1.bf16.msra.mxu0 %v1568
        %1587 = vmatprep.subr.bf16.mxu0 0
        %1588 = vmatpush1.bf16.msra.mxu0 %v1569
        %1589 = vmatprep.subr.bf16.mxu0 0
        %1590 = vmatpush1.bf16.msra.mxu0 %v1570
        %1591 = vmatprep.subr.bf16.mxu0 0
        %1592 = vmatpush1.bf16.msra.mxu0 %v1571
        %1593 = vmatprep.subr.bf16.mxu0 0
        %1594 = vmatpush1.bf16.msra.mxu0 %v1572
        %1595 = vmatprep.subr.bf16.mxu0 0
        %1596 = vmatpush1.bf16.msra.mxu0 %v1573
        %1597 = vmatprep.subr.bf16.mxu0 0
        %1598 = vmatpush1.bf16.msra.mxu0 %v1574
        %1599 = vmatprep.subr.bf16.mxu0 0
        %1600 = vmatpush1.bf16.msra.mxu0 0
        %1601 = vmatprep.subr.bf16.mxu0 0
        %1602 = vmatpush1.bf16.msra.mxu0 0
        %1603 = vmatprep.subr.bf16.mxu0 0
        %1604 = vmatpush1.bf16.msra.mxu0 0
        %1605 = vmatprep.subr.bf16.mxu0 0
        %1606 = vmatpush1.bf16.msra.mxu0 0
        %1607 = vmatprep.subr.bf16.mxu0 0
        %1608 = vmatpush1.bf16.msra.mxu0 0
        %1609 = vmatprep.subr.bf16.mxu0 0
        %1610 = vmatpush1.bf16.msra.mxu0 0
        %1611 = vmatprep.subr.bf16.mxu0 0
        %1612 = vmatpush1.bf16.msra.mxu0 0
        %1613 = vmatprep.subr.bf16.mxu0 0
        %1614 = vmatpush1.bf16.msra.mxu0 0
        %1615 = vmatprep.mubr.bf16.mxu0 0
        %1616 = vmatmul.mubr.bf16.gmra.mrb[0].mxu0 %v1518
        %v1617 = vpop.f32.mrb[0].mxu0
        %v1618 = vadd.f32 0.0, %v1617
        %v1619 = vpop.f32.mrb[0].mxu0
        %v1620 = vpop.f32.mrb[0].mxu0
        %v1621 = vpop.f32.mrb[0].mxu0
        %1622 = vdwg.mxu0
        %v1623 = vadd.f32 %v1426, %v1618
        %v1624 = vld [vmem:[%s13] sm:$0x1]
        %v1625 = vlaneseq
        %v1626 = vshrl.u32 %v1625, 7
        %v1627 = vsub.s32 0, %v1626
        %v1628 = vrot.slane %v1624, %v1627
        %v1629 = vadd.f32 %v1623, %v1628
        %v1630 = vld [vmem:[%s3 + $0x1] sm:$0x1]
        %v1631 = vld [vmem:[%s4 + $0x1] sm:$0x1]
        %v1632 = vsel %vm692, %v1629, 0.0
        %1633 = vadd.xlane.f32.xlu0 %v1632
        %v1634 = vpop.xlane.xlu0 %1633
        %v1635 = vmul.f32 %v1634, %v696
        %v1636 = vsub.f32 %v1629, %v1635
        %v1637 = vmul.f32 %v1636, %v1636
        %v1638 = vsel %vm692, %v1637, 0.0
        %1639 = vadd.xlane.f32.xlu0 %v1638
        %v1640 = vpop.xlane.xlu0 %1639
        %v1641 = vmul.f32 %v1640, %v696
        %v1642 = vadd.f32 %v1641, 1e-05
        %v1643 = vrsqrt.pop %v1642
        %v1644 = vmul.f32 %v1636, %v1643
        %v1645 = vlaneseq
        %v1646 = vshrl.u32 %v1645, 7
        %v1647 = vsub.s32 0, %v1646
        %v1648 = vrot.slane %v1630, %v1647
        %v1649 = vmul.f32 %v1644, %v1648
        %v1650 = vlaneseq
        %v1651 = vshrl.u32 %v1650, 7
        %v1652 = vsub.s32 0, %v1651
        %v1653 = vrot.slane %v1631, %v1652
        %v1654 = vadd.f32 %v1649, %v1653
        %v1655 = vpack.c.bf16 %v1654, %v1654
        %s1656 = scalar_lea.vmem %s5, 16
        %v1657 = vld [vmem:[%s1656] sm:$0xf]
        %v1658 = vld [vmem:[%s1656 + $0x4] sm:$0xf]
        %v1659 = vld [vmem:[%s1656 + $0x8] sm:$0xf]
        %v1660 = vld [vmem:[%s1656 + $0xc] sm:$0xf]
        %v1665 = vunpack.c.l.b16 %v1657
        %v1666 = vunpack.c.l.b16 %v1658
        %v1667 = vunpack.c.l.b16 %v1659
        %v1668 = vunpack.c.l.b16 %v1660
        %v1669 = vpack.c.b16 %v1666, %v1665
        %v1670 = vpack.c.b16 %v1668, %v1667
        %v1674 = vsel %vm692, %v1655, 0
        %1676 = vmatprep.subr.bf16.mxu0 0
        %1677 = vmatpush1.bf16.msra.mxu0 %v1669
        %1678 = vmatprep.subr.bf16.mxu0 0
        %1679 = vmatpush1.bf16.msra.mxu0 %v1670
        %1680 = vmatprep.subr.bf16.mxu0 0
        %1681 = vmatpush1.bf16.msra.mxu0 0
        %1682 = vmatprep.subr.bf16.mxu0 0
        %1683 = vmatpush1.bf16.msra.mxu0 0
        %1684 = vmatprep.subr.bf16.mxu0 0
        %1685 = vmatpush1.bf16.msra.mxu0 0
        %1686 = vmatprep.subr.bf16.mxu0 0
        %1687 = vmatpush1.bf16.msra.mxu0 0
        %1688 = vmatprep.subr.bf16.mxu0 0
        %1689 = vmatpush1.bf16.msra.mxu0 0
        %1690 = vmatprep.subr.bf16.mxu0 0
        %1691 = vmatpush1.bf16.msra.mxu0 0
        %1692 = vmatprep.subr.bf16.mxu0 0
        %1693 = vmatpush1.bf16.msra.mxu0 0
        %1694 = vmatprep.subr.bf16.mxu0 0
        %1695 = vmatpush1.bf16.msra.mxu0 0
        %1696 = vmatprep.subr.bf16.mxu0 0
        %1697 = vmatpush1.bf16.msra.mxu0 0
        %1698 = vmatprep.subr.bf16.mxu0 0
        %1699 = vmatpush1.bf16.msra.mxu0 0
        %1700 = vmatprep.subr.bf16.mxu0 0
        %1701 = vmatpush1.bf16.msra.mxu0 0
        %1702 = vmatprep.subr.bf16.mxu0 0
        %1703 = vmatpush1.bf16.msra.mxu0 0
        %1704 = vmatprep.subr.bf16.mxu0 0
        %1705 = vmatpush1.bf16.msra.mxu0 0
        %1706 = vmatprep.subr.bf16.mxu0 0
        %1707 = vmatpush1.bf16.msra.mxu0 0
        %1708 = vmatprep.mubr.bf16.mxu0 0
        %1709 = vmatmul.mubr.bf16.gmra.mrb[0].mxu0 %v1674
        %v1710 = vpop.f32.mrb[0].mxu0
        %v1711 = vadd.f32 0.0, %v1710
        %v1712 = vpop.f32.mrb[0].mxu0
        %v1713 = vpop.f32.mrb[0].mxu0
        %v1714 = vpop.f32.mrb[0].mxu0
        %1715 = vdwg.mxu0
        %s1716 = scalar_lea.vmem %s6, 16
        %v1717 = vld [vmem:[%s1716] sm:$0xf]
        %v1718 = vld [vmem:[%s1716 + $0x4] sm:$0xf]
        %v1719 = vld [vmem:[%s1716 + $0x8] sm:$0xf]
        %v1720 = vld [vmem:[%s1716 + $0xc] sm:$0xf]
        %v1721 = vmul.f32 %v1711, 0.35355338
        %v1722 = vpack.c.bf16 %v1721, %v1721
        %v1723 = vpack.c.bf16 %v1711, %v1711
        %1725 = vrot.lane.b32.xlu0 %v1723, 120
        %v1726 = vpop.permute.xlu0 %1725
        %v1728 = vsel %vm787, %v1722, 0
        %v1731 = vsel %vm787, %v1726, 0
        %1733 = vmatprep.subr.bf16.mxu0 0
        %1734 = vmatpush1.bf16.xpose.msra.mxu0 %v1731
        %1735 = vmatprep.subr.bf16.mxu0 0
        %1736 = vmatpush1.bf16.xpose.msra.mxu0 0
        %1737 = vmatprep.subr.bf16.mxu0 0
        %1738 = vmatpush1.bf16.xpose.msra.mxu0 0
        %1739 = vmatprep.subr.bf16.mxu0 0
        %1740 = vmatpush1.bf16.xpose.msra.mxu0 0
        %1741 = vmatprep.subr.bf16.mxu0 0
        %1742 = vmatpush1.bf16.xpose.msra.mxu0 0
        %1743 = vmatprep.subr.bf16.mxu0 0
        %1744 = vmatpush1.bf16.xpose.msra.mxu0 0
        %1745 = vmatprep.subr.bf16.mxu0 0
        %1746 = vmatpush1.bf16.xpose.msra.mxu0 0
        %1747 = vmatprep.subr.bf16.mxu0 0
        %1748 = vmatpush1.bf16.xpose.msra.mxu0 0
        %1749 = vmatprep.subr.bf16.mxu0 0
        %1750 = vmatpush1.bf16.xpose.msra.mxu0 0
        %1751 = vmatprep.subr.bf16.mxu0 0
        %1752 = vmatpush1.bf16.xpose.msra.mxu0 0
        %1753 = vmatprep.subr.bf16.mxu0 0
        %1754 = vmatpush1.bf16.xpose.msra.mxu0 0
        %1755 = vmatprep.subr.bf16.mxu0 0
        %1756 = vmatpush1.bf16.xpose.msra.mxu0 0
        %1757 = vmatprep.subr.bf16.mxu0 0
        %1758 = vmatpush1.bf16.xpose.msra.mxu0 0
        %1759 = vmatprep.subr.bf16.mxu0 0
        %1760 = vmatpush1.bf16.xpose.msra.mxu0 0
        %1761 = vmatprep.subr.bf16.mxu0 0
        %1762 = vmatpush1.bf16.xpose.msra.mxu0 0
        %1763 = vmatprep.subr.bf16.mxu0 0
        %1764 = vmatpush1.bf16.xpose.msra.mxu0 0
        %1765 = vmatprep.mubr.bf16.mxu0 0
        %1766 = vmatmul.mubr.bf16.gmra.mrb[0].mxu0 %v1728
        %v1767 = vpop.f32.mrb[0].mxu0
        %v1768 = vadd.f32 0.0, %v1767
        %v1769 = vpop.f32.mrb[0].mxu0
        %v1770 = vpop.f32.mrb[0].mxu0
        %v1771 = vpop.f32.mrb[0].mxu0
        %1772 = vdwg.mxu0
        %v1773 = vsel %vm689, %v1768, -1e+30
        %v1774 = vsel %vm787, %v1773, -inf
        %1775 = vmax.xlane.f32.xlu0 %v1774
        %v1776 = vpop.xlane.xlu0 %1775
        %v1777 = vsub.f32 %v1773, %v1776
        %v1778 = vmul.f32 %v1777, 1.442695
        %v1779 = vpow.pop %v1778
        %v1780 = vsel %vm787, %v1779, 0.0
        %1781 = vadd.xlane.f32.xlu0 %v1780
        %v1782 = vpop.xlane.xlu0 %1781
        %v1783 = vrcp.pop %v1782
        %v1784 = vmul.f32 %v1779, %v1783
        %v1785 = vpack.c.bf16 %v1784, %v1784
        %1786 = vrot.lane.b32.xlu0 %v1723, 112
        %v1787 = vpop.permute.xlu0 %1786
        %v1789 = vsel %vm787, %v1785, 0
        %v1792 = vsel %vm852, %v1787, 0
        %1794 = vmatprep.subr.bf16.mxu0 0
        %1795 = vmatpush1.bf16.msra.mxu0 %v1792
        %1796 = vmatprep.subr.bf16.mxu0 0
        %1797 = vmatpush1.bf16.msra.mxu0 0
        %1798 = vmatprep.subr.bf16.mxu0 0
        %1799 = vmatpush1.bf16.msra.mxu0 0
        %1800 = vmatprep.subr.bf16.mxu0 0
        %1801 = vmatpush1.bf16.msra.mxu0 0
        %1802 = vmatprep.subr.bf16.mxu0 0
        %1803 = vmatpush1.bf16.msra.mxu0 0
        %1804 = vmatprep.subr.bf16.mxu0 0
        %1805 = vmatpush1.bf16.msra.mxu0 0
        %1806 = vmatprep.subr.bf16.mxu0 0
        %1807 = vmatpush1.bf16.msra.mxu0 0
        %1808 = vmatprep.subr.bf16.mxu0 0
        %1809 = vmatpush1.bf16.msra.mxu0 0
        %1810 = vmatprep.subr.bf16.mxu0 0
        %1811 = vmatpush1.bf16.msra.mxu0 0
        %1812 = vmatprep.subr.bf16.mxu0 0
        %1813 = vmatpush1.bf16.msra.mxu0 0
        %1814 = vmatprep.subr.bf16.mxu0 0
        %1815 = vmatpush1.bf16.msra.mxu0 0
        %1816 = vmatprep.subr.bf16.mxu0 0
        %1817 = vmatpush1.bf16.msra.mxu0 0
        %1818 = vmatprep.subr.bf16.mxu0 0
        %1819 = vmatpush1.bf16.msra.mxu0 0
        %1820 = vmatprep.subr.bf16.mxu0 0
        %1821 = vmatpush1.bf16.msra.mxu0 0
        %1822 = vmatprep.subr.bf16.mxu0 0
        %1823 = vmatpush1.bf16.msra.mxu0 0
        %1824 = vmatprep.subr.bf16.mxu0 0
        %1825 = vmatpush1.bf16.msra.mxu0 0
        %1826 = vmatprep.mubr.bf16.mxu0 0
        %1827 = vmatmul.mubr.bf16.gmra.mrb[0].mxu0 %v1789
        %v1828 = vpop.f32.mrb[0].mxu0
        %v1829 = vadd.f32 0.0, %v1828
        %v1830 = vpop.f32.mrb[0].mxu0
        %v1831 = vpop.f32.mrb[0].mxu0
        %v1832 = vpop.f32.mrb[0].mxu0
        %1833 = vdwg.mxu0
        %v1834 = vpack.c.bf16 %v1829, %v1829
        %1836 = vrot.lane.b32.xlu0 %v1722, 104
        %v1837 = vpop.permute.xlu0 %1836
        %1838 = vrot.lane.b32.xlu0 %v1723, 96
        %v1839 = vpop.permute.xlu0 %1838
        %v1841 = vsel %vm787, %v1837, 0
        %v1844 = vsel %vm787, %v1839, 0
        %1846 = vmatprep.subr.bf16.mxu0 0
        %1847 = vmatpush1.bf16.xpose.msra.mxu0 %v1844
        %1848 = vmatprep.subr.bf16.mxu0 0
        %1849 = vmatpush1.bf16.xpose.msra.mxu0 0
        %1850 = vmatprep.subr.bf16.mxu0 0
        %1851 = vmatpush1.bf16.xpose.msra.mxu0 0
        %1852 = vmatprep.subr.bf16.mxu0 0
        %1853 = vmatpush1.bf16.xpose.msra.mxu0 0
        %1854 = vmatprep.subr.bf16.mxu0 0
        %1855 = vmatpush1.bf16.xpose.msra.mxu0 0
        %1856 = vmatprep.subr.bf16.mxu0 0
        %1857 = vmatpush1.bf16.xpose.msra.mxu0 0
        %1858 = vmatprep.subr.bf16.mxu0 0
        %1859 = vmatpush1.bf16.xpose.msra.mxu0 0
        %1860 = vmatprep.subr.bf16.mxu0 0
        %1861 = vmatpush1.bf16.xpose.msra.mxu0 0
        %1862 = vmatprep.subr.bf16.mxu0 0
        %1863 = vmatpush1.bf16.xpose.msra.mxu0 0
        %1864 = vmatprep.subr.bf16.mxu0 0
        %1865 = vmatpush1.bf16.xpose.msra.mxu0 0
        %1866 = vmatprep.subr.bf16.mxu0 0
        %1867 = vmatpush1.bf16.xpose.msra.mxu0 0
        %1868 = vmatprep.subr.bf16.mxu0 0
        %1869 = vmatpush1.bf16.xpose.msra.mxu0 0
        %1870 = vmatprep.subr.bf16.mxu0 0
        %1871 = vmatpush1.bf16.xpose.msra.mxu0 0
        %1872 = vmatprep.subr.bf16.mxu0 0
        %1873 = vmatpush1.bf16.xpose.msra.mxu0 0
        %1874 = vmatprep.subr.bf16.mxu0 0
        %1875 = vmatpush1.bf16.xpose.msra.mxu0 0
        %1876 = vmatprep.subr.bf16.mxu0 0
        %1877 = vmatpush1.bf16.xpose.msra.mxu0 0
        %1878 = vmatprep.mubr.bf16.mxu0 0
        %1879 = vmatmul.mubr.bf16.gmra.mrb[0].mxu0 %v1841
        %v1880 = vpop.f32.mrb[0].mxu0
        %v1881 = vadd.f32 0.0, %v1880
        %v1882 = vpop.f32.mrb[0].mxu0
        %v1883 = vpop.f32.mrb[0].mxu0
        %v1884 = vpop.f32.mrb[0].mxu0
        %1885 = vdwg.mxu0
        %v1886 = vsel %vm689, %v1881, -1e+30
        %v1887 = vsel %vm787, %v1886, -inf
        %1888 = vmax.xlane.f32.xlu0 %v1887
        %v1889 = vpop.xlane.xlu0 %1888
        %v1890 = vsub.f32 %v1886, %v1889
        %v1891 = vmul.f32 %v1890, 1.442695
        %v1892 = vpow.pop %v1891
        %v1893 = vsel %vm787, %v1892, 0.0
        %1894 = vadd.xlane.f32.xlu0 %v1893
        %v1895 = vpop.xlane.xlu0 %1894
        %v1896 = vrcp.pop %v1895
        %v1897 = vmul.f32 %v1892, %v1896
        %v1898 = vpack.c.bf16 %v1897, %v1897
        %1899 = vrot.lane.b32.xlu0 %v1723, 88
        %v1900 = vpop.permute.xlu0 %1899
        %v1902 = vsel %vm787, %v1898, 0
        %v1905 = vsel %vm852, %v1900, 0
        %1907 = vmatprep.subr.bf16.mxu0 0
        %1908 = vmatpush1.bf16.msra.mxu0 %v1905
        %1909 = vmatprep.subr.bf16.mxu0 0
        %1910 = vmatpush1.bf16.msra.mxu0 0
        %1911 = vmatprep.subr.bf16.mxu0 0
        %1912 = vmatpush1.bf16.msra.mxu0 0
        %1913 = vmatprep.subr.bf16.mxu0 0
        %1914 = vmatpush1.bf16.msra.mxu0 0
        %1915 = vmatprep.subr.bf16.mxu0 0
        %1916 = vmatpush1.bf16.msra.mxu0 0
        %1917 = vmatprep.subr.bf16.mxu0 0
        %1918 = vmatpush1.bf16.msra.mxu0 0
        %1919 = vmatprep.subr.bf16.mxu0 0
        %1920 = vmatpush1.bf16.msra.mxu0 0
        %1921 = vmatprep.subr.bf16.mxu0 0
        %1922 = vmatpush1.bf16.msra.mxu0 0
        %1923 = vmatprep.subr.bf16.mxu0 0
        %1924 = vmatpush1.bf16.msra.mxu0 0
        %1925 = vmatprep.subr.bf16.mxu0 0
        %1926 = vmatpush1.bf16.msra.mxu0 0
        %1927 = vmatprep.subr.bf16.mxu0 0
        %1928 = vmatpush1.bf16.msra.mxu0 0
        %1929 = vmatprep.subr.bf16.mxu0 0
        %1930 = vmatpush1.bf16.msra.mxu0 0
        %1931 = vmatprep.subr.bf16.mxu0 0
        %1932 = vmatpush1.bf16.msra.mxu0 0
        %1933 = vmatprep.subr.bf16.mxu0 0
        %1934 = vmatpush1.bf16.msra.mxu0 0
        %1935 = vmatprep.subr.bf16.mxu0 0
        %1936 = vmatpush1.bf16.msra.mxu0 0
        %1937 = vmatprep.subr.bf16.mxu0 0
        %1938 = vmatpush1.bf16.msra.mxu0 0
        %1939 = vmatprep.mubr.bf16.mxu0 0
        %1940 = vmatmul.mubr.bf16.gmra.mrb[0].mxu0 %v1902
        %v1941 = vpop.f32.mrb[0].mxu0
        %v1942 = vadd.f32 0.0, %v1941
        %v1943 = vpop.f32.mrb[0].mxu0
        %v1944 = vpop.f32.mrb[0].mxu0
        %v1945 = vpop.f32.mrb[0].mxu0
        %1946 = vdwg.mxu0
        %v1947 = vpack.c.bf16 %v1942, %v1942
        %v1949 = vsel %vm787, %v1947, 0
        %v1952 = vsel %vm852, %v1718, 0
        %1954 = vmatprep.subr.bf16.mxu0 0
        %1955 = vmatpush1.bf16.msra.mxu0 %v1952
        %1956 = vmatprep.subr.bf16.mxu0 0
        %1957 = vmatpush1.bf16.msra.mxu0 0
        %1958 = vmatprep.subr.bf16.mxu0 0
        %1959 = vmatpush1.bf16.msra.mxu0 0
        %1960 = vmatprep.subr.bf16.mxu0 0
        %1961 = vmatpush1.bf16.msra.mxu0 0
        %1962 = vmatprep.subr.bf16.mxu0 0
        %1963 = vmatpush1.bf16.msra.mxu0 0
        %1964 = vmatprep.subr.bf16.mxu0 0
        %1965 = vmatpush1.bf16.msra.mxu0 0
        %1966 = vmatprep.subr.bf16.mxu0 0
        %1967 = vmatpush1.bf16.msra.mxu0 0
        %1968 = vmatprep.subr.bf16.mxu0 0
        %1969 = vmatpush1.bf16.msra.mxu0 0
        %1970 = vmatprep.subr.bf16.mxu0 0
        %1971 = vmatpush1.bf16.msra.mxu0 0
        %1972 = vmatprep.subr.bf16.mxu0 0
        %1973 = vmatpush1.bf16.msra.mxu0 0
        %1974 = vmatprep.subr.bf16.mxu0 0
        %1975 = vmatpush1.bf16.msra.mxu0 0
        %1976 = vmatprep.subr.bf16.mxu0 0
        %1977 = vmatpush1.bf16.msra.mxu0 0
        %1978 = vmatprep.subr.bf16.mxu0 0
        %1979 = vmatpush1.bf16.msra.mxu0 0
        %1980 = vmatprep.subr.bf16.mxu0 0
        %1981 = vmatpush1.bf16.msra.mxu0 0
        %1982 = vmatprep.subr.bf16.mxu0 0
        %1983 = vmatpush1.bf16.msra.mxu0 0
        %1984 = vmatprep.subr.bf16.mxu0 0
        %1985 = vmatpush1.bf16.msra.mxu0 0
        %1986 = vmatprep.mubr.bf16.mxu0 0
        %1987 = vmatmul.mubr.bf16.gmra.mrb[0].mxu0 %v1949
        %v1988 = vpop.f32.mrb[0].mxu0
        %v1989 = vadd.f32 0.0, %v1988
        %v1990 = vpop.f32.mrb[0].mxu0
        %v1991 = vpop.f32.mrb[0].mxu0
        %v1992 = vpop.f32.mrb[0].mxu0
        %1993 = vdwg.mxu0
        %v1995 = vsel %vm787, %v1834, 0
        %v1998 = vsel %vm852, %v1717, 0
        %2000 = vmatprep.subr.bf16.mxu0 0
        %2001 = vmatpush1.bf16.msra.mxu0 %v1998
        %2002 = vmatprep.subr.bf16.mxu0 0
        %2003 = vmatpush1.bf16.msra.mxu0 0
        %2004 = vmatprep.subr.bf16.mxu0 0
        %2005 = vmatpush1.bf16.msra.mxu0 0
        %2006 = vmatprep.subr.bf16.mxu0 0
        %2007 = vmatpush1.bf16.msra.mxu0 0
        %2008 = vmatprep.subr.bf16.mxu0 0
        %2009 = vmatpush1.bf16.msra.mxu0 0
        %2010 = vmatprep.subr.bf16.mxu0 0
        %2011 = vmatpush1.bf16.msra.mxu0 0
        %2012 = vmatprep.subr.bf16.mxu0 0
        %2013 = vmatpush1.bf16.msra.mxu0 0
        %2014 = vmatprep.subr.bf16.mxu0 0
        %2015 = vmatpush1.bf16.msra.mxu0 0
        %2016 = vmatprep.subr.bf16.mxu0 0
        %2017 = vmatpush1.bf16.msra.mxu0 0
        %2018 = vmatprep.subr.bf16.mxu0 0
        %2019 = vmatpush1.bf16.msra.mxu0 0
        %2020 = vmatprep.subr.bf16.mxu0 0
        %2021 = vmatpush1.bf16.msra.mxu0 0
        %2022 = vmatprep.subr.bf16.mxu0 0
        %2023 = vmatpush1.bf16.msra.mxu0 0
        %2024 = vmatprep.subr.bf16.mxu0 0
        %2025 = vmatpush1.bf16.msra.mxu0 0
        %2026 = vmatprep.subr.bf16.mxu0 0
        %2027 = vmatpush1.bf16.msra.mxu0 0
        %2028 = vmatprep.subr.bf16.mxu0 0
        %2029 = vmatpush1.bf16.msra.mxu0 0
        %2030 = vmatprep.subr.bf16.mxu0 0
        %2031 = vmatpush1.bf16.msra.mxu0 0
        %2032 = vmatprep.mubr.bf16.mxu0 0
        %2033 = vmatmul.mubr.bf16.gmra.mrb[0].mxu0 %v1995
        %v2034 = vpop.f32.mrb[0].mxu0
        %v2035 = vadd.f32 %v1989, %v2034
        %v2036 = vpop.f32.mrb[0].mxu0
        %v2037 = vpop.f32.mrb[0].mxu0
        %v2038 = vpop.f32.mrb[0].mxu0
        %2039 = vdwg.mxu0
        %2040 = vrot.lane.b32.xlu0 %v1722, 80
        %v2041 = vpop.permute.xlu0 %2040
        %2042 = vrot.lane.b32.xlu0 %v1723, 72
        %v2043 = vpop.permute.xlu0 %2042
        %v2045 = vsel %vm787, %v2041, 0
        %v2048 = vsel %vm787, %v2043, 0
        %2050 = vmatprep.subr.bf16.mxu0 0
        %2051 = vmatpush1.bf16.xpose.msra.mxu0 %v2048
        %2052 = vmatprep.subr.bf16.mxu0 0
        %2053 = vmatpush1.bf16.xpose.msra.mxu0 0
        %2054 = vmatprep.subr.bf16.mxu0 0
        %2055 = vmatpush1.bf16.xpose.msra.mxu0 0
        %2056 = vmatprep.subr.bf16.mxu0 0
        %2057 = vmatpush1.bf16.xpose.msra.mxu0 0
        %2058 = vmatprep.subr.bf16.mxu0 0
        %2059 = vmatpush1.bf16.xpose.msra.mxu0 0
        %2060 = vmatprep.subr.bf16.mxu0 0
        %2061 = vmatpush1.bf16.xpose.msra.mxu0 0
        %2062 = vmatprep.subr.bf16.mxu0 0
        %2063 = vmatpush1.bf16.xpose.msra.mxu0 0
        %2064 = vmatprep.subr.bf16.mxu0 0
        %2065 = vmatpush1.bf16.xpose.msra.mxu0 0
        %2066 = vmatprep.subr.bf16.mxu0 0
        %2067 = vmatpush1.bf16.xpose.msra.mxu0 0
        %2068 = vmatprep.subr.bf16.mxu0 0
        %2069 = vmatpush1.bf16.xpose.msra.mxu0 0
        %2070 = vmatprep.subr.bf16.mxu0 0
        %2071 = vmatpush1.bf16.xpose.msra.mxu0 0
        %2072 = vmatprep.subr.bf16.mxu0 0
        %2073 = vmatpush1.bf16.xpose.msra.mxu0 0
        %2074 = vmatprep.subr.bf16.mxu0 0
        %2075 = vmatpush1.bf16.xpose.msra.mxu0 0
        %2076 = vmatprep.subr.bf16.mxu0 0
        %2077 = vmatpush1.bf16.xpose.msra.mxu0 0
        %2078 = vmatprep.subr.bf16.mxu0 0
        %2079 = vmatpush1.bf16.xpose.msra.mxu0 0
        %2080 = vmatprep.subr.bf16.mxu0 0
        %2081 = vmatpush1.bf16.xpose.msra.mxu0 0
        %2082 = vmatprep.mubr.bf16.mxu0 0
        %2083 = vmatmul.mubr.bf16.gmra.mrb[0].mxu0 %v2045
        %v2084 = vpop.f32.mrb[0].mxu0
        %v2085 = vadd.f32 0.0, %v2084
        %v2086 = vpop.f32.mrb[0].mxu0
        %v2087 = vpop.f32.mrb[0].mxu0
        %v2088 = vpop.f32.mrb[0].mxu0
        %2089 = vdwg.mxu0
        %v2090 = vsel %vm689, %v2085, -1e+30
        %v2091 = vsel %vm787, %v2090, -inf
        %2092 = vmax.xlane.f32.xlu0 %v2091
        %v2093 = vpop.xlane.xlu0 %2092
        %v2094 = vsub.f32 %v2090, %v2093
        %v2095 = vmul.f32 %v2094, 1.442695
        %v2096 = vpow.pop %v2095
        %v2097 = vsel %vm787, %v2096, 0.0
        %2098 = vadd.xlane.f32.xlu0 %v2097
        %v2099 = vpop.xlane.xlu0 %2098
        %v2100 = vrcp.pop %v2099
        %v2101 = vmul.f32 %v2096, %v2100
        %v2102 = vpack.c.bf16 %v2101, %v2101
        %2103 = vrot.lane.b32.xlu0 %v1723, 64
        %v2104 = vpop.permute.xlu0 %2103
        %v2106 = vsel %vm787, %v2102, 0
        %v2109 = vsel %vm852, %v2104, 0
        %2111 = vmatprep.subr.bf16.mxu0 0
        %2112 = vmatpush1.bf16.msra.mxu0 %v2109
        %2113 = vmatprep.subr.bf16.mxu0 0
        %2114 = vmatpush1.bf16.msra.mxu0 0
        %2115 = vmatprep.subr.bf16.mxu0 0
        %2116 = vmatpush1.bf16.msra.mxu0 0
        %2117 = vmatprep.subr.bf16.mxu0 0
        %2118 = vmatpush1.bf16.msra.mxu0 0
        %2119 = vmatprep.subr.bf16.mxu0 0
        %2120 = vmatpush1.bf16.msra.mxu0 0
        %2121 = vmatprep.subr.bf16.mxu0 0
        %2122 = vmatpush1.bf16.msra.mxu0 0
        %2123 = vmatprep.subr.bf16.mxu0 0
        %2124 = vmatpush1.bf16.msra.mxu0 0
        %2125 = vmatprep.subr.bf16.mxu0 0
        %2126 = vmatpush1.bf16.msra.mxu0 0
        %2127 = vmatprep.subr.bf16.mxu0 0
        %2128 = vmatpush1.bf16.msra.mxu0 0
        %2129 = vmatprep.subr.bf16.mxu0 0
        %2130 = vmatpush1.bf16.msra.mxu0 0
        %2131 = vmatprep.subr.bf16.mxu0 0
        %2132 = vmatpush1.bf16.msra.mxu0 0
        %2133 = vmatprep.subr.bf16.mxu0 0
        %2134 = vmatpush1.bf16.msra.mxu0 0
        %2135 = vmatprep.subr.bf16.mxu0 0
        %2136 = vmatpush1.bf16.msra.mxu0 0
        %2137 = vmatprep.subr.bf16.mxu0 0
        %2138 = vmatpush1.bf16.msra.mxu0 0
        %2139 = vmatprep.subr.bf16.mxu0 0
        %2140 = vmatpush1.bf16.msra.mxu0 0
        %2141 = vmatprep.subr.bf16.mxu0 0
        %2142 = vmatpush1.bf16.msra.mxu0 0
        %2143 = vmatprep.mubr.bf16.mxu0 0
        %2144 = vmatmul.mubr.bf16.gmra.mrb[0].mxu0 %v2106
        %v2145 = vpop.f32.mrb[0].mxu0
        %v2146 = vadd.f32 0.0, %v2145
        %v2147 = vpop.f32.mrb[0].mxu0
        %v2148 = vpop.f32.mrb[0].mxu0
        %v2149 = vpop.f32.mrb[0].mxu0
        %2150 = vdwg.mxu0
        %v2151 = vpack.c.bf16 %v2146, %v2146
        %v2153 = vsel %vm787, %v2151, 0
        %v2156 = vsel %vm852, %v1719, 0
        %2158 = vmatprep.subr.bf16.mxu0 0
        %2159 = vmatpush1.bf16.msra.mxu0 %v2156
        %2160 = vmatprep.subr.bf16.mxu0 0
        %2161 = vmatpush1.bf16.msra.mxu0 0
        %2162 = vmatprep.subr.bf16.mxu0 0
        %2163 = vmatpush1.bf16.msra.mxu0 0
        %2164 = vmatprep.subr.bf16.mxu0 0
        %2165 = vmatpush1.bf16.msra.mxu0 0
        %2166 = vmatprep.subr.bf16.mxu0 0
        %2167 = vmatpush1.bf16.msra.mxu0 0
        %2168 = vmatprep.subr.bf16.mxu0 0
        %2169 = vmatpush1.bf16.msra.mxu0 0
        %2170 = vmatprep.subr.bf16.mxu0 0
        %2171 = vmatpush1.bf16.msra.mxu0 0
        %2172 = vmatprep.subr.bf16.mxu0 0
        %2173 = vmatpush1.bf16.msra.mxu0 0
        %2174 = vmatprep.subr.bf16.mxu0 0
        %2175 = vmatpush1.bf16.msra.mxu0 0
        %2176 = vmatprep.subr.bf16.mxu0 0
        %2177 = vmatpush1.bf16.msra.mxu0 0
        %2178 = vmatprep.subr.bf16.mxu0 0
        %2179 = vmatpush1.bf16.msra.mxu0 0
        %2180 = vmatprep.subr.bf16.mxu0 0
        %2181 = vmatpush1.bf16.msra.mxu0 0
        %2182 = vmatprep.subr.bf16.mxu0 0
        %2183 = vmatpush1.bf16.msra.mxu0 0
        %2184 = vmatprep.subr.bf16.mxu0 0
        %2185 = vmatpush1.bf16.msra.mxu0 0
        %2186 = vmatprep.subr.bf16.mxu0 0
        %2187 = vmatpush1.bf16.msra.mxu0 0
        %2188 = vmatprep.subr.bf16.mxu0 0
        %2189 = vmatpush1.bf16.msra.mxu0 0
        %2190 = vmatprep.mubr.bf16.mxu0 0
        %2191 = vmatmul.mubr.bf16.gmra.mrb[0].mxu0 %v2153
        %v2192 = vpop.f32.mrb[0].mxu0
        %v2193 = vadd.f32 0.0, %v2192
        %v2194 = vpop.f32.mrb[0].mxu0
        %v2195 = vpop.f32.mrb[0].mxu0
        %v2196 = vpop.f32.mrb[0].mxu0
        %2197 = vdwg.mxu0
        %v2198 = vadd.f32 %v2035, %v2193
        %2199 = vrot.lane.b32.xlu0 %v1722, 56
        %v2200 = vpop.permute.xlu0 %2199
        %2201 = vrot.lane.b32.xlu0 %v1723, 48
        %v2202 = vpop.permute.xlu0 %2201
        %v2204 = vsel %vm787, %v2200, 0
        %v2207 = vsel %vm787, %v2202, 0
        %2209 = vmatprep.subr.bf16.mxu0 0
        %2210 = vmatpush1.bf16.xpose.msra.mxu0 %v2207
        %2211 = vmatprep.subr.bf16.mxu0 0
        %2212 = vmatpush1.bf16.xpose.msra.mxu0 0
        %2213 = vmatprep.subr.bf16.mxu0 0
        %2214 = vmatpush1.bf16.xpose.msra.mxu0 0
        %2215 = vmatprep.subr.bf16.mxu0 0
        %2216 = vmatpush1.bf16.xpose.msra.mxu0 0
        %2217 = vmatprep.subr.bf16.mxu0 0
        %2218 = vmatpush1.bf16.xpose.msra.mxu0 0
        %2219 = vmatprep.subr.bf16.mxu0 0
        %2220 = vmatpush1.bf16.xpose.msra.mxu0 0
        %2221 = vmatprep.subr.bf16.mxu0 0
        %2222 = vmatpush1.bf16.xpose.msra.mxu0 0
        %2223 = vmatprep.subr.bf16.mxu0 0
        %2224 = vmatpush1.bf16.xpose.msra.mxu0 0
        %2225 = vmatprep.subr.bf16.mxu0 0
        %2226 = vmatpush1.bf16.xpose.msra.mxu0 0
        %2227 = vmatprep.subr.bf16.mxu0 0
        %2228 = vmatpush1.bf16.xpose.msra.mxu0 0
        %2229 = vmatprep.subr.bf16.mxu0 0
        %2230 = vmatpush1.bf16.xpose.msra.mxu0 0
        %2231 = vmatprep.subr.bf16.mxu0 0
        %2232 = vmatpush1.bf16.xpose.msra.mxu0 0
        %2233 = vmatprep.subr.bf16.mxu0 0
        %2234 = vmatpush1.bf16.xpose.msra.mxu0 0
        %2235 = vmatprep.subr.bf16.mxu0 0
        %2236 = vmatpush1.bf16.xpose.msra.mxu0 0
        %2237 = vmatprep.subr.bf16.mxu0 0
        %2238 = vmatpush1.bf16.xpose.msra.mxu0 0
        %2239 = vmatprep.subr.bf16.mxu0 0
        %2240 = vmatpush1.bf16.xpose.msra.mxu0 0
        %2241 = vmatprep.mubr.bf16.mxu0 0
        %2242 = vmatmul.mubr.bf16.gmra.mrb[0].mxu0 %v2204
        %v2243 = vpop.f32.mrb[0].mxu0
        %v2244 = vadd.f32 0.0, %v2243
        %v2245 = vpop.f32.mrb[0].mxu0
        %v2246 = vpop.f32.mrb[0].mxu0
        %v2247 = vpop.f32.mrb[0].mxu0
        %2248 = vdwg.mxu0
        %v2249 = vsel %vm689, %v2244, -1e+30
        %v2250 = vsel %vm787, %v2249, -inf
        %2251 = vmax.xlane.f32.xlu0 %v2250
        %v2252 = vpop.xlane.xlu0 %2251
        %v2253 = vsub.f32 %v2249, %v2252
        %v2254 = vmul.f32 %v2253, 1.442695
        %v2255 = vpow.pop %v2254
        %v2256 = vsel %vm787, %v2255, 0.0
        %2257 = vadd.xlane.f32.xlu0 %v2256
        %v2258 = vpop.xlane.xlu0 %2257
        %v2259 = vrcp.pop %v2258
        %v2260 = vmul.f32 %v2255, %v2259
        %v2261 = vpack.c.bf16 %v2260, %v2260
        %2262 = vrot.lane.b32.xlu0 %v1723, 40
        %v2263 = vpop.permute.xlu0 %2262
        %v2265 = vsel %vm787, %v2261, 0
        %v2268 = vsel %vm852, %v2263, 0
        %2270 = vmatprep.subr.bf16.mxu0 0
        %2271 = vmatpush1.bf16.msra.mxu0 %v2268
        %2272 = vmatprep.subr.bf16.mxu0 0
        %2273 = vmatpush1.bf16.msra.mxu0 0
        %2274 = vmatprep.subr.bf16.mxu0 0
        %2275 = vmatpush1.bf16.msra.mxu0 0
        %2276 = vmatprep.subr.bf16.mxu0 0
        %2277 = vmatpush1.bf16.msra.mxu0 0
        %2278 = vmatprep.subr.bf16.mxu0 0
        %2279 = vmatpush1.bf16.msra.mxu0 0
        %2280 = vmatprep.subr.bf16.mxu0 0
        %2281 = vmatpush1.bf16.msra.mxu0 0
        %2282 = vmatprep.subr.bf16.mxu0 0
        %2283 = vmatpush1.bf16.msra.mxu0 0
        %2284 = vmatprep.subr.bf16.mxu0 0
        %2285 = vmatpush1.bf16.msra.mxu0 0
        %2286 = vmatprep.subr.bf16.mxu0 0
        %2287 = vmatpush1.bf16.msra.mxu0 0
        %2288 = vmatprep.subr.bf16.mxu0 0
        %2289 = vmatpush1.bf16.msra.mxu0 0
        %2290 = vmatprep.subr.bf16.mxu0 0
        %2291 = vmatpush1.bf16.msra.mxu0 0
        %2292 = vmatprep.subr.bf16.mxu0 0
        %2293 = vmatpush1.bf16.msra.mxu0 0
        %2294 = vmatprep.subr.bf16.mxu0 0
        %2295 = vmatpush1.bf16.msra.mxu0 0
        %2296 = vmatprep.subr.bf16.mxu0 0
        %2297 = vmatpush1.bf16.msra.mxu0 0
        %2298 = vmatprep.subr.bf16.mxu0 0
        %2299 = vmatpush1.bf16.msra.mxu0 0
        %2300 = vmatprep.subr.bf16.mxu0 0
        %2301 = vmatpush1.bf16.msra.mxu0 0
        %2302 = vmatprep.mubr.bf16.mxu0 0
        %2303 = vmatmul.mubr.bf16.gmra.mrb[0].mxu0 %v2265
        %v2304 = vpop.f32.mrb[0].mxu0
        %v2305 = vadd.f32 0.0, %v2304
        %v2306 = vpop.f32.mrb[0].mxu0
        %v2307 = vpop.f32.mrb[0].mxu0
        %v2308 = vpop.f32.mrb[0].mxu0
        %2309 = vdwg.mxu0
        %v2310 = vpack.c.bf16 %v2305, %v2305
        %v2312 = vsel %vm787, %v2310, 0
        %v2315 = vsel %vm852, %v1720, 0
        %2317 = vmatprep.subr.bf16.mxu0 0
        %2318 = vmatpush1.bf16.msra.mxu0 %v2315
        %2319 = vmatprep.subr.bf16.mxu0 0
        %2320 = vmatpush1.bf16.msra.mxu0 0
        %2321 = vmatprep.subr.bf16.mxu0 0
        %2322 = vmatpush1.bf16.msra.mxu0 0
        %2323 = vmatprep.subr.bf16.mxu0 0
        %2324 = vmatpush1.bf16.msra.mxu0 0
        %2325 = vmatprep.subr.bf16.mxu0 0
        %2326 = vmatpush1.bf16.msra.mxu0 0
        %2327 = vmatprep.subr.bf16.mxu0 0
        %2328 = vmatpush1.bf16.msra.mxu0 0
        %2329 = vmatprep.subr.bf16.mxu0 0
        %2330 = vmatpush1.bf16.msra.mxu0 0
        %2331 = vmatprep.subr.bf16.mxu0 0
        %2332 = vmatpush1.bf16.msra.mxu0 0
        %2333 = vmatprep.subr.bf16.mxu0 0
        %2334 = vmatpush1.bf16.msra.mxu0 0
        %2335 = vmatprep.subr.bf16.mxu0 0
        %2336 = vmatpush1.bf16.msra.mxu0 0
        %2337 = vmatprep.subr.bf16.mxu0 0
        %2338 = vmatpush1.bf16.msra.mxu0 0
        %2339 = vmatprep.subr.bf16.mxu0 0
        %2340 = vmatpush1.bf16.msra.mxu0 0
        %2341 = vmatprep.subr.bf16.mxu0 0
        %2342 = vmatpush1.bf16.msra.mxu0 0
        %2343 = vmatprep.subr.bf16.mxu0 0
        %2344 = vmatpush1.bf16.msra.mxu0 0
        %2345 = vmatprep.subr.bf16.mxu0 0
        %2346 = vmatpush1.bf16.msra.mxu0 0
        %2347 = vmatprep.subr.bf16.mxu0 0
        %2348 = vmatpush1.bf16.msra.mxu0 0
        %2349 = vmatprep.mubr.bf16.mxu0 0
        %2350 = vmatmul.mubr.bf16.gmra.mrb[0].mxu0 %v2312
        %v2351 = vpop.f32.mrb[0].mxu0
        %v2352 = vadd.f32 0.0, %v2351
        %v2353 = vpop.f32.mrb[0].mxu0
        %v2354 = vpop.f32.mrb[0].mxu0
        %v2355 = vpop.f32.mrb[0].mxu0
        %2356 = vdwg.mxu0
        %v2357 = vadd.f32 %v2198, %v2352
        %v2358 = vadd.f32 %v1629, %v2357
        %v2359 = vld [vmem:[%s7 + $0x1] sm:$0x1]
        %v2360 = vlaneseq
        %v2361 = vshrl.u32 %v2360, 7
        %v2362 = vsub.s32 0, %v2361
        %v2363 = vrot.slane %v2359, %v2362
        %v2364 = vadd.f32 %v2358, %v2363
        %v2365 = vld [vmem:[%s8 + $0x1] sm:$0x1]
        %v2366 = vld [vmem:[%s9 + $0x1] sm:$0x1]
        %v2367 = vsel %vm692, %v2364, 0.0
        %2368 = vadd.xlane.f32.xlu0 %v2367
        %v2369 = vpop.xlane.xlu0 %2368
        %v2370 = vmul.f32 %v2369, %v696
        %v2371 = vsub.f32 %v2364, %v2370
        %v2372 = vmul.f32 %v2371, %v2371
        %v2373 = vsel %vm692, %v2372, 0.0
        %2374 = vadd.xlane.f32.xlu0 %v2373
        %v2375 = vpop.xlane.xlu0 %2374
        %v2376 = vmul.f32 %v2375, %v696
        %v2377 = vadd.f32 %v2376, 1e-05
        %v2378 = vrsqrt.pop %v2377
        %v2379 = vmul.f32 %v2371, %v2378
        %v2380 = vlaneseq
        %v2381 = vshrl.u32 %v2380, 7
        %v2382 = vsub.s32 0, %v2381
        %v2383 = vrot.slane %v2365, %v2382
        %v2384 = vmul.f32 %v2379, %v2383
        %v2385 = vlaneseq
        %v2386 = vshrl.u32 %v2385, 7
        %v2387 = vsub.s32 0, %v2386
        %v2388 = vrot.slane %v2366, %v2387
        %v2389 = vadd.f32 %v2384, %v2388
        %v2390 = vpack.c.bf16 %v2389, %v2389
        %s2391 = scalar_lea.vmem %s10, 16
        %v2392 = vld [vmem:[%s2391] sm:$0xf]
        %v2393 = vld [vmem:[%s2391 + $0x4] sm:$0xf]
        %v2394 = vld [vmem:[%s2391 + $0x8] sm:$0xf]
        %v2395 = vld [vmem:[%s2391 + $0xc] sm:$0xf]
        %v2396 = vld [vmem:[%s11 + $0x1] sm:$0x1]
        %v2397 = vlaneseq
        %v2398 = vshrl.u32 %v2397, 7
        %v2399 = vsub.s32 0, %v2398
        %v2400 = vrot.slane %v2396, %v2399
        %v2405 = vunpack.c.l.b16 %v2392
        %v2406 = vunpack.c.l.b16 %v2393
        %v2407 = vunpack.c.l.b16 %v2394
        %v2408 = vunpack.c.l.b16 %v2395
        %v2409 = vpack.c.b16 %v2406, %v2405
        %v2410 = vpack.c.b16 %v2408, %v2407
        %v2414 = vsel %vm692, %v2390, 0
        %2416 = vmatprep.subr.bf16.mxu0 0
        %2417 = vmatpush1.bf16.msra.mxu0 %v2409
        %2418 = vmatprep.subr.bf16.mxu0 0
        %2419 = vmatpush1.bf16.msra.mxu0 %v2410
        %2420 = vmatprep.subr.bf16.mxu0 0
        %2421 = vmatpush1.bf16.msra.mxu0 0
        %2422 = vmatprep.subr.bf16.mxu0 0
        %2423 = vmatpush1.bf16.msra.mxu0 0
        %2424 = vmatprep.subr.bf16.mxu0 0
        %2425 = vmatpush1.bf16.msra.mxu0 0
        %2426 = vmatprep.subr.bf16.mxu0 0
        %2427 = vmatpush1.bf16.msra.mxu0 0
        %2428 = vmatprep.subr.bf16.mxu0 0
        %2429 = vmatpush1.bf16.msra.mxu0 0
        %2430 = vmatprep.subr.bf16.mxu0 0
        %2431 = vmatpush1.bf16.msra.mxu0 0
        %2432 = vmatprep.subr.bf16.mxu0 0
        %2433 = vmatpush1.bf16.msra.mxu0 0
        %2434 = vmatprep.subr.bf16.mxu0 0
        %2435 = vmatpush1.bf16.msra.mxu0 0
        %2436 = vmatprep.subr.bf16.mxu0 0
        %2437 = vmatpush1.bf16.msra.mxu0 0
        %2438 = vmatprep.subr.bf16.mxu0 0
        %2439 = vmatpush1.bf16.msra.mxu0 0
        %2440 = vmatprep.subr.bf16.mxu0 0
        %2441 = vmatpush1.bf16.msra.mxu0 0
        %2442 = vmatprep.subr.bf16.mxu0 0
        %2443 = vmatpush1.bf16.msra.mxu0 0
        %2444 = vmatprep.subr.bf16.mxu0 0
        %2445 = vmatpush1.bf16.msra.mxu0 0
        %2446 = vmatprep.subr.bf16.mxu0 0
        %2447 = vmatpush1.bf16.msra.mxu0 0
        %2448 = vmatprep.mubr.bf16.mxu0 0
        %2449 = vmatmul.mubr.bf16.gmra.mrb[0].mxu0 %v2414
        %v2450 = vpop.f32.mrb[0].mxu0
        %v2451 = vadd.f32 %v2400, %v2450
        %v2452 = vpop.f32.mrb[0].mxu0
        %v2453 = vpop.f32.mrb[0].mxu0
        %v2454 = vpop.f32.mrb[0].mxu0
        %2455 = vdwg.mxu0
        %v2456 = vmax.f32 %v2451, 0.0
        %v2457 = vpack.c.bf16 %v2456, %v2456
        %s2458 = scalar_lea.vmem %s12, 64
        %v2459 = vld [vmem:[%s2458] sm:$0xf]
        %v2460 = vld [vmem:[%s2458 + $0x4] sm:$0xf]
        %v2461 = vld [vmem:[%s2458 + $0x8] sm:$0xf]
        %v2462 = vld [vmem:[%s2458 + $0xc] sm:$0xf]
        %v2463 = vld [vmem:[%s2458 + $0x10] sm:$0xf]
        %v2464 = vld [vmem:[%s2458 + $0x14] sm:$0xf]
        %v2465 = vld [vmem:[%s2458 + $0x18] sm:$0xf]
        %v2466 = vld [vmem:[%s2458 + $0x1c] sm:$0xf]
        %v2467 = vld [vmem:[%s2458 + $0x20] sm:$0xf]
        %v2468 = vld [vmem:[%s2458 + $0x24] sm:$0xf]
        %v2469 = vld [vmem:[%s2458 + $0x28] sm:$0xf]
        %v2470 = vld [vmem:[%s2458 + $0x2c] sm:$0xf]
        %v2471 = vld [vmem:[%s2458 + $0x30] sm:$0xf]
        %v2472 = vld [vmem:[%s2458 + $0x34] sm:$0xf]
        %v2473 = vld [vmem:[%s2458 + $0x38] sm:$0xf]
        %v2474 = vld [vmem:[%s2458 + $0x3c] sm:$0xf]
        %v2491 = vunpack.c.l.b16 %v2459
        %v2492 = vunpack.c.l.b16 %v2460
        %v2493 = vunpack.c.l.b16 %v2461
        %v2494 = vunpack.c.l.b16 %v2462
        %v2495 = vunpack.c.l.b16 %v2463
        %v2496 = vunpack.c.l.b16 %v2464
        %v2497 = vunpack.c.l.b16 %v2465
        %v2498 = vunpack.c.l.b16 %v2466
        %v2499 = vunpack.c.l.b16 %v2467
        %v2500 = vunpack.c.l.b16 %v2468
        %v2501 = vunpack.c.l.b16 %v2469
        %v2502 = vunpack.c.l.b16 %v2470
        %v2503 = vunpack.c.l.b16 %v2471
        %v2504 = vunpack.c.l.b16 %v2472
        %v2505 = vunpack.c.l.b16 %v2473
        %v2506 = vunpack.c.l.b16 %v2474
        %v2507 = vpack.c.b16 %v2492, %v2491
        %v2508 = vpack.c.b16 %v2494, %v2493
        %v2509 = vpack.c.b16 %v2496, %v2495
        %v2510 = vpack.c.b16 %v2498, %v2497
        %v2511 = vpack.c.b16 %v2500, %v2499
        %v2512 = vpack.c.b16 %v2502, %v2501
        %v2513 = vpack.c.b16 %v2504, %v2503
        %v2514 = vpack.c.b16 %v2506, %v2505
        %2523 = vmatprep.subr.bf16.mxu0 0
        %2524 = vmatpush1.bf16.msra.mxu0 %v2507
        %2525 = vmatprep.subr.bf16.mxu0 0
        %2526 = vmatpush1.bf16.msra.mxu0 %v2508
        %2527 = vmatprep.subr.bf16.mxu0 0
        %2528 = vmatpush1.bf16.msra.mxu0 %v2509
        %2529 = vmatprep.subr.bf16.mxu0 0
        %2530 = vmatpush1.bf16.msra.mxu0 %v2510
        %2531 = vmatprep.subr.bf16.mxu0 0
        %2532 = vmatpush1.bf16.msra.mxu0 %v2511
        %2533 = vmatprep.subr.bf16.mxu0 0
        %2534 = vmatpush1.bf16.msra.mxu0 %v2512
        %2535 = vmatprep.subr.bf16.mxu0 0
        %2536 = vmatpush1.bf16.msra.mxu0 %v2513
        %2537 = vmatprep.subr.bf16.mxu0 0
        %2538 = vmatpush1.bf16.msra.mxu0 %v2514
        %2539 = vmatprep.subr.bf16.mxu0 0
        %2540 = vmatpush1.bf16.msra.mxu0 0
        %2541 = vmatprep.subr.bf16.mxu0 0
        %2542 = vmatpush1.bf16.msra.mxu0 0
        %2543 = vmatprep.subr.bf16.mxu0 0
        %2544 = vmatpush1.bf16.msra.mxu0 0
        %2545 = vmatprep.subr.bf16.mxu0 0
        %2546 = vmatpush1.bf16.msra.mxu0 0
        %2547 = vmatprep.subr.bf16.mxu0 0
        %2548 = vmatpush1.bf16.msra.mxu0 0
        %2549 = vmatprep.subr.bf16.mxu0 0
        %2550 = vmatpush1.bf16.msra.mxu0 0
        %2551 = vmatprep.subr.bf16.mxu0 0
        %2552 = vmatpush1.bf16.msra.mxu0 0
        %2553 = vmatprep.subr.bf16.mxu0 0
        %2554 = vmatpush1.bf16.msra.mxu0 0
        %2555 = vmatprep.mubr.bf16.mxu0 0
        %2556 = vmatmul.mubr.bf16.gmra.mrb[0].mxu0 %v2457
        %v2557 = vpop.f32.mrb[0].mxu0
        %v2558 = vadd.f32 0.0, %v2557
        %v2559 = vpop.f32.mrb[0].mxu0
        %v2560 = vpop.f32.mrb[0].mxu0
        %v2561 = vpop.f32.mrb[0].mxu0
        %2562 = vdwg.mxu0
        %v2563 = vadd.f32 %v2364, %v2558
        %v2564 = vld [vmem:[%s13 + $0x1] sm:$0x1]
        %v2565 = vlaneseq
        %v2566 = vshrl.u32 %v2565, 7
        %v2567 = vsub.s32 0, %v2566
        %v2568 = vrot.slane %v2564, %v2567
        %v2569 = vadd.f32 %v2563, %v2568
        %v2570 = vld [vmem:[%s14] sm:$0x1]
        %v2571 = vld [vmem:[%s15] sm:$0x1]
        %v2572 = vsel %vm692, %v2569, 0.0
        %2573 = vadd.xlane.f32.xlu0 %v2572
        %v2574 = vpop.xlane.xlu0 %2573
        %v2575 = vmul.f32 %v2574, %v696
        %v2576 = vsub.f32 %v2569, %v2575
        %v2577 = vmul.f32 %v2576, %v2576
        %v2578 = vsel %vm692, %v2577, 0.0
        %2579 = vadd.xlane.f32.xlu0 %v2578
        %v2580 = vpop.xlane.xlu0 %2579
        %v2581 = vmul.f32 %v2580, %v696
        %v2582 = vadd.f32 %v2581, 1e-05
        %v2583 = vrsqrt.pop %v2582
        %v2584 = vmul.f32 %v2576, %v2583
        %v2586 = vlaneseq
        %v2587 = vshrl.u32 %v2586, 7
        %v2588 = vsub.s32 0, %v2587
        %v2589 = vrot.slane %v2570, %v2588
        %v2591 = vmul.f32 %v2584, %v2589
        %v2593 = vlaneseq
        %v2594 = vshrl.u32 %v2593, 7
        %v2595 = vsub.s32 0, %v2594
        %v2596 = vrot.slane %v2571, %v2595
        %v2598 = vadd.f32 %v2591, %v2596
        %v2599 = vpack.c.bf16 %v2598, %v2598
        %v2600 = vld [vmem:[%s16] sm:$0xf]
        %v2601 = vld [vmem:[%s16 + $0x4] sm:$0xf]
        %v2602 = vld [vmem:[%s16 + $0x8] sm:$0xf]
        %v2603 = vld [vmem:[%s16 + $0xc] sm:$0xf]
        %v2604 = vld [vmem:[%s17] sm:$0x1]
        %v2606 = vlaneseq
        %v2607 = vshrl.u32 %v2606, 7
        %v2608 = vsub.s32 0, %v2607
        %v2609 = vrot.slane %v2604, %v2608
        %v2615 = vunpack.c.l.b16 %v2600
        %v2616 = vunpack.c.l.b16 %v2601
        %v2617 = vunpack.c.l.b16 %v2602
        %v2618 = vunpack.c.l.b16 %v2603
        %v2619 = vpack.c.b16 %v2616, %v2615
        %v2620 = vpack.c.b16 %v2618, %v2617
        %v2624 = vsel %vm692, %v2599, 0
        %2626 = vmatprep.subr.bf16.mxu0 0
        %2627 = vmatpush1.bf16.msra.mxu0 %v2619
        %2628 = vmatprep.subr.bf16.mxu0 0
        %2629 = vmatpush1.bf16.msra.mxu0 %v2620
        %2630 = vmatprep.subr.bf16.mxu0 0
        %2631 = vmatpush1.bf16.msra.mxu0 0
        %2632 = vmatprep.subr.bf16.mxu0 0
        %2633 = vmatpush1.bf16.msra.mxu0 0
        %2634 = vmatprep.subr.bf16.mxu0 0
        %2635 = vmatpush1.bf16.msra.mxu0 0
        %2636 = vmatprep.subr.bf16.mxu0 0
        %2637 = vmatpush1.bf16.msra.mxu0 0
        %2638 = vmatprep.subr.bf16.mxu0 0
        %2639 = vmatpush1.bf16.msra.mxu0 0
        %2640 = vmatprep.subr.bf16.mxu0 0
        %2641 = vmatpush1.bf16.msra.mxu0 0
        %2642 = vmatprep.subr.bf16.mxu0 0
        %2643 = vmatpush1.bf16.msra.mxu0 0
        %2644 = vmatprep.subr.bf16.mxu0 0
        %2645 = vmatpush1.bf16.msra.mxu0 0
        %2646 = vmatprep.subr.bf16.mxu0 0
        %2647 = vmatpush1.bf16.msra.mxu0 0
        %2648 = vmatprep.subr.bf16.mxu0 0
        %2649 = vmatpush1.bf16.msra.mxu0 0
        %2650 = vmatprep.subr.bf16.mxu0 0
        %2651 = vmatpush1.bf16.msra.mxu0 0
        %2652 = vmatprep.subr.bf16.mxu0 0
        %2653 = vmatpush1.bf16.msra.mxu0 0
        %2654 = vmatprep.subr.bf16.mxu0 0
        %2655 = vmatpush1.bf16.msra.mxu0 0
        %2656 = vmatprep.subr.bf16.mxu0 0
        %2657 = vmatpush1.bf16.msra.mxu0 0
        %2658 = vmatprep.mubr.bf16.mxu0 0
        %2659 = vmatmul.mubr.bf16.gmra.mrb[0].mxu0 %v2624
        %v2660 = vpop.f32.mrb[0].mxu0
        %v2661 = vadd.f32 %v2609, %v2660
        %v2662 = vpop.f32.mrb[0].mxu0
        %v2663 = vpop.f32.mrb[0].mxu0
        %v2664 = vpop.f32.mrb[0].mxu0
        %2665 = vdwg.mxu0
        %2666 = vst [vmem:[%s566] sm:$0xff] %v2661
        %s2667 = sand.u32 %s423, 1
        %s2668 = scalar_lea.sflag [#allocation3], %s2667
        %s2669 = sand.u32 %s423, 1
        %s2670 = smul.addr %s2669, 8
        %s2671 = scalar_lea.vmem [#allocation2], %s2670
        // Predicated region
        $region93: #{decoder_forward.1} parent=91 // pred_check
          %p2672 = pneg %p433
        $region94: #{decoder_forward.1} parent=91 // pred_check_branch
          %2674 = sbr.rel (%p2672) target = $region96
        $region95: #{decoder_forward.1} parent=91 // pred_region
          %s2676 = ssub.s32 128, 128
          %2677 = vsyncadd %s2668, %s2676
          %s2678 = smul.addr %s32, 128
          %s2679 = scalar_lea.hbm %s18, %s2678
          %s2681 = sshll.u32 %s2671, 4
          %s2682 = int_to_ptr.vmem [resolvable:$true] %s2681
          %2684 = dma.vmem_to_hbm [thread:$0]  %s2682, 128, %s2679, %s2668
        $region96: #{decoder_forward.1} parent=91 // pred_fallthru
          _
      $region92: #{decoder_forward.1} parent=5 // pred_fallthru
        _
      %p2685 = scmp.le.s32.totalorder 2, %s27
      // Predicated region
      $region97: #{decoder_forward.1} parent=5 // pred_check
        %p2686 = pneg %p2685
      $region98: #{decoder_forward.1} parent=5 // pred_check_branch
        %2688 = sbr.rel (%p2686) target = $region100
      $region99: #{decoder_forward.1} parent=5 // pred_region
        %s2689 = ssub.s32 %s27, 2
        // Predicated region
        $region101: #{decoder_forward.1} parent=99 // pred_check
          %p2690 = pneg %p439
        $region102: #{decoder_forward.1} parent=99 // pred_check_branch
          %2692 = sbr.rel (%p2690) target = $region104
        $region103: #{decoder_forward.1} parent=99 // pred_region
          %s2693 = sand.u32 %s424, 1
          %s2694 = scalar_lea.sflag [#allocation3], %s2693
          %s2695 = sand.u32 %s424, 1
          %s2696 = smul.addr %s2695, 8
          %s2697 = scalar_lea.vmem [#allocation2], %s2696
          %2698 = dma.done %s2694, 128
        $region104: #{decoder_forward.1} parent=99 // pred_fallthru
          _
      $region100: #{decoder_forward.1} parent=5 // pred_fallthru
        _
    $region6: #{decoder_forward.1} parent=1 // loop_footer
      %s31 = sadd.s32 1, %s27
    $region7: #{decoder_forward.1} parent=1 // loop_footer_branch
      %26 = sbr.rel target = $region3
    $region8: #{decoder_forward.1} parent=1 // loop_exit
      _
    %2699 = vsyncpa [#allocation3], 1
    %s2700 = scalar_lea.sflag [#allocation3], 1
    %2701 = vsyncpa %s2700, 1

</llo_original>
